<compile_context>
chip_gen: v6e
topology: v6e:2x2x1
jax: 0.10.0
libtpu: 0.0.40
codegen_flags: <defaults>
</compile_context>

<pallas_src>
import jax
import jax.numpy as jnp
import numpy as np
from jax.experimental import pallas as pl
from jax.experimental.pallas import tpu as pltpu


def _round_up(x: int, m: int) -> int:
    return (x + m - 1) // m * m


_HAS_SINGLE_BUFFER = hasattr(pl, "Buffered")
_VMEM_SOFT_BUDGET = 40 * 1024 * 1024   # cap for the Tc auto-sizer (headroom below limit)
_VMEM_LIMIT_BYTES = 48 * 1024 * 1024   # comfortably inside v7x's 64 MiB physical VMEM


def _vmem_bytes_estimate(Tc, Bp, E, Hp, Op, n_layers):
    """Rough VMEM footprint used to cap the time chunk (bf16 weights, f32 state)."""
    BF16, F32 = 2, 4
    weights = 0
    for l in range(n_layers):          # single-buffered via pl.Buffered(1)
        in_dim = E if l == 0 else Hp
        weights += (in_dim + Hp) * 4 * Hp * BF16 + 4 * Hp * F32
    weights += Hp * Op * BF16 + Op * F32
    state = 2 * n_layers * Bp * Hp * F32        # h_n / c_n output blocks
    out = Bp * Op * F32
    x0 = 2 * Tc * Bp * E * BF16                 # embedding chunk, double-buffered
    xbuf = Tc * Bp * Hp * BF16                  # inter-layer activation scratch
    xp = Tc * Bp * 4 * Hp * F32                 # hoisted projection temporary
    return weights + state + out + x0 + xbuf + xp


# ----------------------------------------------------------------------------
# Kernel
# ----------------------------------------------------------------------------
def _make_lstm_kernel(*, n_layers: int, Tc: int, T: int, Bp: int, Hp: int,
                      n_chunks: int):
    """Chunked, layer-major LSTM kernel.

    Grid: (n_chunks,), sequential ("arbitrary").
    Refs: x0 (Tc*Bp, E) bf16 chunk of embeddings, h0/c0 (n_layers, Bp, Hp) f32,
          per-layer (w_ih_t, w_hh_t bf16; bias f32), fc_w_t bf16, fc_b f32,
          outputs (out (Bp, Op), h_n, c_n) f32, scratch xbuf (Tc*Bp, Hp) bf16.
    """
    has_tail = (T % Tc) != 0
    tail_steps = T - (n_chunks - 1) * Tc     # valid timesteps in the final chunk

    def kernel(x0_ref, h0_ref, c0_ref, *rest):
        layer_refs = rest[: 3 * n_layers]
        fc_w_ref = rest[3 * n_layers]
        fc_b_ref = rest[3 * n_layers + 1]
        out_ref = rest[3 * n_layers + 2]
        hn_ref = rest[3 * n_layers + 3]
        cn_ref = rest[3 * n_layers + 4]
        xbuf = rest[-1]   # (Tc*Bp, Hp) bf16 scratch: layer outputs for next layer

        chunk = pl.program_id(0)

        def sigmoid(x):
            # 1 EUP op (tanh) instead of exp + reciprocal (2 EUP ops).
            return jnp.tanh(x * 0.5) * 0.5 + 0.5

        # Running state lives in the (VMEM-resident) output refs. The outputs
        # alias h0/c0 in HBM, but output VMEM blocks are not preloaded, so the
        # one-time copy-in is still required.
        @pl.when(chunk == 0)
        def _init():
            hn_ref[...] = h0_ref[...]
            cn_ref[...] = c0_ref[...]

        def run_layers(steps):
            """Run all layers over `steps` (a static int) timesteps of this chunk."""
            rows = steps * Bp
            h_top = None
            for l in range(n_layers):
                w_ih_t = layer_refs[3 * l][...]      # (in_dim, 4*Hp) bf16
                w_hh_t = layer_refs[3 * l + 1][...]  # (Hp, 4*Hp)    bf16
                bias = layer_refs[3 * l + 2][...]    # (1, 4*Hp)     f32 (b_ih+b_hh)

                # Layer input for the chunk, flattened time-major (bf16).
                x_chunk = (x0_ref if l == 0 else xbuf)[:rows, :]

                # Hoisted input projection: one MXU GEMM per (chunk, layer),
                # bf16 operands, f32 accumulation; bias folded in once.
                xp = (
                    jnp.dot(x_chunk, w_ih_t, preferred_element_type=jnp.float32)
                    + bias
                )                                     # (rows, 4*Hp) f32

                h = hn_ref[l]                         # (Bp, Hp) f32
                c = cn_ref[l]                         # (Bp, Hp) f32

                for t in range(steps):                # unrolled, static
                    gates = xp[t * Bp:(t + 1) * Bp, :] + jnp.dot(
                        h.astype(jnp.bfloat16), w_hh_t,
                        preferred_element_type=jnp.float32,
                    )                                 # (Bp, 4*Hp) f32

                    # Lane-aligned gate slices (each gate is Hp = k*128 cols).
                    i_g = sigmoid(gates[:, 0 * Hp:1 * Hp])
                    f_g = sigmoid(gates[:, 1 * Hp:2 * Hp])
                    g_g = jnp.tanh(gates[:, 2 * Hp:3 * Hp])
                    o_g = sigmoid(gates[:, 3 * Hp:4 * Hp])

                    c = f_g * c + i_g * g_g           # f32 state math
                    h = o_g * jnp.tanh(c)

                    if l < n_layers - 1:
                        xbuf[t * Bp:(t + 1) * Bp, :] = h.astype(jnp.bfloat16)

                hn_ref[l] = h
                cn_ref[l] = c
                h_top = h
                # NOTE: inter-layer LSTM dropout / nn.Dropout are identity in
                # eval mode, which is what is reproduced here.
            return h_top

        def do_fc(h_top):
            # fc on the top layer's hidden state at the last valid timestep
            # (== lstm_output[:, -1]); dropout is identity in eval mode.
            out_ref[...] = (
                jnp.dot(h_top.astype(jnp.bfloat16), fc_w_ref[...],
                        preferred_element_type=jnp.float32)
                + fc_b_ref[...]
            )

        if has_tail:
            # Ragged tail: only the final chunk pays for it, and it does so by
            # statically iterating fewer timesteps (no per-step masking at all).
            @pl.when(chunk != n_chunks - 1)
            def _main():
                run_layers(Tc)

            @pl.when(chunk == n_chunks - 1)
            def _tail():
                do_fc(run_layers(tail_steps))
        else:
            h_top = run_layers(Tc)

            @pl.when(chunk == n_chunks - 1)
            def _fin():
                do_fc(h_top)

    return kernel


# ----------------------------------------------------------------------------
# Parameter handling
# ----------------------------------------------------------------------------
def init_params(key, vocab_size, output_size, embedding_dim, hidden_dim, n_layers):
    """Natural (PyTorch-shaped) parameters, f32."""
    keys = jax.random.split(key, 3 + 4 * n_layers)
    ki = iter(keys)
    scale = 0.1

    emb = jax.random.normal(next(ki), (vocab_size, embedding_dim), jnp.float32) * scale

    layers = []
    for l in range(n_layers):
        in_dim = embedding_dim if l == 0 else hidden_dim
        layers.append(dict(
            w_ih=jax.random.normal(next(ki), (4 * hidden_dim, in_dim), jnp.float32) * scale,
            w_hh=jax.random.normal(next(ki), (4 * hidden_dim, hidden_dim), jnp.float32) * scale,
            b_ih=jax.random.normal(next(ki), (4 * hidden_dim,), jnp.float32) * scale,
            b_hh=jax.random.normal(next(ki), (4 * hidden_dim,), jnp.float32) * scale,
        ))

    fc_w = jax.random.normal(next(ki), (output_size, hidden_dim), jnp.float32) * scale
    fc_b = jax.random.normal(next(ki), (output_size,), jnp.float32) * scale

    return dict(embedding=emb, layers=layers, fc_w=fc_w, fc_b=fc_b)


def pack_params(params, hidden_dim, *, lane=128):
    """Pad/transpose parameters into the lane-aligned kernel layout.

    Each gate's column block is padded from H to Hp (multiple of 128) so gate
    slices inside the kernel are free vreg views; padded rows/cols are zero so
    the padded hidden/cell features stay exactly zero through the recurrence.
    Matmul operands (w_ih_t, w_hh_t, fc_w_t) are stored in bf16 (native MXU
    path, halves weight VMEM/DMA); biases stay f32 (tiny, off the MXU path).
    """
    H = hidden_dim
    Hp = _round_up(H, lane)

    def pad_gate_cols(w_t):  # (rows, 4H) -> (rows, 4*Hp)
        parts = [w_t[:, g * H:(g + 1) * H] for g in range(4)]
        parts = [jnp.pad(p, ((0, 0), (0, Hp - H))) for p in parts]
        return jnp.concatenate(parts, axis=1)

    layers = []
    for lyr in params["layers"]:
        w_ih_t = pad_gate_cols(lyr["w_ih"].T)                                  # (in, 4Hp)
        w_hh_t = pad_gate_cols(jnp.pad(lyr["w_hh"].T, ((0, Hp - H), (0, 0))))  # (Hp, 4Hp)
        bias = pad_gate_cols((lyr["b_ih"] + lyr["b_hh"])[None, :])             # (1, 4Hp)
        in_dim = lyr["w_ih"].shape[1]
        if in_dim == H:  # layers > 0 consume the padded (Hp-wide) hidden state
            w_ih_t = jnp.pad(w_ih_t, ((0, Hp - H), (0, 0)))
        layers.append(dict(
            w_ih_t=w_ih_t.astype(jnp.bfloat16),
            w_hh_t=w_hh_t.astype(jnp.bfloat16),
            bias=bias.astype(jnp.float32),
        ))

    O = params["fc_w"].shape[0]
    Op = _round_up(O, lane)
    fc_w_t = jnp.pad(params["fc_w"].T, ((0, Hp - H), (0, Op - O)))             # (Hp, Op)
    fc_b = jnp.pad(params["fc_b"], (0, Op - O))[None, :]                       # (1, Op)

    return dict(embedding=params["embedding"], layers=layers,
                fc_w_t=fc_w_t.astype(jnp.bfloat16), fc_b=fc_b.astype(jnp.float32),
                H=H, Hp=Hp, O=O, Op=Op)


# ----------------------------------------------------------------------------
# Forward pass (mirror of RNN.forward, eval mode)
# ----------------------------------------------------------------------------
def rnn_forward(nn_input, hidden, kp, *, time_chunk=16):
    """nn_input: (B, T) int tokens; hidden: (h0, c0) each (n_layers, B, H).
    Returns (output (B, output_size), (h_n, c_n))."""
    H, Hp, O, Op = kp["H"], kp["Hp"], kp["O"], kp["Op"]
    h0, c0 = hidden
    n_layers, B, _ = h0.shape
    T = int(nn_input.shape[1])
    if T == 0:
        raise ValueError("sequence length must be >= 1")
    E = kp["embedding"].shape[1]

    # Batch padded to 16 sublanes so bf16 blocks and the per-timestep row
    # slices stay aligned to packed (16,128) tiles.
    Bp = _round_up(B, 16)

    # Cap the time chunk so the whole working set fits the smallest VMEM (v7x).
    Tc = min(int(time_chunk), T)
    while Tc > 1 and _vmem_bytes_estimate(Tc, Bp, E, Hp, Op, n_layers) > _VMEM_SOFT_BUDGET:
        Tc = max(1, Tc // 2)
    n_chunks = -(-T // Tc)
    Tp = n_chunks * Tc

    # Embedding lookup (gather) stays in plain JAX glue; feed the kernel a
    # time-major, batch/seq-padded, flattened (Tp*Bp, E) bf16 slab.
    tokens = nn_input.astype(jnp.int32)                       # .long()
    embeds = jnp.take(kp["embedding"], tokens, axis=0)        # (B, T, E) f32
    embeds = jnp.transpose(embeds, (1, 0, 2))                 # (T, B, E)
    embeds = jnp.pad(embeds, ((0, Tp - T), (0, Bp - B), (0, 0)))
    x0 = embeds.reshape(Tp * Bp, E).astype(jnp.bfloat16)

    # Padded batch rows (B..Bp) accumulate nonzero state from the broadcast
    # bias; harmless because they are sliced off below — do not reduce over them.
    h0p = jnp.pad(h0, ((0, 0), (0, Bp - B), (0, Hp - H))).astype(jnp.float32)
    c0p = jnp.pad(c0, ((0, 0), (0, Bp - B), (0, Hp - H))).astype(jnp.float32)

    kernel = _make_lstm_kernel(n_layers=n_layers, Tc=Tc, T=T, Bp=Bp, Hp=Hp,
                               n_chunks=n_chunks)

    def const_spec(shape):
        # Invariant operand: constant index_map; single-buffered if supported.
        nd = len(shape)
        if _HAS_SINGLE_BUFFER:
            return pl.BlockSpec(shape, lambda ci: (0,) * nd,
                                pipeline_mode=pl.Buffered(1))
        return pl.BlockSpec(shape, lambda ci: (0,) * nd)

    in_arrays = [x0, h0p, c0p]
    in_specs = [
        pl.BlockSpec((Tc * Bp, E), lambda ci: (ci, 0)),       # streamed per chunk
        const_spec((n_layers, Bp, Hp)),
        const_spec((n_layers, Bp, Hp)),
    ]
    for lyr in kp["layers"]:
        in_arrays += [lyr["w_ih_t"], lyr["w_hh_t"], lyr["bias"]]
        in_specs += [
            const_spec(lyr["w_ih_t"].shape),
            const_spec(lyr["w_hh_t"].shape),
            const_spec(lyr["bias"].shape),
        ]
    in_arrays += [kp["fc_w_t"], kp["fc_b"]]
    in_specs += [const_spec((Hp, Op)), const_spec((1, Op))]

    out_shapes = (
        jax.ShapeDtypeStruct((Bp, Op), jnp.float32),
        jax.ShapeDtypeStruct((n_layers, Bp, Hp), jnp.float32),
        jax.ShapeDtypeStruct((n_layers, Bp, Hp), jnp.float32),
    )
    # out/h_n/c_n use constant index_maps -> VMEM-resident across the
    # sequential grid (keep the time axis "arbitrary"; never mark it parallel).
    out_specs = (
        pl.BlockSpec((Bp, Op), lambda ci: (0, 0)),
        pl.BlockSpec((n_layers, Bp, Hp), lambda ci: (0, 0, 0)),
        pl.BlockSpec((n_layers, Bp, Hp), lambda ci: (0, 0, 0)),
    )

    out_p, hn_p, cn_p = pl.pallas_call(
        kernel,
        out_shape=out_shapes,
        grid_spec=pltpu.PrefetchScalarGridSpec(
            num_scalar_prefetch=0,
            grid=(n_chunks,),
            in_specs=in_specs,
            out_specs=out_specs,
            scratch_shapes=[pltpu.VMEM((Tc * Bp, Hp), jnp.bfloat16)],
        ),
        compiler_params=pltpu.CompilerParams(
            dimension_semantics=("arbitrary",),
            vmem_limit_bytes=_VMEM_LIMIT_BYTES,
        ),
        # Donate the padded initial state into the state outputs.
        input_output_aliases={1: 1, 2: 2},
    )(*in_arrays)

    output = out_p[:B, :O]
    h_n = hn_p[:, :B, :H]
    c_n = cn_p[:, :B, :H]
    return output, (h_n, c_n)


# ----------------------------------------------------------------------------
# Pure-JAX reference (eval mode, f32 throughout)
# ----------------------------------------------------------------------------
def rnn_forward_ref(nn_input, hidden, params):
    emb = jnp.take(params["embedding"], nn_input.astype(jnp.int32), axis=0)  # (B,T,E)
    h = [hidden[0][l] for l in range(hidden[0].shape[0])]
    c = [hidden[1][l] for l in range(hidden[1].shape[0])]
    B, T, _ = emb.shape
    H = h[0].shape[-1]
    x_seq = emb
    for l, lyr in enumerate(params["layers"]):
        w_ih_t = lyr["w_ih"].T
        w_hh_t = lyr["w_hh"].T
        bias = (lyr["b_ih"] + lyr["b_hh"])[None, :]
        outs = []
        h_l, c_l = h[l], c[l]
        for t in range(T):
            gates = x_seq[:, t] @ w_ih_t + h_l @ w_hh_t + bias
            i_g = jax.nn.sigmoid(gates[:, 0 * H:1 * H])
            f_g = jax.nn.sigmoid(gates[:, 1 * H:2 * H])
            g_g = jnp.tanh(gates[:, 2 * H:3 * H])
            o_g = jax.nn.sigmoid(gates[:, 3 * H:4 * H])
            c_l = f_g * c_l + i_g * g_g
            h_l = o_g * jnp.tanh(c_l)
            outs.append(h_l)
        h[l], c[l] = h_l, c_l
        x_seq = jnp.stack(outs, axis=1)
    out = x_seq[:, -1] @ params["fc_w"].T + params["fc_b"][None, :]
    return out, (jnp.stack(h), jnp.stack(c))


if __name__ == "__main__":
    vocab_size = 32
    output_size = 8
    embedding_dim = 16
    hidden_dim = 32
    n_layers = 2
    batch = 2
    seq = 8

    key = jax.random.PRNGKey(0)
    k_params, k_tokens = jax.random.split(key)

    params = init_params(k_params, vocab_size, output_size,
                         embedding_dim, hidden_dim, n_layers)
    kp = pack_params(params, hidden_dim)

    nn_input = jax.random.randint(k_tokens, (batch, seq), 0, vocab_size, jnp.int32)
    h0 = jnp.zeros((n_layers, batch, hidden_dim), jnp.float32)
    c0 = jnp.zeros((n_layers, batch, hidden_dim), jnp.float32)

    out_ref, (h_ref, c_ref) = rnn_forward_ref(nn_input, (h0, c0), params)

    # Tolerances account for the intentional bf16 MXU operands (f32 accumulate).
    RTOL, ATOL = 3e-2, 2e-2

    # 1) single chunk covering the whole sequence
    output, (h_n, c_n) = rnn_forward(nn_input, (h0, c0), kp, time_chunk=8)
    jax.block_until_ready((output, h_n, c_n))
    np.testing.assert_allclose(np.asarray(output), np.asarray(out_ref), rtol=RTOL, atol=ATOL)
    np.testing.assert_allclose(np.asarray(h_n), np.asarray(h_ref), rtol=RTOL, atol=ATOL)
    np.testing.assert_allclose(np.asarray(c_n), np.asarray(c_ref), rtol=RTOL, atol=ATOL)

    # 2) multi-chunk path with a ragged tail (exercises the short final chunk)
    output2, (h_n2, c_n2) = rnn_forward(nn_input, (h0, c0), kp, time_chunk=5)
    jax.block_until_ready((output2, h_n2, c_n2))
    np.testing.assert_allclose(np.asarray(output2), np.asarray(out_ref), rtol=RTOL, atol=ATOL)
    np.testing.assert_allclose(np.asarray(h_n2), np.asarray(h_ref), rtol=RTOL, atol=ATOL)
    np.testing.assert_allclose(np.asarray(c_n2), np.asarray(c_ref), rtol=RTOL, atol=ATOL)

    print("KERNEL_OK")
</pallas_src>

<mosaic_0001>
module attributes {stable_mosaic.version = 11 : i64} {
  func.func @kernel(%arg0: i32, %arg1: memref<128x16xbf16, #tpu.memory_space<vmem>>, %arg2: memref<2x16x128xf32, #tpu.memory_space<vmem>>, %arg3: memref<2x16x128xf32, #tpu.memory_space<vmem>>, %arg4: memref<16x512xbf16, #tpu.memory_space<vmem>>, %arg5: memref<128x512xbf16, #tpu.memory_space<vmem>>, %arg6: memref<1x512xf32, #tpu.memory_space<vmem>>, %arg7: memref<128x512xbf16, #tpu.memory_space<vmem>>, %arg8: memref<128x512xbf16, #tpu.memory_space<vmem>>, %arg9: memref<1x512xf32, #tpu.memory_space<vmem>>, %arg10: memref<128x128xbf16, #tpu.memory_space<vmem>>, %arg11: memref<1x128xf32, #tpu.memory_space<vmem>>, %arg12: memref<16x128xf32, #tpu.memory_space<vmem>>, %arg13: memref<2x16x128xf32, #tpu.memory_space<vmem>>, %arg14: memref<2x16x128xf32, #tpu.memory_space<vmem>>, %arg15: memref<128x128xbf16, #tpu.memory_space<vmem>>) attributes {dimension_semantics = [#tpu.dimension_semantics<arbitrary>], iteration_bounds = array<i64: 1>, scalar_prefetch = 0 : i64, scratch_operands = 1 : i64, tpu.core_type = #tpu.core_type<tc>, window_params = [{transform_indices = @transform_0, window_bounds = array<i64: 128, 16>}, {pipeline_mode = #tpu.pipeline_mode<synchronous>, transform_indices = @transform_1, window_bounds = array<i64: 2, 16, 128>}, {pipeline_mode = #tpu.pipeline_mode<synchronous>, transform_indices = @transform_2, window_bounds = array<i64: 2, 16, 128>}, {pipeline_mode = #tpu.pipeline_mode<synchronous>, transform_indices = @transform_3, window_bounds = array<i64: 16, 512>}, {pipeline_mode = #tpu.pipeline_mode<synchronous>, transform_indices = @transform_4, window_bounds = array<i64: 128, 512>}, {pipeline_mode = #tpu.pipeline_mode<synchronous>, transform_indices = @transform_5, window_bounds = array<i64: 1, 512>}, {pipeline_mode = #tpu.pipeline_mode<synchronous>, transform_indices = @transform_6, window_bounds = array<i64: 128, 512>}, {pipeline_mode = #tpu.pipeline_mode<synchronous>, transform_indices = @transform_7, window_bounds = array<i64: 128, 512>}, {pipeline_mode = #tpu.pipeline_mode<synchronous>, transform_indices = @transform_8, window_bounds = array<i64: 1, 512>}, {pipeline_mode = #tpu.pipeline_mode<synchronous>, transform_indices = @transform_9, window_bounds = array<i64: 128, 128>}, {pipeline_mode = #tpu.pipeline_mode<synchronous>, transform_indices = @transform_10, window_bounds = array<i64: 1, 128>}, {pipeline_mode = #tpu.pipeline_mode<synchronous>, transform_indices = @transform_11, window_bounds = array<i64: 16, 128>}, {pipeline_mode = #tpu.pipeline_mode<synchronous>, transform_indices = @transform_12, window_bounds = array<i64: 2, 16, 128>}, {pipeline_mode = #tpu.pipeline_mode<synchronous>, transform_indices = @transform_13, window_bounds = array<i64: 2, 16, 128>}]} {
    %c0_i32 = arith.constant 0 : i32
    %0 = arith.cmpi eq, %arg0, %c0_i32 : i32
    %1 = arith.extui %0 : i1 to i32
    %c0_i32_0 = arith.constant 0 : i32
    %2 = arith.cmpi ne, %1, %c0_i32_0 : i32
    scf.if %2 {
      %c0_211 = arith.constant 0 : index
      %c0_212 = arith.constant 0 : index
      %c0_213 = arith.constant 0 : index
      %616 = vector.load %arg2[%c0_211, %c0_212, %c0_213] : memref<2x16x128xf32, #tpu.memory_space<vmem>>, vector<2x16x128xf32>
      %c0_214 = arith.constant 0 : index
      %c0_215 = arith.constant 0 : index
      %c0_216 = arith.constant 0 : index
      %617 = vector.load %arg13[%c0_214, %c0_215, %c0_216] : memref<2x16x128xf32, #tpu.memory_space<vmem>>, vector<2x16x128xf32>
      tpu.vector_store %arg13[%c0_214, %c0_215, %c0_216], %616 {strides = array<i32>} : memref<2x16x128xf32, #tpu.memory_space<vmem>>, vector<2x16x128xf32>,
      %c0_217 = arith.constant 0 : index
      %c0_218 = arith.constant 0 : index
      %c0_219 = arith.constant 0 : index
      %618 = vector.load %arg3[%c0_217, %c0_218, %c0_219] : memref<2x16x128xf32, #tpu.memory_space<vmem>>, vector<2x16x128xf32>
      %c0_220 = arith.constant 0 : index
      %c0_221 = arith.constant 0 : index
      %c0_222 = arith.constant 0 : index
      %619 = vector.load %arg14[%c0_220, %c0_221, %c0_222] : memref<2x16x128xf32, #tpu.memory_space<vmem>>, vector<2x16x128xf32>
      tpu.vector_store %arg14[%c0_220, %c0_221, %c0_222], %618 {strides = array<i32>} : memref<2x16x128xf32, #tpu.memory_space<vmem>>, vector<2x16x128xf32>,
    } else {
    }
    %c0 = arith.constant 0 : index
    %c0_1 = arith.constant 0 : index
    %3 = vector.load %arg4[%c0, %c0_1] : memref<16x512xbf16, #tpu.memory_space<vmem>>, vector<16x512xbf16>
    %c0_2 = arith.constant 0 : index
    %c0_3 = arith.constant 0 : index
    %4 = vector.load %arg5[%c0_2, %c0_3] : memref<128x512xbf16, #tpu.memory_space<vmem>>, vector<128x512xbf16>
    %c0_4 = arith.constant 0 : index
    %c0_5 = arith.constant 0 : index
    %5 = vector.load %arg6[%c0_4, %c0_5] : memref<1x512xf32, #tpu.memory_space<vmem>>, vector<1x512xf32>
    %c0_6 = arith.constant 0 : index
    %c0_7 = arith.constant 0 : index
    %6 = vector.load %arg1[%c0_6, %c0_7] : memref<128x16xbf16, #tpu.memory_space<vmem>>, vector<128x16xbf16>
    %cst = arith.constant dense<0.000000e+00> : vector<128x512xf32>
    %7 = tpu.matmul %6, %3, %cst {dimension_numbers = #tpu.dot_dimension_numbers<[1], [0], [0], [1], [0, 0, 1, 1], [], []>} : vector<128x16xbf16>, vector<16x512xbf16>, vector<128x512xf32> -> vector<128x512xf32>
    %8 = vector.broadcast %5 : vector<1x512xf32> to vector<128x512xf32>
    %9 = arith.addf %7, %8 : vector<128x512xf32>
    %c0_8 = arith.constant 0 : index
    %c0_9 = arith.constant 0 : index
    %c0_10 = arith.constant 0 : index
    %10 = vector.load %arg13[%c0_8, %c0_9, %c0_10] : memref<2x16x128xf32, #tpu.memory_space<vmem>>, vector<1x16x128xf32>
    %11 = vector.shape_cast %10 : vector<1x16x128xf32> to vector<16x128xf32>
    %c0_11 = arith.constant 0 : index
    %c0_12 = arith.constant 0 : index
    %c0_13 = arith.constant 0 : index
    %12 = vector.load %arg14[%c0_11, %c0_12, %c0_13] : memref<2x16x128xf32, #tpu.memory_space<vmem>>, vector<1x16x128xf32>
    %13 = vector.shape_cast %12 : vector<1x16x128xf32> to vector<16x128xf32>
    %14 = vector.extract_strided_slice %9 {offsets = [0, 0], sizes = [16, 512], strides = [1, 1]} : vector<128x512xf32> to vector<16x512xf32>
    %15 = arith.truncf %11 : vector<16x128xf32> to vector<16x128xbf16>
    %cst_14 = arith.constant dense<0.000000e+00> : vector<16x512xf32>
    %16 = tpu.matmul %15, %4, %cst_14 {dimension_numbers = #tpu.dot_dimension_numbers<[1], [0], [0], [1], [0, 0, 1, 1], [], []>} : vector<16x128xbf16>, vector<128x512xbf16>, vector<16x512xf32> -> vector<16x512xf32>
    %17 = arith.addf %14, %16 : vector<16x512xf32>
    %18 = vector.extract_strided_slice %17 {offsets = [0, 0], sizes = [16, 128], strides = [1, 1]} : vector<16x512xf32> to vector<16x128xf32>
    %cst_15 = arith.constant 5.000000e-01 : f32
    %19 = vector.broadcast %cst_15 : f32 to vector<16x128xf32>
    %20 = arith.mulf %18, %19 : vector<16x128xf32>
    %21 = math.tanh %20 : vector<16x128xf32>
    %cst_16 = arith.constant 5.000000e-01 : f32
    %22 = vector.broadcast %cst_16 : f32 to vector<16x128xf32>
    %23 = arith.mulf %21, %22 : vector<16x128xf32>
    %cst_17 = arith.constant 5.000000e-01 : f32
    %24 = vector.broadcast %cst_17 : f32 to vector<16x128xf32>
    %25 = arith.addf %23, %24 : vector<16x128xf32>
    %26 = vector.extract_strided_slice %17 {offsets = [0, 128], sizes = [16, 128], strides = [1, 1]} : vector<16x512xf32> to vector<16x128xf32>
    %cst_18 = arith.constant 5.000000e-01 : f32
    %27 = vector.broadcast %cst_18 : f32 to vector<16x128xf32>
    %28 = arith.mulf %26, %27 : vector<16x128xf32>
    %29 = math.tanh %28 : vector<16x128xf32>
    %cst_19 = arith.constant 5.000000e-01 : f32
    %30 = vector.broadcast %cst_19 : f32 to vector<16x128xf32>
    %31 = arith.mulf %29, %30 : vector<16x128xf32>
    %cst_20 = arith.constant 5.000000e-01 : f32
    %32 = vector.broadcast %cst_20 : f32 to vector<16x128xf32>
    %33 = arith.addf %31, %32 : vector<16x128xf32>
    %34 = vector.extract_strided_slice %17 {offsets = [0, 256], sizes = [16, 128], strides = [1, 1]} : vector<16x512xf32> to vector<16x128xf32>
    %35 = math.tanh %34 : vector<16x128xf32>
    %36 = vector.extract_strided_slice %17 {offsets = [0, 384], sizes = [16, 128], strides = [1, 1]} : vector<16x512xf32> to vector<16x128xf32>
    %cst_21 = arith.constant 5.000000e-01 : f32
    %37 = vector.broadcast %cst_21 : f32 to vector<16x128xf32>
    %38 = arith.mulf %36, %37 : vector<16x128xf32>
    %39 = math.tanh %38 : vector<16x128xf32>
    %cst_22 = arith.constant 5.000000e-01 : f32
    %40 = vector.broadcast %cst_22 : f32 to vector<16x128xf32>
    %41 = arith.mulf %39, %40 : vector<16x128xf32>
    %cst_23 = arith.constant 5.000000e-01 : f32
    %42 = vector.broadcast %cst_23 : f32 to vector<16x128xf32>
    %43 = arith.addf %41, %42 : vector<16x128xf32>
    %44 = arith.mulf %33, %13 : vector<16x128xf32>
    %45 = arith.mulf %25, %35 : vector<16x128xf32>
    %46 = arith.addf %44, %45 : vector<16x128xf32>
    %47 = math.tanh %46 : vector<16x128xf32>
    %48 = arith.mulf %43, %47 : vector<16x128xf32>
    %49 = arith.truncf %48 : vector<16x128xf32> to vector<16x128xbf16>
    %c0_24 = arith.constant 0 : index
    %c0_25 = arith.constant 0 : index
    %50 = vector.load %arg15[%c0_24, %c0_25] : memref<128x128xbf16, #tpu.memory_space<vmem>>, vector<16x128xbf16>
    tpu.vector_store %arg15[%c0_24, %c0_25], %49 {strides = array<i32>} : memref<128x128xbf16, #tpu.memory_space<vmem>>, vector<16x128xbf16>,
    %51 = vector.extract_strided_slice %9 {offsets = [16, 0], sizes = [16, 512], strides = [1, 1]} : vector<128x512xf32> to vector<16x512xf32>
    %52 = arith.truncf %48 : vector<16x128xf32> to vector<16x128xbf16>
    %cst_26 = arith.constant dense<0.000000e+00> : vector<16x512xf32>
    %53 = tpu.matmul %52, %4, %cst_26 {dimension_numbers = #tpu.dot_dimension_numbers<[1], [0], [0], [1], [0, 0, 1, 1], [], []>} : vector<16x128xbf16>, vector<128x512xbf16>, vector<16x512xf32> -> vector<16x512xf32>
    %54 = arith.addf %51, %53 : vector<16x512xf32>
    %55 = vector.extract_strided_slice %54 {offsets = [0, 0], sizes = [16, 128], strides = [1, 1]} : vector<16x512xf32> to vector<16x128xf32>
    %cst_27 = arith.constant 5.000000e-01 : f32
    %56 = vector.broadcast %cst_27 : f32 to vector<16x128xf32>
    %57 = arith.mulf %55, %56 : vector<16x128xf32>
    %58 = math.tanh %57 : vector<16x128xf32>
    %cst_28 = arith.constant 5.000000e-01 : f32
    %59 = vector.broadcast %cst_28 : f32 to vector<16x128xf32>
    %60 = arith.mulf %58, %59 : vector<16x128xf32>
    %cst_29 = arith.constant 5.000000e-01 : f32
    %61 = vector.broadcast %cst_29 : f32 to vector<16x128xf32>
    %62 = arith.addf %60, %61 : vector<16x128xf32>
    %63 = vector.extract_strided_slice %54 {offsets = [0, 128], sizes = [16, 128], strides = [1, 1]} : vector<16x512xf32> to vector<16x128xf32>
    %cst_30 = arith.constant 5.000000e-01 : f32
    %64 = vector.broadcast %cst_30 : f32 to vector<16x128xf32>
    %65 = arith.mulf %63, %64 : vector<16x128xf32>
    %66 = math.tanh %65 : vector<16x128xf32>
    %cst_31 = arith.constant 5.000000e-01 : f32
    %67 = vector.broadcast %cst_31 : f32 to vector<16x128xf32>
    %68 = arith.mulf %66, %67 : vector<16x128xf32>
    %cst_32 = arith.constant 5.000000e-01 : f32
    %69 = vector.broadcast %cst_32 : f32 to vector<16x128xf32>
    %70 = arith.addf %68, %69 : vector<16x128xf32>
    %71 = vector.extract_strided_slice %54 {offsets = [0, 256], sizes = [16, 128], strides = [1, 1]} : vector<16x512xf32> to vector<16x128xf32>
    %72 = math.tanh %71 : vector<16x128xf32>
    %73 = vector.extract_strided_slice %54 {offsets = [0, 384], sizes = [16, 128], strides = [1, 1]} : vector<16x512xf32> to vector<16x128xf32>
    %cst_33 = arith.constant 5.000000e-01 : f32
    %74 = vector.broadcast %cst_33 : f32 to vector<16x128xf32>
    %75 = arith.mulf %73, %74 : vector<16x128xf32>
    %76 = math.tanh %75 : vector<16x128xf32>
    %cst_34 = arith.constant 5.000000e-01 : f32
    %77 = vector.broadcast %cst_34 : f32 to vector<16x128xf32>
    %78 = arith.mulf %76, %77 : vector<16x128xf32>
    %cst_35 = arith.constant 5.000000e-01 : f32
    %79 = vector.broadcast %cst_35 : f32 to vector<16x128xf32>
    %80 = arith.addf %78, %79 : vector<16x128xf32>
    %81 = arith.mulf %70, %46 : vector<16x128xf32>
    %82 = arith.mulf %62, %72 : vector<16x128xf32>
    %83 = arith.addf %81, %82 : vector<16x128xf32>
    %84 = math.tanh %83 : vector<16x128xf32>
    %85 = arith.mulf %80, %84 : vector<16x128xf32>
    %86 = arith.truncf %85 : vector<16x128xf32> to vector<16x128xbf16>
    %c16 = arith.constant 16 : index
    %c0_36 = arith.constant 0 : index
    %87 = vector.load %arg15[%c16, %c0_36] : memref<128x128xbf16, #tpu.memory_space<vmem>>, vector<16x128xbf16>
    tpu.vector_store %arg15[%c16, %c0_36], %86 {strides = array<i32>} : memref<128x128xbf16, #tpu.memory_space<vmem>>, vector<16x128xbf16>,
    %88 = vector.extract_strided_slice %9 {offsets = [32, 0], sizes = [16, 512], strides = [1, 1]} : vector<128x512xf32> to vector<16x512xf32>
    %89 = arith.truncf %85 : vector<16x128xf32> to vector<16x128xbf16>
    %cst_37 = arith.constant dense<0.000000e+00> : vector<16x512xf32>
    %90 = tpu.matmul %89, %4, %cst_37 {dimension_numbers = #tpu.dot_dimension_numbers<[1], [0], [0], [1], [0, 0, 1, 1], [], []>} : vector<16x128xbf16>, vector<128x512xbf16>, vector<16x512xf32> -> vector<16x512xf32>
    %91 = arith.addf %88, %90 : vector<16x512xf32>
    %92 = vector.extract_strided_slice %91 {offsets = [0, 0], sizes = [16, 128], strides = [1, 1]} : vector<16x512xf32> to vector<16x128xf32>
    %cst_38 = arith.constant 5.000000e-01 : f32
    %93 = vector.broadcast %cst_38 : f32 to vector<16x128xf32>
    %94 = arith.mulf %92, %93 : vector<16x128xf32>
    %95 = math.tanh %94 : vector<16x128xf32>
    %cst_39 = arith.constant 5.000000e-01 : f32
    %96 = vector.broadcast %cst_39 : f32 to vector<16x128xf32>
    %97 = arith.mulf %95, %96 : vector<16x128xf32>
    %cst_40 = arith.constant 5.000000e-01 : f32
    %98 = vector.broadcast %cst_40 : f32 to vector<16x128xf32>
    %99 = arith.addf %97, %98 : vector<16x128xf32>
    %100 = vector.extract_strided_slice %91 {offsets = [0, 128], sizes = [16, 128], strides = [1, 1]} : vector<16x512xf32> to vector<16x128xf32>
    %cst_41 = arith.constant 5.000000e-01 : f32
    %101 = vector.broadcast %cst_41 : f32 to vector<16x128xf32>
    %102 = arith.mulf %100, %101 : vector<16x128xf32>
    %103 = math.tanh %102 : vector<16x128xf32>
    %cst_42 = arith.constant 5.000000e-01 : f32
    %104 = vector.broadcast %cst_42 : f32 to vector<16x128xf32>
    %105 = arith.mulf %103, %104 : vector<16x128xf32>
    %cst_43 = arith.constant 5.000000e-01 : f32
    %106 = vector.broadcast %cst_43 : f32 to vector<16x128xf32>
    %107 = arith.addf %105, %106 : vector<16x128xf32>
    %108 = vector.extract_strided_slice %91 {offsets = [0, 256], sizes = [16, 128], strides = [1, 1]} : vector<16x512xf32> to vector<16x128xf32>
    %109 = math.tanh %108 : vector<16x128xf32>
    %110 = vector.extract_strided_slice %91 {offsets = [0, 384], sizes = [16, 128], strides = [1, 1]} : vector<16x512xf32> to vector<16x128xf32>
    %cst_44 = arith.constant 5.000000e-01 : f32
    %111 = vector.broadcast %cst_44 : f32 to vector<16x128xf32>
    %112 = arith.mulf %110, %111 : vector<16x128xf32>
    %113 = math.tanh %112 : vector<16x128xf32>
    %cst_45 = arith.constant 5.000000e-01 : f32
    %114 = vector.broadcast %cst_45 : f32 to vector<16x128xf32>
    %115 = arith.mulf %113, %114 : vector<16x128xf32>
    %cst_46 = arith.constant 5.000000e-01 : f32
    %116 = vector.broadcast %cst_46 : f32 to vector<16x128xf32>
    %117 = arith.addf %115, %116 : vector<16x128xf32>
    %118 = arith.mulf %107, %83 : vector<16x128xf32>
    %119 = arith.mulf %99, %109 : vector<16x128xf32>
    %120 = arith.addf %118, %119 : vector<16x128xf32>
    %121 = math.tanh %120 : vector<16x128xf32>
    %122 = arith.mulf %117, %121 : vector<16x128xf32>
    %123 = arith.truncf %122 : vector<16x128xf32> to vector<16x128xbf16>
    %c32 = arith.constant 32 : index
    %c0_47 = arith.constant 0 : index
    %124 = vector.load %arg15[%c32, %c0_47] : memref<128x128xbf16, #tpu.memory_space<vmem>>, vector<16x128xbf16>
    tpu.vector_store %arg15[%c32, %c0_47], %123 {strides = array<i32>} : memref<128x128xbf16, #tpu.memory_space<vmem>>, vector<16x128xbf16>,
    %125 = vector.extract_strided_slice %9 {offsets = [48, 0], sizes = [16, 512], strides = [1, 1]} : vector<128x512xf32> to vector<16x512xf32>
    %126 = arith.truncf %122 : vector<16x128xf32> to vector<16x128xbf16>
    %cst_48 = arith.constant dense<0.000000e+00> : vector<16x512xf32>
    %127 = tpu.matmul %126, %4, %cst_48 {dimension_numbers = #tpu.dot_dimension_numbers<[1], [0], [0], [1], [0, 0, 1, 1], [], []>} : vector<16x128xbf16>, vector<128x512xbf16>, vector<16x512xf32> -> vector<16x512xf32>
    %128 = arith.addf %125, %127 : vector<16x512xf32>
    %129 = vector.extract_strided_slice %128 {offsets = [0, 0], sizes = [16, 128], strides = [1, 1]} : vector<16x512xf32> to vector<16x128xf32>
    %cst_49 = arith.constant 5.000000e-01 : f32
    %130 = vector.broadcast %cst_49 : f32 to vector<16x128xf32>
    %131 = arith.mulf %129, %130 : vector<16x128xf32>
    %132 = math.tanh %131 : vector<16x128xf32>
    %cst_50 = arith.constant 5.000000e-01 : f32
    %133 = vector.broadcast %cst_50 : f32 to vector<16x128xf32>
    %134 = arith.mulf %132, %133 : vector<16x128xf32>
    %cst_51 = arith.constant 5.000000e-01 : f32
    %135 = vector.broadcast %cst_51 : f32 to vector<16x128xf32>
    %136 = arith.addf %134, %135 : vector<16x128xf32>
    %137 = vector.extract_strided_slice %128 {offsets = [0, 128], sizes = [16, 128], strides = [1, 1]} : vector<16x512xf32> to vector<16x128xf32>
    %cst_52 = arith.constant 5.000000e-01 : f32
    %138 = vector.broadcast %cst_52 : f32 to vector<16x128xf32>
    %139 = arith.mulf %137, %138 : vector<16x128xf32>
    %140 = math.tanh %139 : vector<16x128xf32>
    %cst_53 = arith.constant 5.000000e-01 : f32
    %141 = vector.broadcast %cst_53 : f32 to vector<16x128xf32>
    %142 = arith.mulf %140, %141 : vector<16x128xf32>
    %cst_54 = arith.constant 5.000000e-01 : f32
    %143 = vector.broadcast %cst_54 : f32 to vector<16x128xf32>
    %144 = arith.addf %142, %143 : vector<16x128xf32>
    %145 = vector.extract_strided_slice %128 {offsets = [0, 256], sizes = [16, 128], strides = [1, 1]} : vector<16x512xf32> to vector<16x128xf32>
    %146 = math.tanh %145 : vector<16x128xf32>
    %147 = vector.extract_strided_slice %128 {offsets = [0, 384], sizes = [16, 128], strides = [1, 1]} : vector<16x512xf32> to vector<16x128xf32>
    %cst_55 = arith.constant 5.000000e-01 : f32
    %148 = vector.broadcast %cst_55 : f32 to vector<16x128xf32>
    %149 = arith.mulf %147, %148 : vector<16x128xf32>
    %150 = math.tanh %149 : vector<16x128xf32>
    %cst_56 = arith.constant 5.000000e-01 : f32
    %151 = vector.broadcast %cst_56 : f32 to vector<16x128xf32>
    %152 = arith.mulf %150, %151 : vector<16x128xf32>
    %cst_57 = arith.constant 5.000000e-01 : f32
    %153 = vector.broadcast %cst_57 : f32 to vector<16x128xf32>
    %154 = arith.addf %152, %153 : vector<16x128xf32>
    %155 = arith.mulf %144, %120 : vector<16x128xf32>
    %156 = arith.mulf %136, %146 : vector<16x128xf32>
    %157 = arith.addf %155, %156 : vector<16x128xf32>
    %158 = math.tanh %157 : vector<16x128xf32>
    %159 = arith.mulf %154, %158 : vector<16x128xf32>
    %160 = arith.truncf %159 : vector<16x128xf32> to vector<16x128xbf16>
    %c48 = arith.constant 48 : index
    %c0_58 = arith.constant 0 : index
    %161 = vector.load %arg15[%c48, %c0_58] : memref<128x128xbf16, #tpu.memory_space<vmem>>, vector<16x128xbf16>
    tpu.vector_store %arg15[%c48, %c0_58], %160 {strides = array<i32>} : memref<128x128xbf16, #tpu.memory_space<vmem>>, vector<16x128xbf16>,
    %162 = vector.extract_strided_slice %9 {offsets = [64, 0], sizes = [16, 512], strides = [1, 1]} : vector<128x512xf32> to vector<16x512xf32>
    %163 = arith.truncf %159 : vector<16x128xf32> to vector<16x128xbf16>
    %cst_59 = arith.constant dense<0.000000e+00> : vector<16x512xf32>
    %164 = tpu.matmul %163, %4, %cst_59 {dimension_numbers = #tpu.dot_dimension_numbers<[1], [0], [0], [1], [0, 0, 1, 1], [], []>} : vector<16x128xbf16>, vector<128x512xbf16>, vector<16x512xf32> -> vector<16x512xf32>
    %165 = arith.addf %162, %164 : vector<16x512xf32>
    %166 = vector.extract_strided_slice %165 {offsets = [0, 0], sizes = [16, 128], strides = [1, 1]} : vector<16x512xf32> to vector<16x128xf32>
    %cst_60 = arith.constant 5.000000e-01 : f32
    %167 = vector.broadcast %cst_60 : f32 to vector<16x128xf32>
    %168 = arith.mulf %166, %167 : vector<16x128xf32>
    %169 = math.tanh %168 : vector<16x128xf32>
    %cst_61 = arith.constant 5.000000e-01 : f32
    %170 = vector.broadcast %cst_61 : f32 to vector<16x128xf32>
    %171 = arith.mulf %169, %170 : vector<16x128xf32>
    %cst_62 = arith.constant 5.000000e-01 : f32
    %172 = vector.broadcast %cst_62 : f32 to vector<16x128xf32>
    %173 = arith.addf %171, %172 : vector<16x128xf32>
    %174 = vector.extract_strided_slice %165 {offsets = [0, 128], sizes = [16, 128], strides = [1, 1]} : vector<16x512xf32> to vector<16x128xf32>
    %cst_63 = arith.constant 5.000000e-01 : f32
    %175 = vector.broadcast %cst_63 : f32 to vector<16x128xf32>
    %176 = arith.mulf %174, %175 : vector<16x128xf32>
    %177 = math.tanh %176 : vector<16x128xf32>
    %cst_64 = arith.constant 5.000000e-01 : f32
    %178 = vector.broadcast %cst_64 : f32 to vector<16x128xf32>
    %179 = arith.mulf %177, %178 : vector<16x128xf32>
    %cst_65 = arith.constant 5.000000e-01 : f32
    %180 = vector.broadcast %cst_65 : f32 to vector<16x128xf32>
    %181 = arith.addf %179, %180 : vector<16x128xf32>
    %182 = vector.extract_strided_slice %165 {offsets = [0, 256], sizes = [16, 128], strides = [1, 1]} : vector<16x512xf32> to vector<16x128xf32>
    %183 = math.tanh %182 : vector<16x128xf32>
    %184 = vector.extract_strided_slice %165 {offsets = [0, 384], sizes = [16, 128], strides = [1, 1]} : vector<16x512xf32> to vector<16x128xf32>
    %cst_66 = arith.constant 5.000000e-01 : f32
    %185 = vector.broadcast %cst_66 : f32 to vector<16x128xf32>
    %186 = arith.mulf %184, %185 : vector<16x128xf32>
    %187 = math.tanh %186 : vector<16x128xf32>
    %cst_67 = arith.constant 5.000000e-01 : f32
    %188 = vector.broadcast %cst_67 : f32 to vector<16x128xf32>
    %189 = arith.mulf %187, %188 : vector<16x128xf32>
    %cst_68 = arith.constant 5.000000e-01 : f32
    %190 = vector.broadcast %cst_68 : f32 to vector<16x128xf32>
    %191 = arith.addf %189, %190 : vector<16x128xf32>
    %192 = arith.mulf %181, %157 : vector<16x128xf32>
    %193 = arith.mulf %173, %183 : vector<16x128xf32>
    %194 = arith.addf %192, %193 : vector<16x128xf32>
    %195 = math.tanh %194 : vector<16x128xf32>
    %196 = arith.mulf %191, %195 : vector<16x128xf32>
    %197 = arith.truncf %196 : vector<16x128xf32> to vector<16x128xbf16>
    %c64 = arith.constant 64 : index
    %c0_69 = arith.constant 0 : index
    %198 = vector.load %arg15[%c64, %c0_69] : memref<128x128xbf16, #tpu.memory_space<vmem>>, vector<16x128xbf16>
    tpu.vector_store %arg15[%c64, %c0_69], %197 {strides = array<i32>} : memref<128x128xbf16, #tpu.memory_space<vmem>>, vector<16x128xbf16>,
    %199 = vector.extract_strided_slice %9 {offsets = [80, 0], sizes = [16, 512], strides = [1, 1]} : vector<128x512xf32> to vector<16x512xf32>
    %200 = arith.truncf %196 : vector<16x128xf32> to vector<16x128xbf16>
    %cst_70 = arith.constant dense<0.000000e+00> : vector<16x512xf32>
    %201 = tpu.matmul %200, %4, %cst_70 {dimension_numbers = #tpu.dot_dimension_numbers<[1], [0], [0], [1], [0, 0, 1, 1], [], []>} : vector<16x128xbf16>, vector<128x512xbf16>, vector<16x512xf32> -> vector<16x512xf32>
    %202 = arith.addf %199, %201 : vector<16x512xf32>
    %203 = vector.extract_strided_slice %202 {offsets = [0, 0], sizes = [16, 128], strides = [1, 1]} : vector<16x512xf32> to vector<16x128xf32>
    %cst_71 = arith.constant 5.000000e-01 : f32
    %204 = vector.broadcast %cst_71 : f32 to vector<16x128xf32>
    %205 = arith.mulf %203, %204 : vector<16x128xf32>
    %206 = math.tanh %205 : vector<16x128xf32>
    %cst_72 = arith.constant 5.000000e-01 : f32
    %207 = vector.broadcast %cst_72 : f32 to vector<16x128xf32>
    %208 = arith.mulf %206, %207 : vector<16x128xf32>
    %cst_73 = arith.constant 5.000000e-01 : f32
    %209 = vector.broadcast %cst_73 : f32 to vector<16x128xf32>
    %210 = arith.addf %208, %209 : vector<16x128xf32>
    %211 = vector.extract_strided_slice %202 {offsets = [0, 128], sizes = [16, 128], strides = [1, 1]} : vector<16x512xf32> to vector<16x128xf32>
    %cst_74 = arith.constant 5.000000e-01 : f32
    %212 = vector.broadcast %cst_74 : f32 to vector<16x128xf32>
    %213 = arith.mulf %211, %212 : vector<16x128xf32>
    %214 = math.tanh %213 : vector<16x128xf32>
    %cst_75 = arith.constant 5.000000e-01 : f32
    %215 = vector.broadcast %cst_75 : f32 to vector<16x128xf32>
    %216 = arith.mulf %214, %215 : vector<16x128xf32>
    %cst_76 = arith.constant 5.000000e-01 : f32
    %217 = vector.broadcast %cst_76 : f32 to vector<16x128xf32>
    %218 = arith.addf %216, %217 : vector<16x128xf32>
    %219 = vector.extract_strided_slice %202 {offsets = [0, 256], sizes = [16, 128], strides = [1, 1]} : vector<16x512xf32> to vector<16x128xf32>
    %220 = math.tanh %219 : vector<16x128xf32>
    %221 = vector.extract_strided_slice %202 {offsets = [0, 384], sizes = [16, 128], strides = [1, 1]} : vector<16x512xf32> to vector<16x128xf32>
    %cst_77 = arith.constant 5.000000e-01 : f32
    %222 = vector.broadcast %cst_77 : f32 to vector<16x128xf32>
    %223 = arith.mulf %221, %222 : vector<16x128xf32>
    %224 = math.tanh %223 : vector<16x128xf32>
    %cst_78 = arith.constant 5.000000e-01 : f32
    %225 = vector.broadcast %cst_78 : f32 to vector<16x128xf32>
    %226 = arith.mulf %224, %225 : vector<16x128xf32>
    %cst_79 = arith.constant 5.000000e-01 : f32
    %227 = vector.broadcast %cst_79 : f32 to vector<16x128xf32>
    %228 = arith.addf %226, %227 : vector<16x128xf32>
    %229 = arith.mulf %218, %194 : vector<16x128xf32>
    %230 = arith.mulf %210, %220 : vector<16x128xf32>
    %231 = arith.addf %229, %230 : vector<16x128xf32>
    %232 = math.tanh %231 : vector<16x128xf32>
    %233 = arith.mulf %228, %232 : vector<16x128xf32>
    %234 = arith.truncf %233 : vector<16x128xf32> to vector<16x128xbf16>
    %c80 = arith.constant 80 : index
    %c0_80 = arith.constant 0 : index
    %235 = vector.load %arg15[%c80, %c0_80] : memref<128x128xbf16, #tpu.memory_space<vmem>>, vector<16x128xbf16>
    tpu.vector_store %arg15[%c80, %c0_80], %234 {strides = array<i32>} : memref<128x128xbf16, #tpu.memory_space<vmem>>, vector<16x128xbf16>,
    %236 = vector.extract_strided_slice %9 {offsets = [96, 0], sizes = [16, 512], strides = [1, 1]} : vector<128x512xf32> to vector<16x512xf32>
    %237 = arith.truncf %233 : vector<16x128xf32> to vector<16x128xbf16>
    %cst_81 = arith.constant dense<0.000000e+00> : vector<16x512xf32>
    %238 = tpu.matmul %237, %4, %cst_81 {dimension_numbers = #tpu.dot_dimension_numbers<[1], [0], [0], [1], [0, 0, 1, 1], [], []>} : vector<16x128xbf16>, vector<128x512xbf16>, vector<16x512xf32> -> vector<16x512xf32>
    %239 = arith.addf %236, %238 : vector<16x512xf32>
    %240 = vector.extract_strided_slice %239 {offsets = [0, 0], sizes = [16, 128], strides = [1, 1]} : vector<16x512xf32> to vector<16x128xf32>
    %cst_82 = arith.constant 5.000000e-01 : f32
    %241 = vector.broadcast %cst_82 : f32 to vector<16x128xf32>
    %242 = arith.mulf %240, %241 : vector<16x128xf32>
    %243 = math.tanh %242 : vector<16x128xf32>
    %cst_83 = arith.constant 5.000000e-01 : f32
    %244 = vector.broadcast %cst_83 : f32 to vector<16x128xf32>
    %245 = arith.mulf %243, %244 : vector<16x128xf32>
    %cst_84 = arith.constant 5.000000e-01 : f32
    %246 = vector.broadcast %cst_84 : f32 to vector<16x128xf32>
    %247 = arith.addf %245, %246 : vector<16x128xf32>
    %248 = vector.extract_strided_slice %239 {offsets = [0, 128], sizes = [16, 128], strides = [1, 1]} : vector<16x512xf32> to vector<16x128xf32>
    %cst_85 = arith.constant 5.000000e-01 : f32
    %249 = vector.broadcast %cst_85 : f32 to vector<16x128xf32>
    %250 = arith.mulf %248, %249 : vector<16x128xf32>
    %251 = math.tanh %250 : vector<16x128xf32>
    %cst_86 = arith.constant 5.000000e-01 : f32
    %252 = vector.broadcast %cst_86 : f32 to vector<16x128xf32>
    %253 = arith.mulf %251, %252 : vector<16x128xf32>
    %cst_87 = arith.constant 5.000000e-01 : f32
    %254 = vector.broadcast %cst_87 : f32 to vector<16x128xf32>
    %255 = arith.addf %253, %254 : vector<16x128xf32>
    %256 = vector.extract_strided_slice %239 {offsets = [0, 256], sizes = [16, 128], strides = [1, 1]} : vector<16x512xf32> to vector<16x128xf32>
    %257 = math.tanh %256 : vector<16x128xf32>
    %258 = vector.extract_strided_slice %239 {offsets = [0, 384], sizes = [16, 128], strides = [1, 1]} : vector<16x512xf32> to vector<16x128xf32>
    %cst_88 = arith.constant 5.000000e-01 : f32
    %259 = vector.broadcast %cst_88 : f32 to vector<16x128xf32>
    %260 = arith.mulf %258, %259 : vector<16x128xf32>
    %261 = math.tanh %260 : vector<16x128xf32>
    %cst_89 = arith.constant 5.000000e-01 : f32
    %262 = vector.broadcast %cst_89 : f32 to vector<16x128xf32>
    %263 = arith.mulf %261, %262 : vector<16x128xf32>
    %cst_90 = arith.constant 5.000000e-01 : f32
    %264 = vector.broadcast %cst_90 : f32 to vector<16x128xf32>
    %265 = arith.addf %263, %264 : vector<16x128xf32>
    %266 = arith.mulf %255, %231 : vector<16x128xf32>
    %267 = arith.mulf %247, %257 : vector<16x128xf32>
    %268 = arith.addf %266, %267 : vector<16x128xf32>
    %269 = math.tanh %268 : vector<16x128xf32>
    %270 = arith.mulf %265, %269 : vector<16x128xf32>
    %271 = arith.truncf %270 : vector<16x128xf32> to vector<16x128xbf16>
    %c96 = arith.constant 96 : index
    %c0_91 = arith.constant 0 : index
    %272 = vector.load %arg15[%c96, %c0_91] : memref<128x128xbf16, #tpu.memory_space<vmem>>, vector<16x128xbf16>
    tpu.vector_store %arg15[%c96, %c0_91], %271 {strides = array<i32>} : memref<128x128xbf16, #tpu.memory_space<vmem>>, vector<16x128xbf16>,
    %273 = vector.extract_strided_slice %9 {offsets = [112, 0], sizes = [16, 512], strides = [1, 1]} : vector<128x512xf32> to vector<16x512xf32>
    %274 = arith.truncf %270 : vector<16x128xf32> to vector<16x128xbf16>
    %cst_92 = arith.constant dense<0.000000e+00> : vector<16x512xf32>
    %275 = tpu.matmul %274, %4, %cst_92 {dimension_numbers = #tpu.dot_dimension_numbers<[1], [0], [0], [1], [0, 0, 1, 1], [], []>} : vector<16x128xbf16>, vector<128x512xbf16>, vector<16x512xf32> -> vector<16x512xf32>
    %276 = arith.addf %273, %275 : vector<16x512xf32>
    %277 = vector.extract_strided_slice %276 {offsets = [0, 0], sizes = [16, 128], strides = [1, 1]} : vector<16x512xf32> to vector<16x128xf32>
    %cst_93 = arith.constant 5.000000e-01 : f32
    %278 = vector.broadcast %cst_93 : f32 to vector<16x128xf32>
    %279 = arith.mulf %277, %278 : vector<16x128xf32>
    %280 = math.tanh %279 : vector<16x128xf32>
    %cst_94 = arith.constant 5.000000e-01 : f32
    %281 = vector.broadcast %cst_94 : f32 to vector<16x128xf32>
    %282 = arith.mulf %280, %281 : vector<16x128xf32>
    %cst_95 = arith.constant 5.000000e-01 : f32
    %283 = vector.broadcast %cst_95 : f32 to vector<16x128xf32>
    %284 = arith.addf %282, %283 : vector<16x128xf32>
    %285 = vector.extract_strided_slice %276 {offsets = [0, 128], sizes = [16, 128], strides = [1, 1]} : vector<16x512xf32> to vector<16x128xf32>
    %cst_96 = arith.constant 5.000000e-01 : f32
    %286 = vector.broadcast %cst_96 : f32 to vector<16x128xf32>
    %287 = arith.mulf %285, %286 : vector<16x128xf32>
    %288 = math.tanh %287 : vector<16x128xf32>
    %cst_97 = arith.constant 5.000000e-01 : f32
    %289 = vector.broadcast %cst_97 : f32 to vector<16x128xf32>
    %290 = arith.mulf %288, %289 : vector<16x128xf32>
    %cst_98 = arith.constant 5.000000e-01 : f32
    %291 = vector.broadcast %cst_98 : f32 to vector<16x128xf32>
    %292 = arith.addf %290, %291 : vector<16x128xf32>
    %293 = vector.extract_strided_slice %276 {offsets = [0, 256], sizes = [16, 128], strides = [1, 1]} : vector<16x512xf32> to vector<16x128xf32>
    %294 = math.tanh %293 : vector<16x128xf32>
    %295 = vector.extract_strided_slice %276 {offsets = [0, 384], sizes = [16, 128], strides = [1, 1]} : vector<16x512xf32> to vector<16x128xf32>
    %cst_99 = arith.constant 5.000000e-01 : f32
    %296 = vector.broadcast %cst_99 : f32 to vector<16x128xf32>
    %297 = arith.mulf %295, %296 : vector<16x128xf32>
    %298 = math.tanh %297 : vector<16x128xf32>
    %cst_100 = arith.constant 5.000000e-01 : f32
    %299 = vector.broadcast %cst_100 : f32 to vector<16x128xf32>
    %300 = arith.mulf %298, %299 : vector<16x128xf32>
    %cst_101 = arith.constant 5.000000e-01 : f32
    %301 = vector.broadcast %cst_101 : f32 to vector<16x128xf32>
    %302 = arith.addf %300, %301 : vector<16x128xf32>
    %303 = arith.mulf %292, %268 : vector<16x128xf32>
    %304 = arith.mulf %284, %294 : vector<16x128xf32>
    %305 = arith.addf %303, %304 : vector<16x128xf32>
    %306 = math.tanh %305 : vector<16x128xf32>
    %307 = arith.mulf %302, %306 : vector<16x128xf32>
    %308 = arith.truncf %307 : vector<16x128xf32> to vector<16x128xbf16>
    %c112 = arith.constant 112 : index
    %c0_102 = arith.constant 0 : index
    %309 = vector.load %arg15[%c112, %c0_102] : memref<128x128xbf16, #tpu.memory_space<vmem>>, vector<16x128xbf16>
    tpu.vector_store %arg15[%c112, %c0_102], %308 {strides = array<i32>} : memref<128x128xbf16, #tpu.memory_space<vmem>>, vector<16x128xbf16>,
    %c0_103 = arith.constant 0 : index
    %c0_104 = arith.constant 0 : index
    %c0_105 = arith.constant 0 : index
    %310 = vector.load %arg13[%c0_103, %c0_104, %c0_105] : memref<2x16x128xf32, #tpu.memory_space<vmem>>, vector<1x16x128xf32>
    %311 = vector.shape_cast %310 : vector<1x16x128xf32> to vector<16x128xf32>
    %312 = vector.shape_cast %307 : vector<16x128xf32> to vector<1x16x128xf32>
    tpu.vector_store %arg13[%c0_103, %c0_104, %c0_105], %312 {strides = array<i32>} : memref<2x16x128xf32, #tpu.memory_space<vmem>>, vector<1x16x128xf32>,
    %c0_106 = arith.constant 0 : index
    %c0_107 = arith.constant 0 : index
    %c0_108 = arith.constant 0 : index
    %313 = vector.load %arg14[%c0_106, %c0_107, %c0_108] : memref<2x16x128xf32, #tpu.memory_space<vmem>>, vector<1x16x128xf32>
    %314 = vector.shape_cast %313 : vector<1x16x128xf32> to vector<16x128xf32>
    %315 = vector.shape_cast %305 : vector<16x128xf32> to vector<1x16x128xf32>
    tpu.vector_store %arg14[%c0_106, %c0_107, %c0_108], %315 {strides = array<i32>} : memref<2x16x128xf32, #tpu.memory_space<vmem>>, vector<1x16x128xf32>,
    %c0_109 = arith.constant 0 : index
    %c0_110 = arith.constant 0 : index
    %316 = vector.load %arg7[%c0_109, %c0_110] : memref<128x512xbf16, #tpu.memory_space<vmem>>, vector<128x512xbf16>
    %c0_111 = arith.constant 0 : index
    %c0_112 = arith.constant 0 : index
    %317 = vector.load %arg8[%c0_111, %c0_112] : memref<128x512xbf16, #tpu.memory_space<vmem>>, vector<128x512xbf16>
    %c0_113 = arith.constant 0 : index
    %c0_114 = arith.constant 0 : index
    %318 = vector.load %arg9[%c0_113, %c0_114] : memref<1x512xf32, #tpu.memory_space<vmem>>, vector<1x512xf32>
    %c0_115 = arith.constant 0 : index
    %c0_116 = arith.constant 0 : index
    %319 = vector.load %arg15[%c0_115, %c0_116] : memref<128x128xbf16, #tpu.memory_space<vmem>>, vector<128x128xbf16>
    %cst_117 = arith.constant dense<0.000000e+00> : vector<128x512xf32>
    %320 = tpu.matmul %319, %316, %cst_117 {dimension_numbers = #tpu.dot_dimension_numbers<[1], [0], [0], [1], [0, 0, 1, 1], [], []>} : vector<128x128xbf16>, vector<128x512xbf16>, vector<128x512xf32> -> vector<128x512xf32>
    %321 = vector.broadcast %318 : vector<1x512xf32> to vector<128x512xf32>
    %322 = arith.addf %320, %321 : vector<128x512xf32>
    %c1 = arith.constant 1 : index
    %c0_118 = arith.constant 0 : index
    %c0_119 = arith.constant 0 : index
    %323 = vector.load %arg13[%c1, %c0_118, %c0_119] : memref<2x16x128xf32, #tpu.memory_space<vmem>>, vector<1x16x128xf32>
    %324 = vector.shape_cast %323 : vector<1x16x128xf32> to vector<16x128xf32>
    %c1_120 = arith.constant 1 : index
    %c0_121 = arith.constant 0 : index
    %c0_122 = arith.constant 0 : index
    %325 = vector.load %arg14[%c1_120, %c0_121, %c0_122] : memref<2x16x128xf32, #tpu.memory_space<vmem>>, vector<1x16x128xf32>
    %326 = vector.shape_cast %325 : vector<1x16x128xf32> to vector<16x128xf32>
    %327 = vector.extract_strided_slice %322 {offsets = [0, 0], sizes = [16, 512], strides = [1, 1]} : vector<128x512xf32> to vector<16x512xf32>
    %328 = arith.truncf %324 : vector<16x128xf32> to vector<16x128xbf16>
    %cst_123 = arith.constant dense<0.000000e+00> : vector<16x512xf32>
    %329 = tpu.matmul %328, %317, %cst_123 {dimension_numbers = #tpu.dot_dimension_numbers<[1], [0], [0], [1], [0, 0, 1, 1], [], []>} : vector<16x128xbf16>, vector<128x512xbf16>, vector<16x512xf32> -> vector<16x512xf32>
    %330 = arith.addf %327, %329 : vector<16x512xf32>
    %331 = vector.extract_strided_slice %330 {offsets = [0, 0], sizes = [16, 128], strides = [1, 1]} : vector<16x512xf32> to vector<16x128xf32>
    %cst_124 = arith.constant 5.000000e-01 : f32
    %332 = vector.broadcast %cst_124 : f32 to vector<16x128xf32>
    %333 = arith.mulf %331, %332 : vector<16x128xf32>
    %334 = math.tanh %333 : vector<16x128xf32>
    %cst_125 = arith.constant 5.000000e-01 : f32
    %335 = vector.broadcast %cst_125 : f32 to vector<16x128xf32>
    %336 = arith.mulf %334, %335 : vector<16x128xf32>
    %cst_126 = arith.constant 5.000000e-01 : f32
    %337 = vector.broadcast %cst_126 : f32 to vector<16x128xf32>
    %338 = arith.addf %336, %337 : vector<16x128xf32>
    %339 = vector.extract_strided_slice %330 {offsets = [0, 128], sizes = [16, 128], strides = [1, 1]} : vector<16x512xf32> to vector<16x128xf32>
    %cst_127 = arith.constant 5.000000e-01 : f32
    %340 = vector.broadcast %cst_127 : f32 to vector<16x128xf32>
    %341 = arith.mulf %339, %340 : vector<16x128xf32>
    %342 = math.tanh %341 : vector<16x128xf32>
    %cst_128 = arith.constant 5.000000e-01 : f32
    %343 = vector.broadcast %cst_128 : f32 to vector<16x128xf32>
    %344 = arith.mulf %342, %343 : vector<16x128xf32>
    %cst_129 = arith.constant 5.000000e-01 : f32
    %345 = vector.broadcast %cst_129 : f32 to vector<16x128xf32>
    %346 = arith.addf %344, %345 : vector<16x128xf32>
    %347 = vector.extract_strided_slice %330 {offsets = [0, 256], sizes = [16, 128], strides = [1, 1]} : vector<16x512xf32> to vector<16x128xf32>
    %348 = math.tanh %347 : vector<16x128xf32>
    %349 = vector.extract_strided_slice %330 {offsets = [0, 384], sizes = [16, 128], strides = [1, 1]} : vector<16x512xf32> to vector<16x128xf32>
    %cst_130 = arith.constant 5.000000e-01 : f32
    %350 = vector.broadcast %cst_130 : f32 to vector<16x128xf32>
    %351 = arith.mulf %349, %350 : vector<16x128xf32>
    %352 = math.tanh %351 : vector<16x128xf32>
    %cst_131 = arith.constant 5.000000e-01 : f32
    %353 = vector.broadcast %cst_131 : f32 to vector<16x128xf32>
    %354 = arith.mulf %352, %353 : vector<16x128xf32>
    %cst_132 = arith.constant 5.000000e-01 : f32
    %355 = vector.broadcast %cst_132 : f32 to vector<16x128xf32>
    %356 = arith.addf %354, %355 : vector<16x128xf32>
    %357 = arith.mulf %346, %326 : vector<16x128xf32>
    %358 = arith.mulf %338, %348 : vector<16x128xf32>
    %359 = arith.addf %357, %358 : vector<16x128xf32>
    %360 = math.tanh %359 : vector<16x128xf32>
    %361 = arith.mulf %356, %360 : vector<16x128xf32>
    %362 = vector.extract_strided_slice %322 {offsets = [16, 0], sizes = [16, 512], strides = [1, 1]} : vector<128x512xf32> to vector<16x512xf32>
    %363 = arith.truncf %361 : vector<16x128xf32> to vector<16x128xbf16>
    %cst_133 = arith.constant dense<0.000000e+00> : vector<16x512xf32>
    %364 = tpu.matmul %363, %317, %cst_133 {dimension_numbers = #tpu.dot_dimension_numbers<[1], [0], [0], [1], [0, 0, 1, 1], [], []>} : vector<16x128xbf16>, vector<128x512xbf16>, vector<16x512xf32> -> vector<16x512xf32>
    %365 = arith.addf %362, %364 : vector<16x512xf32>
    %366 = vector.extract_strided_slice %365 {offsets = [0, 0], sizes = [16, 128], strides = [1, 1]} : vector<16x512xf32> to vector<16x128xf32>
    %cst_134 = arith.constant 5.000000e-01 : f32
    %367 = vector.broadcast %cst_134 : f32 to vector<16x128xf32>
    %368 = arith.mulf %366, %367 : vector<16x128xf32>
    %369 = math.tanh %368 : vector<16x128xf32>
    %cst_135 = arith.constant 5.000000e-01 : f32
    %370 = vector.broadcast %cst_135 : f32 to vector<16x128xf32>
    %371 = arith.mulf %369, %370 : vector<16x128xf32>
    %cst_136 = arith.constant 5.000000e-01 : f32
    %372 = vector.broadcast %cst_136 : f32 to vector<16x128xf32>
    %373 = arith.addf %371, %372 : vector<16x128xf32>
    %374 = vector.extract_strided_slice %365 {offsets = [0, 128], sizes = [16, 128], strides = [1, 1]} : vector<16x512xf32> to vector<16x128xf32>
    %cst_137 = arith.constant 5.000000e-01 : f32
    %375 = vector.broadcast %cst_137 : f32 to vector<16x128xf32>
    %376 = arith.mulf %374, %375 : vector<16x128xf32>
    %377 = math.tanh %376 : vector<16x128xf32>
    %cst_138 = arith.constant 5.000000e-01 : f32
    %378 = vector.broadcast %cst_138 : f32 to vector<16x128xf32>
    %379 = arith.mulf %377, %378 : vector<16x128xf32>
    %cst_139 = arith.constant 5.000000e-01 : f32
    %380 = vector.broadcast %cst_139 : f32 to vector<16x128xf32>
    %381 = arith.addf %379, %380 : vector<16x128xf32>
    %382 = vector.extract_strided_slice %365 {offsets = [0, 256], sizes = [16, 128], strides = [1, 1]} : vector<16x512xf32> to vector<16x128xf32>
    %383 = math.tanh %382 : vector<16x128xf32>
    %384 = vector.extract_strided_slice %365 {offsets = [0, 384], sizes = [16, 128], strides = [1, 1]} : vector<16x512xf32> to vector<16x128xf32>
    %cst_140 = arith.constant 5.000000e-01 : f32
    %385 = vector.broadcast %cst_140 : f32 to vector<16x128xf32>
    %386 = arith.mulf %384, %385 : vector<16x128xf32>
    %387 = math.tanh %386 : vector<16x128xf32>
    %cst_141 = arith.constant 5.000000e-01 : f32
    %388 = vector.broadcast %cst_141 : f32 to vector<16x128xf32>
    %389 = arith.mulf %387, %388 : vector<16x128xf32>
    %cst_142 = arith.constant 5.000000e-01 : f32
    %390 = vector.broadcast %cst_142 : f32 to vector<16x128xf32>
    %391 = arith.addf %389, %390 : vector<16x128xf32>
    %392 = arith.mulf %381, %359 : vector<16x128xf32>
    %393 = arith.mulf %373, %383 : vector<16x128xf32>
    %394 = arith.addf %392, %393 : vector<16x128xf32>
    %395 = math.tanh %394 : vector<16x128xf32>
    %396 = arith.mulf %391, %395 : vector<16x128xf32>
    %397 = vector.extract_strided_slice %322 {offsets = [32, 0], sizes = [16, 512], strides = [1, 1]} : vector<128x512xf32> to vector<16x512xf32>
    %398 = arith.truncf %396 : vector<16x128xf32> to vector<16x128xbf16>
    %cst_143 = arith.constant dense<0.000000e+00> : vector<16x512xf32>
    %399 = tpu.matmul %398, %317, %cst_143 {dimension_numbers = #tpu.dot_dimension_numbers<[1], [0], [0], [1], [0, 0, 1, 1], [], []>} : vector<16x128xbf16>, vector<128x512xbf16>, vector<16x512xf32> -> vector<16x512xf32>
    %400 = arith.addf %397, %399 : vector<16x512xf32>
    %401 = vector.extract_strided_slice %400 {offsets = [0, 0], sizes = [16, 128], strides = [1, 1]} : vector<16x512xf32> to vector<16x128xf32>
    %cst_144 = arith.constant 5.000000e-01 : f32
    %402 = vector.broadcast %cst_144 : f32 to vector<16x128xf32>
    %403 = arith.mulf %401, %402 : vector<16x128xf32>
    %404 = math.tanh %403 : vector<16x128xf32>
    %cst_145 = arith.constant 5.000000e-01 : f32
    %405 = vector.broadcast %cst_145 : f32 to vector<16x128xf32>
    %406 = arith.mulf %404, %405 : vector<16x128xf32>
    %cst_146 = arith.constant 5.000000e-01 : f32
    %407 = vector.broadcast %cst_146 : f32 to vector<16x128xf32>
    %408 = arith.addf %406, %407 : vector<16x128xf32>
    %409 = vector.extract_strided_slice %400 {offsets = [0, 128], sizes = [16, 128], strides = [1, 1]} : vector<16x512xf32> to vector<16x128xf32>
    %cst_147 = arith.constant 5.000000e-01 : f32
    %410 = vector.broadcast %cst_147 : f32 to vector<16x128xf32>
    %411 = arith.mulf %409, %410 : vector<16x128xf32>
    %412 = math.tanh %411 : vector<16x128xf32>
    %cst_148 = arith.constant 5.000000e-01 : f32
    %413 = vector.broadcast %cst_148 : f32 to vector<16x128xf32>
    %414 = arith.mulf %412, %413 : vector<16x128xf32>
    %cst_149 = arith.constant 5.000000e-01 : f32
    %415 = vector.broadcast %cst_149 : f32 to vector<16x128xf32>
    %416 = arith.addf %414, %415 : vector<16x128xf32>
    %417 = vector.extract_strided_slice %400 {offsets = [0, 256], sizes = [16, 128], strides = [1, 1]} : vector<16x512xf32> to vector<16x128xf32>
    %418 = math.tanh %417 : vector<16x128xf32>
    %419 = vector.extract_strided_slice %400 {offsets = [0, 384], sizes = [16, 128], strides = [1, 1]} : vector<16x512xf32> to vector<16x128xf32>
    %cst_150 = arith.constant 5.000000e-01 : f32
    %420 = vector.broadcast %cst_150 : f32 to vector<16x128xf32>
    %421 = arith.mulf %419, %420 : vector<16x128xf32>
    %422 = math.tanh %421 : vector<16x128xf32>
    %cst_151 = arith.constant 5.000000e-01 : f32
    %423 = vector.broadcast %cst_151 : f32 to vector<16x128xf32>
    %424 = arith.mulf %422, %423 : vector<16x128xf32>
    %cst_152 = arith.constant 5.000000e-01 : f32
    %425 = vector.broadcast %cst_152 : f32 to vector<16x128xf32>
    %426 = arith.addf %424, %425 : vector<16x128xf32>
    %427 = arith.mulf %416, %394 : vector<16x128xf32>
    %428 = arith.mulf %408, %418 : vector<16x128xf32>
    %429 = arith.addf %427, %428 : vector<16x128xf32>
    %430 = math.tanh %429 : vector<16x128xf32>
    %431 = arith.mulf %426, %430 : vector<16x128xf32>
    %432 = vector.extract_strided_slice %322 {offsets = [48, 0], sizes = [16, 512], strides = [1, 1]} : vector<128x512xf32> to vector<16x512xf32>
    %433 = arith.truncf %431 : vector<16x128xf32> to vector<16x128xbf16>
    %cst_153 = arith.constant dense<0.000000e+00> : vector<16x512xf32>
    %434 = tpu.matmul %433, %317, %cst_153 {dimension_numbers = #tpu.dot_dimension_numbers<[1], [0], [0], [1], [0, 0, 1, 1], [], []>} : vector<16x128xbf16>, vector<128x512xbf16>, vector<16x512xf32> -> vector<16x512xf32>
    %435 = arith.addf %432, %434 : vector<16x512xf32>
    %436 = vector.extract_strided_slice %435 {offsets = [0, 0], sizes = [16, 128], strides = [1, 1]} : vector<16x512xf32> to vector<16x128xf32>
    %cst_154 = arith.constant 5.000000e-01 : f32
    %437 = vector.broadcast %cst_154 : f32 to vector<16x128xf32>
    %438 = arith.mulf %436, %437 : vector<16x128xf32>
    %439 = math.tanh %438 : vector<16x128xf32>
    %cst_155 = arith.constant 5.000000e-01 : f32
    %440 = vector.broadcast %cst_155 : f32 to vector<16x128xf32>
    %441 = arith.mulf %439, %440 : vector<16x128xf32>
    %cst_156 = arith.constant 5.000000e-01 : f32
    %442 = vector.broadcast %cst_156 : f32 to vector<16x128xf32>
    %443 = arith.addf %441, %442 : vector<16x128xf32>
    %444 = vector.extract_strided_slice %435 {offsets = [0, 128], sizes = [16, 128], strides = [1, 1]} : vector<16x512xf32> to vector<16x128xf32>
    %cst_157 = arith.constant 5.000000e-01 : f32
    %445 = vector.broadcast %cst_157 : f32 to vector<16x128xf32>
    %446 = arith.mulf %444, %445 : vector<16x128xf32>
    %447 = math.tanh %446 : vector<16x128xf32>
    %cst_158 = arith.constant 5.000000e-01 : f32
    %448 = vector.broadcast %cst_158 : f32 to vector<16x128xf32>
    %449 = arith.mulf %447, %448 : vector<16x128xf32>
    %cst_159 = arith.constant 5.000000e-01 : f32
    %450 = vector.broadcast %cst_159 : f32 to vector<16x128xf32>
    %451 = arith.addf %449, %450 : vector<16x128xf32>
    %452 = vector.extract_strided_slice %435 {offsets = [0, 256], sizes = [16, 128], strides = [1, 1]} : vector<16x512xf32> to vector<16x128xf32>
    %453 = math.tanh %452 : vector<16x128xf32>
    %454 = vector.extract_strided_slice %435 {offsets = [0, 384], sizes = [16, 128], strides = [1, 1]} : vector<16x512xf32> to vector<16x128xf32>
    %cst_160 = arith.constant 5.000000e-01 : f32
    %455 = vector.broadcast %cst_160 : f32 to vector<16x128xf32>
    %456 = arith.mulf %454, %455 : vector<16x128xf32>
    %457 = math.tanh %456 : vector<16x128xf32>
    %cst_161 = arith.constant 5.000000e-01 : f32
    %458 = vector.broadcast %cst_161 : f32 to vector<16x128xf32>
    %459 = arith.mulf %457, %458 : vector<16x128xf32>
    %cst_162 = arith.constant 5.000000e-01 : f32
    %460 = vector.broadcast %cst_162 : f32 to vector<16x128xf32>
    %461 = arith.addf %459, %460 : vector<16x128xf32>
    %462 = arith.mulf %451, %429 : vector<16x128xf32>
    %463 = arith.mulf %443, %453 : vector<16x128xf32>
    %464 = arith.addf %462, %463 : vector<16x128xf32>
    %465 = math.tanh %464 : vector<16x128xf32>
    %466 = arith.mulf %461, %465 : vector<16x128xf32>
    %467 = vector.extract_strided_slice %322 {offsets = [64, 0], sizes = [16, 512], strides = [1, 1]} : vector<128x512xf32> to vector<16x512xf32>
    %468 = arith.truncf %466 : vector<16x128xf32> to vector<16x128xbf16>
    %cst_163 = arith.constant dense<0.000000e+00> : vector<16x512xf32>
    %469 = tpu.matmul %468, %317, %cst_163 {dimension_numbers = #tpu.dot_dimension_numbers<[1], [0], [0], [1], [0, 0, 1, 1], [], []>} : vector<16x128xbf16>, vector<128x512xbf16>, vector<16x512xf32> -> vector<16x512xf32>
    %470 = arith.addf %467, %469 : vector<16x512xf32>
    %471 = vector.extract_strided_slice %470 {offsets = [0, 0], sizes = [16, 128], strides = [1, 1]} : vector<16x512xf32> to vector<16x128xf32>
    %cst_164 = arith.constant 5.000000e-01 : f32
    %472 = vector.broadcast %cst_164 : f32 to vector<16x128xf32>
    %473 = arith.mulf %471, %472 : vector<16x128xf32>
    %474 = math.tanh %473 : vector<16x128xf32>
    %cst_165 = arith.constant 5.000000e-01 : f32
    %475 = vector.broadcast %cst_165 : f32 to vector<16x128xf32>
    %476 = arith.mulf %474, %475 : vector<16x128xf32>
    %cst_166 = arith.constant 5.000000e-01 : f32
    %477 = vector.broadcast %cst_166 : f32 to vector<16x128xf32>
    %478 = arith.addf %476, %477 : vector<16x128xf32>
    %479 = vector.extract_strided_slice %470 {offsets = [0, 128], sizes = [16, 128], strides = [1, 1]} : vector<16x512xf32> to vector<16x128xf32>
    %cst_167 = arith.constant 5.000000e-01 : f32
    %480 = vector.broadcast %cst_167 : f32 to vector<16x128xf32>
    %481 = arith.mulf %479, %480 : vector<16x128xf32>
    %482 = math.tanh %481 : vector<16x128xf32>
    %cst_168 = arith.constant 5.000000e-01 : f32
    %483 = vector.broadcast %cst_168 : f32 to vector<16x128xf32>
    %484 = arith.mulf %482, %483 : vector<16x128xf32>
    %cst_169 = arith.constant 5.000000e-01 : f32
    %485 = vector.broadcast %cst_169 : f32 to vector<16x128xf32>
    %486 = arith.addf %484, %485 : vector<16x128xf32>
    %487 = vector.extract_strided_slice %470 {offsets = [0, 256], sizes = [16, 128], strides = [1, 1]} : vector<16x512xf32> to vector<16x128xf32>
    %488 = math.tanh %487 : vector<16x128xf32>
    %489 = vector.extract_strided_slice %470 {offsets = [0, 384], sizes = [16, 128], strides = [1, 1]} : vector<16x512xf32> to vector<16x128xf32>
    %cst_170 = arith.constant 5.000000e-01 : f32
    %490 = vector.broadcast %cst_170 : f32 to vector<16x128xf32>
    %491 = arith.mulf %489, %490 : vector<16x128xf32>
    %492 = math.tanh %491 : vector<16x128xf32>
    %cst_171 = arith.constant 5.000000e-01 : f32
    %493 = vector.broadcast %cst_171 : f32 to vector<16x128xf32>
    %494 = arith.mulf %492, %493 : vector<16x128xf32>
    %cst_172 = arith.constant 5.000000e-01 : f32
    %495 = vector.broadcast %cst_172 : f32 to vector<16x128xf32>
    %496 = arith.addf %494, %495 : vector<16x128xf32>
    %497 = arith.mulf %486, %464 : vector<16x128xf32>
    %498 = arith.mulf %478, %488 : vector<16x128xf32>
    %499 = arith.addf %497, %498 : vector<16x128xf32>
    %500 = math.tanh %499 : vector<16x128xf32>
    %501 = arith.mulf %496, %500 : vector<16x128xf32>
    %502 = vector.extract_strided_slice %322 {offsets = [80, 0], sizes = [16, 512], strides = [1, 1]} : vector<128x512xf32> to vector<16x512xf32>
    %503 = arith.truncf %501 : vector<16x128xf32> to vector<16x128xbf16>
    %cst_173 = arith.constant dense<0.000000e+00> : vector<16x512xf32>
    %504 = tpu.matmul %503, %317, %cst_173 {dimension_numbers = #tpu.dot_dimension_numbers<[1], [0], [0], [1], [0, 0, 1, 1], [], []>} : vector<16x128xbf16>, vector<128x512xbf16>, vector<16x512xf32> -> vector<16x512xf32>
    %505 = arith.addf %502, %504 : vector<16x512xf32>
    %506 = vector.extract_strided_slice %505 {offsets = [0, 0], sizes = [16, 128], strides = [1, 1]} : vector<16x512xf32> to vector<16x128xf32>
    %cst_174 = arith.constant 5.000000e-01 : f32
    %507 = vector.broadcast %cst_174 : f32 to vector<16x128xf32>
    %508 = arith.mulf %506, %507 : vector<16x128xf32>
    %509 = math.tanh %508 : vector<16x128xf32>
    %cst_175 = arith.constant 5.000000e-01 : f32
    %510 = vector.broadcast %cst_175 : f32 to vector<16x128xf32>
    %511 = arith.mulf %509, %510 : vector<16x128xf32>
    %cst_176 = arith.constant 5.000000e-01 : f32
    %512 = vector.broadcast %cst_176 : f32 to vector<16x128xf32>
    %513 = arith.addf %511, %512 : vector<16x128xf32>
    %514 = vector.extract_strided_slice %505 {offsets = [0, 128], sizes = [16, 128], strides = [1, 1]} : vector<16x512xf32> to vector<16x128xf32>
    %cst_177 = arith.constant 5.000000e-01 : f32
    %515 = vector.broadcast %cst_177 : f32 to vector<16x128xf32>
    %516 = arith.mulf %514, %515 : vector<16x128xf32>
    %517 = math.tanh %516 : vector<16x128xf32>
    %cst_178 = arith.constant 5.000000e-01 : f32
    %518 = vector.broadcast %cst_178 : f32 to vector<16x128xf32>
    %519 = arith.mulf %517, %518 : vector<16x128xf32>
    %cst_179 = arith.constant 5.000000e-01 : f32
    %520 = vector.broadcast %cst_179 : f32 to vector<16x128xf32>
    %521 = arith.addf %519, %520 : vector<16x128xf32>
    %522 = vector.extract_strided_slice %505 {offsets = [0, 256], sizes = [16, 128], strides = [1, 1]} : vector<16x512xf32> to vector<16x128xf32>
    %523 = math.tanh %522 : vector<16x128xf32>
    %524 = vector.extract_strided_slice %505 {offsets = [0, 384], sizes = [16, 128], strides = [1, 1]} : vector<16x512xf32> to vector<16x128xf32>
    %cst_180 = arith.constant 5.000000e-01 : f32
    %525 = vector.broadcast %cst_180 : f32 to vector<16x128xf32>
    %526 = arith.mulf %524, %525 : vector<16x128xf32>
    %527 = math.tanh %526 : vector<16x128xf32>
    %cst_181 = arith.constant 5.000000e-01 : f32
    %528 = vector.broadcast %cst_181 : f32 to vector<16x128xf32>
    %529 = arith.mulf %527, %528 : vector<16x128xf32>
    %cst_182 = arith.constant 5.000000e-01 : f32
    %530 = vector.broadcast %cst_182 : f32 to vector<16x128xf32>
    %531 = arith.addf %529, %530 : vector<16x128xf32>
    %532 = arith.mulf %521, %499 : vector<16x128xf32>
    %533 = arith.mulf %513, %523 : vector<16x128xf32>
    %534 = arith.addf %532, %533 : vector<16x128xf32>
    %535 = math.tanh %534 : vector<16x128xf32>
    %536 = arith.mulf %531, %535 : vector<16x128xf32>
    %537 = vector.extract_strided_slice %322 {offsets = [96, 0], sizes = [16, 512], strides = [1, 1]} : vector<128x512xf32> to vector<16x512xf32>
    %538 = arith.truncf %536 : vector<16x128xf32> to vector<16x128xbf16>
    %cst_183 = arith.constant dense<0.000000e+00> : vector<16x512xf32>
    %539 = tpu.matmul %538, %317, %cst_183 {dimension_numbers = #tpu.dot_dimension_numbers<[1], [0], [0], [1], [0, 0, 1, 1], [], []>} : vector<16x128xbf16>, vector<128x512xbf16>, vector<16x512xf32> -> vector<16x512xf32>
    %540 = arith.addf %537, %539 : vector<16x512xf32>
    %541 = vector.extract_strided_slice %540 {offsets = [0, 0], sizes = [16, 128], strides = [1, 1]} : vector<16x512xf32> to vector<16x128xf32>
    %cst_184 = arith.constant 5.000000e-01 : f32
    %542 = vector.broadcast %cst_184 : f32 to vector<16x128xf32>
    %543 = arith.mulf %541, %542 : vector<16x128xf32>
    %544 = math.tanh %543 : vector<16x128xf32>
    %cst_185 = arith.constant 5.000000e-01 : f32
    %545 = vector.broadcast %cst_185 : f32 to vector<16x128xf32>
    %546 = arith.mulf %544, %545 : vector<16x128xf32>
    %cst_186 = arith.constant 5.000000e-01 : f32
    %547 = vector.broadcast %cst_186 : f32 to vector<16x128xf32>
    %548 = arith.addf %546, %547 : vector<16x128xf32>
    %549 = vector.extract_strided_slice %540 {offsets = [0, 128], sizes = [16, 128], strides = [1, 1]} : vector<16x512xf32> to vector<16x128xf32>
    %cst_187 = arith.constant 5.000000e-01 : f32
    %550 = vector.broadcast %cst_187 : f32 to vector<16x128xf32>
    %551 = arith.mulf %549, %550 : vector<16x128xf32>
    %552 = math.tanh %551 : vector<16x128xf32>
    %cst_188 = arith.constant 5.000000e-01 : f32
    %553 = vector.broadcast %cst_188 : f32 to vector<16x128xf32>
    %554 = arith.mulf %552, %553 : vector<16x128xf32>
    %cst_189 = arith.constant 5.000000e-01 : f32
    %555 = vector.broadcast %cst_189 : f32 to vector<16x128xf32>
    %556 = arith.addf %554, %555 : vector<16x128xf32>
    %557 = vector.extract_strided_slice %540 {offsets = [0, 256], sizes = [16, 128], strides = [1, 1]} : vector<16x512xf32> to vector<16x128xf32>
    %558 = math.tanh %557 : vector<16x128xf32>
    %559 = vector.extract_strided_slice %540 {offsets = [0, 384], sizes = [16, 128], strides = [1, 1]} : vector<16x512xf32> to vector<16x128xf32>
    %cst_190 = arith.constant 5.000000e-01 : f32
    %560 = vector.broadcast %cst_190 : f32 to vector<16x128xf32>
    %561 = arith.mulf %559, %560 : vector<16x128xf32>
    %562 = math.tanh %561 : vector<16x128xf32>
    %cst_191 = arith.constant 5.000000e-01 : f32
    %563 = vector.broadcast %cst_191 : f32 to vector<16x128xf32>
    %564 = arith.mulf %562, %563 : vector<16x128xf32>
    %cst_192 = arith.constant 5.000000e-01 : f32
    %565 = vector.broadcast %cst_192 : f32 to vector<16x128xf32>
    %566 = arith.addf %564, %565 : vector<16x128xf32>
    %567 = arith.mulf %556, %534 : vector<16x128xf32>
    %568 = arith.mulf %548, %558 : vector<16x128xf32>
    %569 = arith.addf %567, %568 : vector<16x128xf32>
    %570 = math.tanh %569 : vector<16x128xf32>
    %571 = arith.mulf %566, %570 : vector<16x128xf32>
    %572 = vector.extract_strided_slice %322 {offsets = [112, 0], sizes = [16, 512], strides = [1, 1]} : vector<128x512xf32> to vector<16x512xf32>
    %573 = arith.truncf %571 : vector<16x128xf32> to vector<16x128xbf16>
    %cst_193 = arith.constant dense<0.000000e+00> : vector<16x512xf32>
    %574 = tpu.matmul %573, %317, %cst_193 {dimension_numbers = #tpu.dot_dimension_numbers<[1], [0], [0], [1], [0, 0, 1, 1], [], []>} : vector<16x128xbf16>, vector<128x512xbf16>, vector<16x512xf32> -> vector<16x512xf32>
    %575 = arith.addf %572, %574 : vector<16x512xf32>
    %576 = vector.extract_strided_slice %575 {offsets = [0, 0], sizes = [16, 128], strides = [1, 1]} : vector<16x512xf32> to vector<16x128xf32>
    %cst_194 = arith.constant 5.000000e-01 : f32
    %577 = vector.broadcast %cst_194 : f32 to vector<16x128xf32>
    %578 = arith.mulf %576, %577 : vector<16x128xf32>
    %579 = math.tanh %578 : vector<16x128xf32>
    %cst_195 = arith.constant 5.000000e-01 : f32
    %580 = vector.broadcast %cst_195 : f32 to vector<16x128xf32>
    %581 = arith.mulf %579, %580 : vector<16x128xf32>
    %cst_196 = arith.constant 5.000000e-01 : f32
    %582 = vector.broadcast %cst_196 : f32 to vector<16x128xf32>
    %583 = arith.addf %581, %582 : vector<16x128xf32>
    %584 = vector.extract_strided_slice %575 {offsets = [0, 128], sizes = [16, 128], strides = [1, 1]} : vector<16x512xf32> to vector<16x128xf32>
    %cst_197 = arith.constant 5.000000e-01 : f32
    %585 = vector.broadcast %cst_197 : f32 to vector<16x128xf32>
    %586 = arith.mulf %584, %585 : vector<16x128xf32>
    %587 = math.tanh %586 : vector<16x128xf32>
    %cst_198 = arith.constant 5.000000e-01 : f32
    %588 = vector.broadcast %cst_198 : f32 to vector<16x128xf32>
    %589 = arith.mulf %587, %588 : vector<16x128xf32>
    %cst_199 = arith.constant 5.000000e-01 : f32
    %590 = vector.broadcast %cst_199 : f32 to vector<16x128xf32>
    %591 = arith.addf %589, %590 : vector<16x128xf32>
    %592 = vector.extract_strided_slice %575 {offsets = [0, 256], sizes = [16, 128], strides = [1, 1]} : vector<16x512xf32> to vector<16x128xf32>
    %593 = math.tanh %592 : vector<16x128xf32>
    %594 = vector.extract_strided_slice %575 {offsets = [0, 384], sizes = [16, 128], strides = [1, 1]} : vector<16x512xf32> to vector<16x128xf32>
    %cst_200 = arith.constant 5.000000e-01 : f32
    %595 = vector.broadcast %cst_200 : f32 to vector<16x128xf32>
    %596 = arith.mulf %594, %595 : vector<16x128xf32>
    %597 = math.tanh %596 : vector<16x128xf32>
    %cst_201 = arith.constant 5.000000e-01 : f32
    %598 = vector.broadcast %cst_201 : f32 to vector<16x128xf32>
    %599 = arith.mulf %597, %598 : vector<16x128xf32>
    %cst_202 = arith.constant 5.000000e-01 : f32
    %600 = vector.broadcast %cst_202 : f32 to vector<16x128xf32>
    %601 = arith.addf %599, %600 : vector<16x128xf32>
    %602 = arith.mulf %591, %569 : vector<16x128xf32>
    %603 = arith.mulf %583, %593 : vector<16x128xf32>
    %604 = arith.addf %602, %603 : vector<16x128xf32>
    %605 = math.tanh %604 : vector<16x128xf32>
    %606 = arith.mulf %601, %605 : vector<16x128xf32>
    %c1_203 = arith.constant 1 : index
    %c0_204 = arith.constant 0 : index
    %c0_205 = arith.constant 0 : index
    %607 = vector.load %arg13[%c1_203, %c0_204, %c0_205] : memref<2x16x128xf32, #tpu.memory_space<vmem>>, vector<1x16x128xf32>
    %608 = vector.shape_cast %607 : vector<1x16x128xf32> to vector<16x128xf32>
    %609 = vector.shape_cast %606 : vector<16x128xf32> to vector<1x16x128xf32>
    tpu.vector_store %arg13[%c1_203, %c0_204, %c0_205], %609 {strides = array<i32>} : memref<2x16x128xf32, #tpu.memory_space<vmem>>, vector<1x16x128xf32>,
    %c1_206 = arith.constant 1 : index
    %c0_207 = arith.constant 0 : index
    %c0_208 = arith.constant 0 : index
    %610 = vector.load %arg14[%c1_206, %c0_207, %c0_208] : memref<2x16x128xf32, #tpu.memory_space<vmem>>, vector<1x16x128xf32>
    %611 = vector.shape_cast %610 : vector<1x16x128xf32> to vector<16x128xf32>
    %612 = vector.shape_cast %604 : vector<16x128xf32> to vector<1x16x128xf32>
    tpu.vector_store %arg14[%c1_206, %c0_207, %c0_208], %612 {strides = array<i32>} : memref<2x16x128xf32, #tpu.memory_space<vmem>>, vector<1x16x128xf32>,
    %c0_i32_209 = arith.constant 0 : i32
    %613 = arith.cmpi eq, %arg0, %c0_i32_209 : i32
    %614 = arith.extui %613 : i1 to i32
    %c0_i32_210 = arith.constant 0 : i32
    %615 = arith.cmpi ne, %614, %c0_i32_210 : i32
    scf.if %615 {
      %616 = arith.truncf %606 : vector<16x128xf32> to vector<16x128xbf16>
      %c0_211 = arith.constant 0 : index
      %c0_212 = arith.constant 0 : index
      %617 = vector.load %arg10[%c0_211, %c0_212] : memref<128x128xbf16, #tpu.memory_space<vmem>>, vector<128x128xbf16>
      %cst_213 = arith.constant dense<0.000000e+00> : vector<16x128xf32>
      %618 = tpu.matmul %616, %617, %cst_213 {dimension_numbers = #tpu.dot_dimension_numbers<[1], [0], [0], [1], [0, 0, 1, 1], [], []>} : vector<16x128xbf16>, vector<128x128xbf16>, vector<16x128xf32> -> vector<16x128xf32>
      %c0_214 = arith.constant 0 : index
      %c0_215 = arith.constant 0 : index
      %619 = vector.load %arg11[%c0_214, %c0_215] : memref<1x128xf32, #tpu.memory_space<vmem>>, vector<1x128xf32>
      %620 = vector.broadcast %619 : vector<1x128xf32> to vector<16x128xf32>
      %621 = arith.addf %618, %620 : vector<16x128xf32>
      %c0_216 = arith.constant 0 : index
      %c0_217 = arith.constant 0 : index
      %622 = vector.load %arg12[%c0_216, %c0_217] : memref<16x128xf32, #tpu.memory_space<vmem>>, vector<16x128xf32>
      tpu.vector_store %arg12[%c0_216, %c0_217], %621 {strides = array<i32>} : memref<16x128xf32, #tpu.memory_space<vmem>>, vector<16x128xf32>,
    } else {
    }
    return
  }
  func.func @transform_0(%arg0: i32) -> (i32, i32) {
    %c0_i32 = arith.constant 0 : i32
    %c0_i32_0 = arith.constant 0 : i32
    return %arg0, %c0_i32 : i32, i32
  }
  func.func @transform_1(%arg0: i32) -> (i32, i32, i32) {
    %c0_i32 = arith.constant 0 : i32
    %c0_i32_0 = arith.constant 0 : i32
    %c0_i32_1 = arith.constant 0 : i32
    %c0_i32_2 = arith.constant 0 : i32
    return %c0_i32, %c0_i32_0, %c0_i32_1 : i32, i32, i32
  }
  func.func @transform_2(%arg0: i32) -> (i32, i32, i32) {
    %c0_i32 = arith.constant 0 : i32
    %c0_i32_0 = arith.constant 0 : i32
    %c0_i32_1 = arith.constant 0 : i32
    %c0_i32_2 = arith.constant 0 : i32
    return %c0_i32, %c0_i32_0, %c0_i32_1 : i32, i32, i32
  }
  func.func @transform_3(%arg0: i32) -> (i32, i32) {
    %c0_i32 = arith.constant 0 : i32
    %c0_i32_0 = arith.constant 0 : i32
    %c0_i32_1 = arith.constant 0 : i32
    return %c0_i32, %c0_i32_0 : i32, i32
  }
  func.func @transform_4(%arg0: i32) -> (i32, i32) {
    %c0_i32 = arith.constant 0 : i32
    %c0_i32_0 = arith.constant 0 : i32
    %c0_i32_1 = arith.constant 0 : i32
    return %c0_i32, %c0_i32_0 : i32, i32
  }
  func.func @transform_5(%arg0: i32) -> (i32, i32) {
    %c0_i32 = arith.constant 0 : i32
    %c0_i32_0 = arith.constant 0 : i32
    %c0_i32_1 = arith.constant 0 : i32
    return %c0_i32, %c0_i32_0 : i32, i32
  }
  func.func @transform_6(%arg0: i32) -> (i32, i32) {
    %c0_i32 = arith.constant 0 : i32
    %c0_i32_0 = arith.constant 0 : i32
    %c0_i32_1 = arith.constant 0 : i32
    return %c0_i32, %c0_i32_0 : i32, i32
  }
  func.func @transform_7(%arg0: i32) -> (i32, i32) {
    %c0_i32 = arith.constant 0 : i32
    %c0_i32_0 = arith.constant 0 : i32
    %c0_i32_1 = arith.constant 0 : i32
    return %c0_i32, %c0_i32_0 : i32, i32
  }
  func.func @transform_8(%arg0: i32) -> (i32, i32) {
    %c0_i32 = arith.constant 0 : i32
    %c0_i32_0 = arith.constant 0 : i32
    %c0_i32_1 = arith.constant 0 : i32
    return %c0_i32, %c0_i32_0 : i32, i32
  }
  func.func @transform_9(%arg0: i32) -> (i32, i32) {
    %c0_i32 = arith.constant 0 : i32
    %c0_i32_0 = arith.constant 0 : i32
    %c0_i32_1 = arith.constant 0 : i32
    return %c0_i32, %c0_i32_0 : i32, i32
  }
  func.func @transform_10(%arg0: i32) -> (i32, i32) {
    %c0_i32 = arith.constant 0 : i32
    %c0_i32_0 = arith.constant 0 : i32
    %c0_i32_1 = arith.constant 0 : i32
    return %c0_i32, %c0_i32_0 : i32, i32
  }
  func.func @transform_11(%arg0: i32) -> (i32, i32) {
    %c0_i32 = arith.constant 0 : i32
    %c0_i32_0 = arith.constant 0 : i32
    %c0_i32_1 = arith.constant 0 : i32
    return %c0_i32, %c0_i32_0 : i32, i32
  }
  func.func @transform_12(%arg0: i32) -> (i32, i32, i32) {
    %c0_i32 = arith.constant 0 : i32
    %c0_i32_0 = arith.constant 0 : i32
    %c0_i32_1 = arith.constant 0 : i32
    %c0_i32_2 = arith.constant 0 : i32
    return %c0_i32, %c0_i32_0, %c0_i32_1 : i32, i32, i32
  }
  func.func @transform_13(%arg0: i32) -> (i32, i32, i32) {
    %c0_i32 = arith.constant 0 : i32
    %c0_i32_0 = arith.constant 0 : i32
    %c0_i32_1 = arith.constant 0 : i32
    %c0_i32_2 = arith.constant 0 : i32
    return %c0_i32, %c0_i32_0, %c0_i32_1 : i32, i32, i32
  }
}

</mosaic_0001>

<llo_original>
// kernel: tpu_custom_call.1
$region0: #{tpu_custom_call.1}
  #allocation0 [shape = 'u32[]', space=smem, size = 0x4, offset = 0x4, fixed_abs, tag = 'smem constant byte address 0x4 - core index']
  #allocation1 [shape = 'u32[144,128]{1,0:T(1,128)}', space=vmem, size = 0x12000, scoped, tag = 'internal scratch']
  #allocation2 [shape = 'bf16[128,128]{1,0:T(8,128)(2,1)}', space=vmem, size = 0x8000, scoped, tag = 'scratch operand']
  %s0 = inlined_call_operand.vmem [shape: bf16[128,16], index: 0, kind: input, shape index: {}]
  %s1 = inlined_call_operand.hbm [shape: f32[2,16,128], index: 1, kind: input, shape index: {}, may-alias: {1,12}]
  %s2 = inlined_call_operand.hbm [shape: f32[2,16,128], index: 2, kind: input, shape index: {}, may-alias: {2,13}]
  %s3 = inlined_call_operand.vmem [shape: bf16[16,512], index: 3, kind: input, shape index: {}]
  %s4 = inlined_call_operand.hbm [shape: bf16[128,512], index: 4, kind: input, shape index: {}]
  %s5 = inlined_call_operand.vmem [shape: f32[1,512], index: 5, kind: input, shape index: {}]
  %s6 = inlined_call_operand.hbm [shape: bf16[128,512], index: 6, kind: input, shape index: {}]
  %s7 = inlined_call_operand.hbm [shape: bf16[128,512], index: 7, kind: input, shape index: {}]
  %s8 = inlined_call_operand.vmem [shape: f32[1,512], index: 8, kind: input, shape index: {}]
  %s9 = inlined_call_operand.vmem [shape: bf16[128,128], index: 9, kind: input, shape index: {}]
  %s10 = inlined_call_operand.vmem [shape: f32[1,128], index: 10, kind: input, shape index: {}]
  %s11 = inlined_call_operand.hbm [shape: f32[16,128], index: 11, kind: output, shape index: {0}]
  %s12 = inlined_call_operand.hbm [shape: f32[2,16,128], index: 12, kind: output, shape index: {1}, may-alias: {1,12}]
  %s13 = inlined_call_operand.hbm [shape: f32[2,16,128], index: 13, kind: output, shape index: {2}, may-alias: {2,13}]
  %14 = xla_tuple %s11, %s12, %s13
  %s15 = sld [smem:[#allocation0]]
  $region98: #{tpu_custom_call.1} parent=0
    _
  %s17 = ssub.s32 1, %s15
  %s18 = scalar_select 0, %s17, %s15
  $region1: #{tpu_custom_call.1} parent=0
    #allocation3 [shape = 'u8[16384]{0}', space=vmem, size = 0x4000, scoped, tag = 'input window, operand 1, single buffered']
    #allocation4 [shape = 's32[1]{0}', space=sflag, size = 0x4, scoped, tag = 'scoped memory for tpu_custom_call.1']
    #allocation5 [shape = 's32[1]{0}', space=sflag, size = 0x4, scoped, tag = 'scoped memory for tpu_custom_call.1']
    #allocation6 [shape = 'u8[16384]{0}', space=vmem, size = 0x4000, scoped, tag = 'input window, operand 2, single buffered']
    #allocation7 [shape = 's32[1]{0}', space=sflag, size = 0x4, scoped, tag = 'scoped memory for tpu_custom_call.1']
    #allocation8 [shape = 'u8[131072]{0}', space=vmem, size = 0x20000, scoped, tag = 'input window, operand 4, single buffered']
    #allocation9 [shape = 'u8[131072]{0}', space=vmem, size = 0x20000, scoped, tag = 'input window, operand 6, single buffered']
    #allocation10 [shape = 's32[1]{0}', space=sflag, size = 0x4, scoped, tag = 'scoped memory for tpu_custom_call.1']
    #allocation11 [shape = 'u8[131072]{0}', space=vmem, size = 0x20000, scoped, tag = 'input window, operand 7, single buffered']
    #allocation12 [shape = 'u8[8192]{0}', space=vmem, size = 0x2000, scoped, tag = 'output window, operand 0, single buffered']
    #allocation13 [shape = 'u8[16384]{0}', space=vmem, size = 0x4000, scoped, tag = 'output window, operand 1, single buffered']
    #allocation14 [shape = 's32[1]{0}', space=sflag, size = 0x4, scoped, tag = 'scoped memory for tpu_custom_call.1']
    #allocation15 [shape = 'u8[16384]{0}', space=vmem, size = 0x4000, scoped, tag = 'output window, operand 2, single buffered']
    %19 = vsyncpa [#allocation4], 0
    %20 = vsyncpa [#allocation7], 0
    %21 = vsyncpa [#allocation10], 0
    %22 = vsyncpa [#allocation5], 0
    %23 = vsyncpa [#allocation14], 0
    // Predicated region
    $region2: #{tpu_custom_call.1} parent=1 // pred_check
      _
    $region3: #{tpu_custom_call.1} parent=1 // pred_check_branch
      %25 = sbr.rel (0) target = $region5
    $region4: #{tpu_custom_call.1} parent=1 // pred_region
      _
    $region5: #{tpu_custom_call.1} parent=1 // pred_fallthru
      _
    // Predicated region
    $region6: #{tpu_custom_call.1} parent=1 // pred_check
      _
    $region7: #{tpu_custom_call.1} parent=1 // pred_check_branch
      %27 = sbr.rel (0) target = $region9
    $region8: #{tpu_custom_call.1} parent=1 // pred_region
      %s29 = ssub.s32 512, 512
      %30 = vsyncadd [#allocation4], %s29
      %s31 = sshll.u32 [#allocation3], 4
      %s32 = int_to_ptr.vmem [resolvable:$true] %s31
      %37 = dma.hbm_to_vmem [thread:$0]  %s1, 512, %s32, [#allocation4], 128, 128, 8
    $region9: #{tpu_custom_call.1} parent=1 // pred_fallthru
      _
    // Predicated region
    $region10: #{tpu_custom_call.1} parent=1 // pred_check
      _
    $region11: #{tpu_custom_call.1} parent=1 // pred_check_branch
      %39 = sbr.rel (0) target = $region13
    $region12: #{tpu_custom_call.1} parent=1 // pred_region
      %s41 = ssub.s32 512, 512
      %42 = vsyncadd [#allocation7], %s41
      %s43 = sshll.u32 [#allocation6], 4
      %s44 = int_to_ptr.vmem [resolvable:$true] %s43
      %49 = dma.hbm_to_vmem [thread:$0]  %s2, 512, %s44, [#allocation7], 128, 128, 8
    $region13: #{tpu_custom_call.1} parent=1 // pred_fallthru
      _
    // Predicated region
    $region14: #{tpu_custom_call.1} parent=1 // pred_check
      _
    $region15: #{tpu_custom_call.1} parent=1 // pred_check_branch
      %51 = sbr.rel (0) target = $region17
    $region16: #{tpu_custom_call.1} parent=1 // pred_region
      _
    $region17: #{tpu_custom_call.1} parent=1 // pred_fallthru
      _
    // Predicated region
    $region18: #{tpu_custom_call.1} parent=1 // pred_check
      _
    $region19: #{tpu_custom_call.1} parent=1 // pred_check_branch
      %53 = sbr.rel (0) target = $region21
    $region20: #{tpu_custom_call.1} parent=1 // pred_region
      %s55 = ssub.s32 4096, 4096
      %56 = vsyncadd [#allocation7], %s55
      %s57 = sshll.u32 [#allocation8], 4
      %s58 = int_to_ptr.vmem [resolvable:$true] %s57
      %63 = dma.hbm_to_vmem [thread:$0]  %s4, 4096, %s58, [#allocation7], 256, 256, 16
    $region21: #{tpu_custom_call.1} parent=1 // pred_fallthru
      _
    // Predicated region
    $region22: #{tpu_custom_call.1} parent=1 // pred_check
      _
    $region23: #{tpu_custom_call.1} parent=1 // pred_check_branch
      %65 = sbr.rel (0) target = $region25
    $region24: #{tpu_custom_call.1} parent=1 // pred_region
      _
    $region25: #{tpu_custom_call.1} parent=1 // pred_fallthru
      _
    // Predicated region
    $region26: #{tpu_custom_call.1} parent=1 // pred_check
      _
    $region27: #{tpu_custom_call.1} parent=1 // pred_check_branch
      %67 = sbr.rel (0) target = $region29
    $region28: #{tpu_custom_call.1} parent=1 // pred_region
      %s69 = ssub.s32 4096, 4096
      %70 = vsyncadd [#allocation10], %s69
      %s71 = sshll.u32 [#allocation9], 4
      %s72 = int_to_ptr.vmem [resolvable:$true] %s71
      %77 = dma.hbm_to_vmem [thread:$0]  %s6, 4096, %s72, [#allocation10], 256, 256, 16
    $region29: #{tpu_custom_call.1} parent=1 // pred_fallthru
      _
    // Predicated region
    $region30: #{tpu_custom_call.1} parent=1 // pred_check
      _
    $region31: #{tpu_custom_call.1} parent=1 // pred_check_branch
      %79 = sbr.rel (0) target = $region33
    $region32: #{tpu_custom_call.1} parent=1 // pred_region
      %s81 = ssub.s32 4096, 4096
      %82 = vsyncadd [#allocation10], %s81
      %s83 = sshll.u32 [#allocation11], 4
      %s84 = int_to_ptr.vmem [resolvable:$true] %s83
      %89 = dma.hbm_to_vmem [thread:$0]  %s7, 4096, %s84, [#allocation10], 256, 256, 16
    $region33: #{tpu_custom_call.1} parent=1 // pred_fallthru
      _
    // Predicated region
    $region34: #{tpu_custom_call.1} parent=1 // pred_check
      _
    $region35: #{tpu_custom_call.1} parent=1 // pred_check_branch
      %91 = sbr.rel (0) target = $region37
    $region36: #{tpu_custom_call.1} parent=1 // pred_region
      _
    $region37: #{tpu_custom_call.1} parent=1 // pred_fallthru
      _
    // Predicated region
    $region38: #{tpu_custom_call.1} parent=1 // pred_check
      _
    $region39: #{tpu_custom_call.1} parent=1 // pred_check_branch
      %93 = sbr.rel (0) target = $region41
    $region40: #{tpu_custom_call.1} parent=1 // pred_region
      _
    $region41: #{tpu_custom_call.1} parent=1 // pred_fallthru
      _
    // Predicated region
    $region42: #{tpu_custom_call.1} parent=1 // pred_check
      _
    $region43: #{tpu_custom_call.1} parent=1 // pred_check_branch
      %95 = sbr.rel (0) target = $region45
    $region44: #{tpu_custom_call.1} parent=1 // pred_region
      _
    $region45: #{tpu_custom_call.1} parent=1 // pred_fallthru
      _
    // Predicated region
    $region46: #{tpu_custom_call.1} parent=1 // pred_check
      _
    $region47: #{tpu_custom_call.1} parent=1 // pred_check_branch
      %97 = sbr.rel (0) target = $region49
    $region48: #{tpu_custom_call.1} parent=1 // pred_region
      %98 = dma.done [#allocation4], 512
    $region49: #{tpu_custom_call.1} parent=1 // pred_fallthru
      _
    // Predicated region
    $region50: #{tpu_custom_call.1} parent=1 // pred_check
      _
    $region51: #{tpu_custom_call.1} parent=1 // pred_check_branch
      %100 = sbr.rel (0) target = $region53
    $region52: #{tpu_custom_call.1} parent=1 // pred_region
      %101 = dma.done [#allocation7], 512
    $region53: #{tpu_custom_call.1} parent=1 // pred_fallthru
      _
    // Predicated region
    $region54: #{tpu_custom_call.1} parent=1 // pred_check
      _
    $region55: #{tpu_custom_call.1} parent=1 // pred_check_branch
      %103 = sbr.rel (0) target = $region57
    $region56: #{tpu_custom_call.1} parent=1 // pred_region
      %104 = dma.done [#allocation7], 4096
    $region57: #{tpu_custom_call.1} parent=1 // pred_fallthru
      _
    // Predicated region
    $region58: #{tpu_custom_call.1} parent=1 // pred_check
      _
    $region59: #{tpu_custom_call.1} parent=1 // pred_check_branch
      %106 = sbr.rel (0) target = $region61
    $region60: #{tpu_custom_call.1} parent=1 // pred_region
      %107 = dma.done [#allocation10], 4096
    $region61: #{tpu_custom_call.1} parent=1 // pred_fallthru
      _
    // Predicated region
    $region62: #{tpu_custom_call.1} parent=1 // pred_check
      _
    $region63: #{tpu_custom_call.1} parent=1 // pred_check_branch
      %109 = sbr.rel (0) target = $region65
    $region64: #{tpu_custom_call.1} parent=1 // pred_region
      %110 = dma.done [#allocation10], 4096
    $region65: #{tpu_custom_call.1} parent=1 // pred_fallthru
      _
    %p112 = scmp.eq.s32.totalorder 0, 0
    // Predicated region
    $region66: #{tpu_custom_call.1} parent=1 // pred_check
      %p113 = pneg %p112
    $region67: #{tpu_custom_call.1} parent=1 // pred_check_branch
      %115 = sbr.rel (%p113) target = $region69
    $region68: #{tpu_custom_call.1} parent=1 // pred_region
      %v116 = vld [vmem:[#allocation3] sm:$0xff]
      %v117 = vld [vmem:[#allocation3 + $0x8] sm:$0xff]
      %v118 = vld [vmem:[#allocation3 + $0x10] sm:$0xff]
      %v119 = vld [vmem:[#allocation3 + $0x18] sm:$0xff]
      %120 = vst [vmem:[#allocation13] sm:$0xff] %v116
      %121 = vst [vmem:[#allocation13 + $0x8] sm:$0xff] %v117
      %122 = vst [vmem:[#allocation13 + $0x10] sm:$0xff] %v118
      %123 = vst [vmem:[#allocation13 + $0x18] sm:$0xff] %v119
      %v124 = vld [vmem:[#allocation6] sm:$0xff]
      %v125 = vld [vmem:[#allocation6 + $0x8] sm:$0xff]
      %v126 = vld [vmem:[#allocation6 + $0x10] sm:$0xff]
      %v127 = vld [vmem:[#allocation6 + $0x18] sm:$0xff]
      %128 = vst [vmem:[#allocation15] sm:$0xff] %v124
      %129 = vst [vmem:[#allocation15 + $0x8] sm:$0xff] %v125
      %130 = vst [vmem:[#allocation15 + $0x10] sm:$0xff] %v126
      %131 = vst [vmem:[#allocation15 + $0x18] sm:$0xff] %v127
    $region69: #{tpu_custom_call.1} parent=1 // pred_fallthru
      _
    %v132 = vld [vmem:[%s3] sm:$0xff]
    %v133 = vld [vmem:[%s3 + $0x8] sm:$0xff]
    %v134 = vld [vmem:[%s3 + $0x10] sm:$0xff]
    %v135 = vld [vmem:[%s3 + $0x18] sm:$0xff]
    %v136 = vld [vmem:[#allocation8] sm:$0xff]
    %v137 = vld [vmem:[#allocation8 + $0x8] sm:$0xff]
    %v138 = vld [vmem:[#allocation8 + $0x10] sm:$0xff]
    %v139 = vld [vmem:[#allocation8 + $0x18] sm:$0xff]
    %v140 = vld [vmem:[#allocation8 + $0x20] sm:$0xff]
    %v141 = vld [vmem:[#allocation8 + $0x28] sm:$0xff]
    %v142 = vld [vmem:[#allocation8 + $0x30] sm:$0xff]
    %v143 = vld [vmem:[#allocation8 + $0x38] sm:$0xff]
    %v144 = vld [vmem:[#allocation8 + $0x40] sm:$0xff]
    %v145 = vld [vmem:[#allocation8 + $0x48] sm:$0xff]
    %v146 = vld [vmem:[#allocation8 + $0x50] sm:$0xff]
    %v147 = vld [vmem:[#allocation8 + $0x58] sm:$0xff]
    %v148 = vld [vmem:[#allocation8 + $0x60] sm:$0xff]
    %v149 = vld [vmem:[#allocation8 + $0x68] sm:$0xff]
    %v150 = vld [vmem:[#allocation8 + $0x70] sm:$0xff]
    %v151 = vld [vmem:[#allocation8 + $0x78] sm:$0xff]
    %v152 = vld [vmem:[#allocation8 + $0x80] sm:$0xff]
    %v153 = vld [vmem:[#allocation8 + $0x88] sm:$0xff]
    %v154 = vld [vmem:[#allocation8 + $0x90] sm:$0xff]
    %v155 = vld [vmem:[#allocation8 + $0x98] sm:$0xff]
    %v156 = vld [vmem:[#allocation8 + $0xa0] sm:$0xff]
    %v157 = vld [vmem:[#allocation8 + $0xa8] sm:$0xff]
    %v158 = vld [vmem:[#allocation8 + $0xb0] sm:$0xff]
    %v159 = vld [vmem:[#allocation8 + $0xb8] sm:$0xff]
    %v160 = vld [vmem:[#allocation8 + $0xc0] sm:$0xff]
    %v161 = vld [vmem:[#allocation8 + $0xc8] sm:$0xff]
    %v162 = vld [vmem:[#allocation8 + $0xd0] sm:$0xff]
    %v163 = vld [vmem:[#allocation8 + $0xd8] sm:$0xff]
    %v164 = vld [vmem:[#allocation8 + $0xe0] sm:$0xff]
    %v165 = vld [vmem:[#allocation8 + $0xe8] sm:$0xff]
    %v166 = vld [vmem:[#allocation8 + $0xf0] sm:$0xff]
    %v167 = vld [vmem:[#allocation8 + $0xf8] sm:$0xff]
    %v168 = vld [vmem:[%s5] sm:$0xf]
    %v169 = vld [vmem:[%s0] sm:$0xf]
    %v170 = vld [vmem:[%s0 + $0x4] sm:$0xf]
    %v171 = vld [vmem:[%s0 + $0x8] sm:$0xf]
    %v172 = vld [vmem:[%s0 + $0xc] sm:$0xf]
    %v173 = vld [vmem:[%s0 + $0x10] sm:$0xf]
    %v174 = vld [vmem:[%s0 + $0x14] sm:$0xf]
    %v175 = vld [vmem:[%s0 + $0x18] sm:$0xf]
    %v176 = vld [vmem:[%s0 + $0x1c] sm:$0xf]
    %v177 = vld [vmem:[%s0 + $0x20] sm:$0xf]
    %v178 = vld [vmem:[%s0 + $0x24] sm:$0xf]
    %v179 = vld [vmem:[%s0 + $0x28] sm:$0xf]
    %v180 = vld [vmem:[%s0 + $0x2c] sm:$0xf]
    %v181 = vld [vmem:[%s0 + $0x30] sm:$0xf]
    %v182 = vld [vmem:[%s0 + $0x34] sm:$0xf]
    %v183 = vld [vmem:[%s0 + $0x38] sm:$0xf]
    %v184 = vld [vmem:[%s0 + $0x3c] sm:$0xf]
    %v186 = vlaneseq
    %v187 = vshrl.u32 %v186, 7
    %v188 = vsub.s32 0, %v187
    %v189 = vrot.slane %v168, %v188
    %v190 = vlaneseq
    %v191 = vshrl.u32 %v190, 7
    %v192 = vsub.s32 1, %v191
    %v193 = vrot.slane %v168, %v192
    %v194 = vlaneseq
    %v195 = vshrl.u32 %v194, 7
    %v196 = vsub.s32 2, %v195
    %v197 = vrot.slane %v168, %v196
    %v198 = vlaneseq
    %v199 = vshrl.u32 %v198, 7
    %v200 = vsub.s32 3, %v199
    %v201 = vrot.slane %v168, %v200
    %v222 = vunpack.c.l.b16 %v169
    %v223 = vunpack.c.l.b16 %v170
    %v224 = vunpack.c.l.b16 %v171
    %v225 = vunpack.c.l.b16 %v172
    %v226 = vunpack.c.l.b16 %v173
    %v227 = vunpack.c.l.b16 %v174
    %v228 = vunpack.c.l.b16 %v175
    %v229 = vunpack.c.l.b16 %v176
    %v230 = vunpack.c.l.b16 %v177
    %v231 = vunpack.c.l.b16 %v178
    %v232 = vunpack.c.l.b16 %v179
    %v233 = vunpack.c.l.b16 %v180
    %v234 = vunpack.c.l.b16 %v181
    %v235 = vunpack.c.l.b16 %v182
    %v236 = vunpack.c.l.b16 %v183
    %v237 = vunpack.c.l.b16 %v184
    %v238 = vpack.c.b16 %v223, %v222
    %v239 = vpack.c.b16 %v225, %v224
    %v240 = vpack.c.b16 %v227, %v226
    %v241 = vpack.c.b16 %v229, %v228
    %v242 = vpack.c.b16 %v231, %v230
    %v243 = vpack.c.b16 %v233, %v232
    %v244 = vpack.c.b16 %v235, %v234
    %v245 = vpack.c.b16 %v237, %v236
    %v250 = vunpack.c.l.b16 %v132
    %v251 = vunpack.c.h.b16 %v132
    %v252 = vunpack.c.l.b16 %v133
    %v253 = vunpack.c.h.b16 %v133
    %v254 = vunpack.c.l.b16 %v134
    %v255 = vunpack.c.h.b16 %v134
    %v256 = vunpack.c.l.b16 %v135
    %v257 = vunpack.c.h.b16 %v135
    %v258 = vpack.c.b16 %v254, %v250
    %v259 = vpack.c.b16 %v255, %v251
    %v260 = vpack.c.b16 %v256, %v252
    %v261 = vpack.c.b16 %v257, %v253
    %vm266 = vcmask 130048
    %v268 = vsel %vm266, %v238, 0
    %v271 = vsel %vm266, %v239, 0
    %v274 = vsel %vm266, %v240, 0
    %v277 = vsel %vm266, %v241, 0
    %v280 = vsel %vm266, %v242, 0
    %v283 = vsel %vm266, %v243, 0
    %v286 = vsel %vm266, %v244, 0
    %v289 = vsel %vm266, %v245, 0
    %291 = vmatprep.subr.bf16.mxu0 0
    %292 = vmatpush1.bf16.msra.mxu0 0
    %293 = vmatprep.subr.bf16.mxu0 0
    %294 = vmatpush1.bf16.msra.mxu0 0
    %295 = vmatprep.subr.bf16.mxu0 0
    %296 = vmatpush1.bf16.msra.mxu0 0
    %297 = vmatprep.subr.bf16.mxu0 0
    %298 = vmatpush1.bf16.msra.mxu0 0
    %299 = vmatprep.subr.bf16.mxu0 0
    %300 = vmatpush1.bf16.msra.mxu0 0
    %301 = vmatprep.subr.bf16.mxu0 0
    %302 = vmatpush1.bf16.msra.mxu0 0
    %303 = vmatprep.subr.bf16.mxu0 0
    %304 = vmatpush1.bf16.msra.mxu0 0
    %305 = vmatprep.subr.bf16.mxu0 %v259
    %306 = vmatpush1.bf16.msra.mxu0 %v258
    %307 = vmatprep.subr.bf16.mxu0 0
    %308 = vmatpush2.bf16.msra.mxu0 0
    %309 = vmatprep.subr.bf16.mxu0 0
    %310 = vmatpush2.bf16.msra.mxu0 0
    %311 = vmatprep.subr.bf16.mxu0 0
    %312 = vmatpush2.bf16.msra.mxu0 0
    %313 = vmatprep.subr.bf16.mxu0 0
    %314 = vmatpush2.bf16.msra.mxu0 0
    %315 = vmatprep.subr.bf16.mxu0 0
    %316 = vmatpush2.bf16.msra.mxu0 0
    %317 = vmatprep.subr.bf16.mxu0 0
    %318 = vmatpush2.bf16.msra.mxu0 0
    %319 = vmatprep.subr.bf16.mxu0 0
    %320 = vmatpush2.bf16.msra.mxu0 0
    %321 = vmatprep.subr.bf16.mxu0 0
    %322 = vmatpush2.bf16.msra.mxu0 0
    %323 = vmatprep.mubr.bf16.mxu0 0
    %324 = vmatmul.mubr.bf16.gmra.mxu0 %v268
    %v325 = vpop.f32.mrf.mxu0
    %v326 = vadd.f32 %v189, %v325
    %v327 = vpop.f32.mrf.mxu0
    %v328 = vadd.f32 %v193, %v327
    %v329 = vpop.f32.mrf.mxu0
    %v330 = vadd.f32 %v189, %v329
    %v331 = vpop.f32.mrf.mxu0
    %v332 = vadd.f32 %v193, %v331
    %333 = vmatprep.mubr.bf16.mxu0 0
    %334 = vmatmul.mubr.bf16.gmra.mxu0 %v271
    %v335 = vpop.f32.mrf.mxu0
    %v336 = vadd.f32 %v189, %v335
    %v337 = vpop.f32.mrf.mxu0
    %v338 = vadd.f32 %v193, %v337
    %v339 = vpop.f32.mrf.mxu0
    %v340 = vadd.f32 %v189, %v339
    %v341 = vpop.f32.mrf.mxu0
    %v342 = vadd.f32 %v193, %v341
    %343 = vmatprep.mubr.bf16.mxu0 0
    %344 = vmatmul.mubr.bf16.gmra.mxu0 %v274
    %v345 = vpop.f32.mrf.mxu0
    %v346 = vadd.f32 %v189, %v345
    %v347 = vpop.f32.mrf.mxu0
    %v348 = vadd.f32 %v193, %v347
    %v349 = vpop.f32.mrf.mxu0
    %v350 = vadd.f32 %v189, %v349
    %v351 = vpop.f32.mrf.mxu0
    %v352 = vadd.f32 %v193, %v351
    %353 = vmatprep.mubr.bf16.mxu0 0
    %354 = vmatmul.mubr.bf16.gmra.mxu0 %v277
    %v355 = vpop.f32.mrf.mxu0
    %v356 = vadd.f32 %v189, %v355
    %v357 = vpop.f32.mrf.mxu0
    %v358 = vadd.f32 %v193, %v357
    %v359 = vpop.f32.mrf.mxu0
    %v360 = vadd.f32 %v189, %v359
    %v361 = vpop.f32.mrf.mxu0
    %v362 = vadd.f32 %v193, %v361
    %363 = vmatprep.mubr.bf16.mxu0 0
    %364 = vmatmul.mubr.bf16.gmra.mxu0 %v280
    %v365 = vpop.f32.mrf.mxu0
    %v366 = vadd.f32 %v189, %v365
    %v367 = vpop.f32.mrf.mxu0
    %v368 = vadd.f32 %v193, %v367
    %v369 = vpop.f32.mrf.mxu0
    %v370 = vadd.f32 %v189, %v369
    %v371 = vpop.f32.mrf.mxu0
    %v372 = vadd.f32 %v193, %v371
    %373 = vmatprep.mubr.bf16.mxu0 0
    %374 = vmatmul.mubr.bf16.gmra.mxu0 %v283
    %v375 = vpop.f32.mrf.mxu0
    %v376 = vadd.f32 %v189, %v375
    %v377 = vpop.f32.mrf.mxu0
    %v378 = vadd.f32 %v193, %v377
    %v379 = vpop.f32.mrf.mxu0
    %v380 = vadd.f32 %v189, %v379
    %v381 = vpop.f32.mrf.mxu0
    %v382 = vadd.f32 %v193, %v381
    %383 = vmatprep.mubr.bf16.mxu0 0
    %384 = vmatmul.mubr.bf16.gmra.mxu0 %v286
    %v385 = vpop.f32.mrf.mxu0
    %v386 = vadd.f32 %v189, %v385
    %v387 = vpop.f32.mrf.mxu0
    %v388 = vadd.f32 %v193, %v387
    %v389 = vpop.f32.mrf.mxu0
    %v390 = vadd.f32 %v189, %v389
    %v391 = vpop.f32.mrf.mxu0
    %v392 = vadd.f32 %v193, %v391
    %393 = vmatprep.mubr.bf16.mxu0 0
    %394 = vmatmul.mubr.bf16.gmra.mxu0 %v289
    %v395 = vpop.f32.mrf.mxu0
    %v396 = vadd.f32 %v189, %v395
    %v397 = vpop.f32.mrf.mxu0
    %v398 = vadd.f32 %v193, %v397
    %v399 = vpop.f32.mrf.mxu0
    %v400 = vadd.f32 %v189, %v399
    %v401 = vpop.f32.mrf.mxu0
    %v402 = vadd.f32 %v193, %v401
    %403 = vdwg.mxu0
    %404 = vmatprep.subr.bf16.mxu0 0
    %405 = vmatpush1.bf16.msra.mxu0 0
    %406 = vmatprep.subr.bf16.mxu0 0
    %407 = vmatpush1.bf16.msra.mxu0 0
    %408 = vmatprep.subr.bf16.mxu0 0
    %409 = vmatpush1.bf16.msra.mxu0 0
    %410 = vmatprep.subr.bf16.mxu0 0
    %411 = vmatpush1.bf16.msra.mxu0 0
    %412 = vmatprep.subr.bf16.mxu0 0
    %413 = vmatpush1.bf16.msra.mxu0 0
    %414 = vmatprep.subr.bf16.mxu0 0
    %415 = vmatpush1.bf16.msra.mxu0 0
    %416 = vmatprep.subr.bf16.mxu0 0
    %417 = vmatpush1.bf16.msra.mxu0 0
    %418 = vmatprep.subr.bf16.mxu0 %v261
    %419 = vmatpush1.bf16.msra.mxu0 %v260
    %420 = vmatprep.subr.bf16.mxu0 0
    %421 = vmatpush2.bf16.msra.mxu0 0
    %422 = vmatprep.subr.bf16.mxu0 0
    %423 = vmatpush2.bf16.msra.mxu0 0
    %424 = vmatprep.subr.bf16.mxu0 0
    %425 = vmatpush2.bf16.msra.mxu0 0
    %426 = vmatprep.subr.bf16.mxu0 0
    %427 = vmatpush2.bf16.msra.mxu0 0
    %428 = vmatprep.subr.bf16.mxu0 0
    %429 = vmatpush2.bf16.msra.mxu0 0
    %430 = vmatprep.subr.bf16.mxu0 0
    %431 = vmatpush2.bf16.msra.mxu0 0
    %432 = vmatprep.subr.bf16.mxu0 0
    %433 = vmatpush2.bf16.msra.mxu0 0
    %434 = vmatprep.subr.bf16.mxu0 0
    %435 = vmatpush2.bf16.msra.mxu0 0
    %436 = vmatprep.mubr.bf16.mxu0 0
    %437 = vmatmul.mubr.bf16.gmra.mxu0 %v268
    %v438 = vpop.f32.mrf.mxu0
    %v439 = vadd.f32 %v197, %v438
    %v440 = vpop.f32.mrf.mxu0
    %v441 = vadd.f32 %v201, %v440
    %v442 = vpop.f32.mrf.mxu0
    %v443 = vadd.f32 %v197, %v442
    %v444 = vpop.f32.mrf.mxu0
    %v445 = vadd.f32 %v201, %v444
    %446 = vmatprep.mubr.bf16.mxu0 0
    %447 = vmatmul.mubr.bf16.gmra.mxu0 %v271
    %v448 = vpop.f32.mrf.mxu0
    %v449 = vadd.f32 %v197, %v448
    %v450 = vpop.f32.mrf.mxu0
    %v451 = vadd.f32 %v201, %v450
    %v452 = vpop.f32.mrf.mxu0
    %v453 = vadd.f32 %v197, %v452
    %v454 = vpop.f32.mrf.mxu0
    %v455 = vadd.f32 %v201, %v454
    %456 = vmatprep.mubr.bf16.mxu0 0
    %457 = vmatmul.mubr.bf16.gmra.mxu0 %v274
    %v458 = vpop.f32.mrf.mxu0
    %v459 = vadd.f32 %v197, %v458
    %v460 = vpop.f32.mrf.mxu0
    %v461 = vadd.f32 %v201, %v460
    %v462 = vpop.f32.mrf.mxu0
    %v463 = vadd.f32 %v197, %v462
    %v464 = vpop.f32.mrf.mxu0
    %v465 = vadd.f32 %v201, %v464
    %466 = vmatprep.mubr.bf16.mxu0 0
    %467 = vmatmul.mubr.bf16.gmra.mxu0 %v277
    %v468 = vpop.f32.mrf.mxu0
    %v469 = vadd.f32 %v197, %v468
    %v470 = vpop.f32.mrf.mxu0
    %v471 = vadd.f32 %v201, %v470
    %v472 = vpop.f32.mrf.mxu0
    %v473 = vadd.f32 %v197, %v472
    %v474 = vpop.f32.mrf.mxu0
    %v475 = vadd.f32 %v201, %v474
    %476 = vmatprep.mubr.bf16.mxu0 0
    %477 = vmatmul.mubr.bf16.gmra.mxu0 %v280
    %v478 = vpop.f32.mrf.mxu0
    %v479 = vadd.f32 %v197, %v478
    %v480 = vpop.f32.mrf.mxu0
    %v481 = vadd.f32 %v201, %v480
    %v482 = vpop.f32.mrf.mxu0
    %v483 = vadd.f32 %v197, %v482
    %v484 = vpop.f32.mrf.mxu0
    %v485 = vadd.f32 %v201, %v484
    %486 = vmatprep.mubr.bf16.mxu0 0
    %487 = vmatmul.mubr.bf16.gmra.mxu0 %v283
    %v488 = vpop.f32.mrf.mxu0
    %v489 = vadd.f32 %v197, %v488
    %v490 = vpop.f32.mrf.mxu0
    %v491 = vadd.f32 %v201, %v490
    %v492 = vpop.f32.mrf.mxu0
    %v493 = vadd.f32 %v197, %v492
    %v494 = vpop.f32.mrf.mxu0
    %v495 = vadd.f32 %v201, %v494
    %496 = vmatprep.mubr.bf16.mxu0 0
    %497 = vmatmul.mubr.bf16.gmra.mxu0 %v286
    %v498 = vpop.f32.mrf.mxu0
    %v499 = vadd.f32 %v197, %v498
    %v500 = vpop.f32.mrf.mxu0
    %v501 = vadd.f32 %v201, %v500
    %v502 = vpop.f32.mrf.mxu0
    %v503 = vadd.f32 %v197, %v502
    %v504 = vpop.f32.mrf.mxu0
    %v505 = vadd.f32 %v201, %v504
    %506 = vmatprep.mubr.bf16.mxu0 0
    %507 = vmatmul.mubr.bf16.gmra.mxu0 %v289
    %v508 = vpop.f32.mrf.mxu0
    %v509 = vadd.f32 %v197, %v508
    %v510 = vpop.f32.mrf.mxu0
    %v511 = vadd.f32 %v201, %v510
    %v512 = vpop.f32.mrf.mxu0
    %v513 = vadd.f32 %v197, %v512
    %v514 = vpop.f32.mrf.mxu0
    %v515 = vadd.f32 %v201, %v514
    %516 = vdwg.mxu0
    %v517 = vld [vmem:[#allocation13] sm:$0xff]
    %v518 = vld [vmem:[#allocation13 + $0x8] sm:$0xff]
    %v519 = vld [vmem:[#allocation15] sm:$0xff]
    %v520 = vld [vmem:[#allocation15 + $0x8] sm:$0xff]
    %v521 = vpack.c.bf16 %v518, %v517
    %v554 = vunpack.c.l.b16 %v136
    %v555 = vunpack.c.h.b16 %v136
    %v556 = vunpack.c.l.b16 %v137
    %v557 = vunpack.c.h.b16 %v137
    %v558 = vunpack.c.l.b16 %v138
    %v559 = vunpack.c.h.b16 %v138
    %v560 = vunpack.c.l.b16 %v139
    %v561 = vunpack.c.h.b16 %v139
    %v562 = vunpack.c.l.b16 %v140
    %v563 = vunpack.c.h.b16 %v140
    %v564 = vunpack.c.l.b16 %v141
    %v565 = vunpack.c.h.b16 %v141
    %v566 = vunpack.c.l.b16 %v142
    %v567 = vunpack.c.h.b16 %v142
    %v568 = vunpack.c.l.b16 %v143
    %v569 = vunpack.c.h.b16 %v143
    %v570 = vunpack.c.l.b16 %v144
    %v571 = vunpack.c.h.b16 %v144
    %v572 = vunpack.c.l.b16 %v145
    %v573 = vunpack.c.h.b16 %v145
    %v574 = vunpack.c.l.b16 %v146
    %v575 = vunpack.c.h.b16 %v146
    %v576 = vunpack.c.l.b16 %v147
    %v577 = vunpack.c.h.b16 %v147
    %v578 = vunpack.c.l.b16 %v148
    %v579 = vunpack.c.h.b16 %v148
    %v580 = vunpack.c.l.b16 %v149
    %v581 = vunpack.c.h.b16 %v149
    %v582 = vunpack.c.l.b16 %v150
    %v583 = vunpack.c.h.b16 %v150
    %v584 = vunpack.c.l.b16 %v151
    %v585 = vunpack.c.h.b16 %v151
    %v586 = vunpack.c.l.b16 %v152
    %v587 = vunpack.c.h.b16 %v152
    %v588 = vunpack.c.l.b16 %v153
    %v589 = vunpack.c.h.b16 %v153
    %v590 = vunpack.c.l.b16 %v154
    %v591 = vunpack.c.h.b16 %v154
    %v592 = vunpack.c.l.b16 %v155
    %v593 = vunpack.c.h.b16 %v155
    %v594 = vunpack.c.l.b16 %v156
    %v595 = vunpack.c.h.b16 %v156
    %v596 = vunpack.c.l.b16 %v157
    %v597 = vunpack.c.h.b16 %v157
    %v598 = vunpack.c.l.b16 %v158
    %v599 = vunpack.c.h.b16 %v158
    %v600 = vunpack.c.l.b16 %v159
    %v601 = vunpack.c.h.b16 %v159
    %v602 = vunpack.c.l.b16 %v160
    %v603 = vunpack.c.h.b16 %v160
    %v604 = vunpack.c.l.b16 %v161
    %v605 = vunpack.c.h.b16 %v161
    %v606 = vunpack.c.l.b16 %v162
    %v607 = vunpack.c.h.b16 %v162
    %v608 = vunpack.c.l.b16 %v163
    %v609 = vunpack.c.h.b16 %v163
    %v610 = vunpack.c.l.b16 %v164
    %v611 = vunpack.c.h.b16 %v164
    %v612 = vunpack.c.l.b16 %v165
    %v613 = vunpack.c.h.b16 %v165
    %v614 = vunpack.c.l.b16 %v166
    %v615 = vunpack.c.h.b16 %v166
    %v616 = vunpack.c.l.b16 %v167
    %v617 = vunpack.c.h.b16 %v167
    %v618 = vpack.c.b16 %v558, %v554
    %v619 = vpack.c.b16 %v559, %v555
    %v620 = vpack.c.b16 %v560, %v556
    %v621 = vpack.c.b16 %v561, %v557
    %v622 = vpack.c.b16 %v566, %v562
    %v623 = vpack.c.b16 %v567, %v563
    %v624 = vpack.c.b16 %v568, %v564
    %v625 = vpack.c.b16 %v569, %v565
    %v626 = vpack.c.b16 %v574, %v570
    %v627 = vpack.c.b16 %v575, %v571
    %v628 = vpack.c.b16 %v576, %v572
    %v629 = vpack.c.b16 %v577, %v573
    %v630 = vpack.c.b16 %v582, %v578
    %v631 = vpack.c.b16 %v583, %v579
    %v632 = vpack.c.b16 %v584, %v580
    %v633 = vpack.c.b16 %v585, %v581
    %v634 = vpack.c.b16 %v590, %v586
    %v635 = vpack.c.b16 %v591, %v587
    %v636 = vpack.c.b16 %v592, %v588
    %v637 = vpack.c.b16 %v593, %v589
    %v638 = vpack.c.b16 %v598, %v594
    %v639 = vpack.c.b16 %v599, %v595
    %v640 = vpack.c.b16 %v600, %v596
    %v641 = vpack.c.b16 %v601, %v597
    %v642 = vpack.c.b16 %v606, %v602
    %v643 = vpack.c.b16 %v607, %v603
    %v644 = vpack.c.b16 %v608, %v604
    %v645 = vpack.c.b16 %v609, %v605
    %v646 = vpack.c.b16 %v614, %v610
    %v647 = vpack.c.b16 %v615, %v611
    %v648 = vpack.c.b16 %v616, %v612
    %v649 = vpack.c.b16 %v617, %v613
    %682 = vmatprep.subr.bf16.mxu0 %v647
    %683 = vmatpush1.bf16.msra.mxu0 %v646
    %684 = vmatprep.subr.bf16.mxu0 %v643
    %685 = vmatpush1.bf16.msra.mxu0 %v642
    %686 = vmatprep.subr.bf16.mxu0 %v639
    %687 = vmatpush1.bf16.msra.mxu0 %v638
    %688 = vmatprep.subr.bf16.mxu0 %v635
    %689 = vmatpush1.bf16.msra.mxu0 %v634
    %690 = vmatprep.subr.bf16.mxu0 %v631
    %691 = vmatpush1.bf16.msra.mxu0 %v630
    %692 = vmatprep.subr.bf16.mxu0 %v627
    %693 = vmatpush1.bf16.msra.mxu0 %v626
    %694 = vmatprep.subr.bf16.mxu0 %v623
    %695 = vmatpush1.bf16.msra.mxu0 %v622
    %696 = vmatprep.subr.bf16.mxu0 %v619
    %697 = vmatpush1.bf16.msra.mxu0 %v618
    %698 = vmatprep.subr.bf16.mxu0 0
    %699 = vmatpush2.bf16.msra.mxu0 0
    %700 = vmatprep.subr.bf16.mxu0 0
    %701 = vmatpush2.bf16.msra.mxu0 0
    %702 = vmatprep.subr.bf16.mxu0 0
    %703 = vmatpush2.bf16.msra.mxu0 0
    %704 = vmatprep.subr.bf16.mxu0 0
    %705 = vmatpush2.bf16.msra.mxu0 0
    %706 = vmatprep.subr.bf16.mxu0 0
    %707 = vmatpush2.bf16.msra.mxu0 0
    %708 = vmatprep.subr.bf16.mxu0 0
    %709 = vmatpush2.bf16.msra.mxu0 0
    %710 = vmatprep.subr.bf16.mxu0 0
    %711 = vmatpush2.bf16.msra.mxu0 0
    %712 = vmatprep.subr.bf16.mxu0 0
    %713 = vmatpush2.bf16.msra.mxu0 0
    %714 = vmatprep.mubr.bf16.mxu0 0
    %715 = vmatmul.mubr.bf16.gmra.mxu0 %v521
    %v716 = vpop.f32.mrf.mxu0
    %v717 = vadd.f32 0.0, %v716
    %v718 = vpop.f32.mrf.mxu0
    %v719 = vadd.f32 0.0, %v718
    %v720 = vpop.f32.mrf.mxu0
    %v721 = vadd.f32 0.0, %v720
    %v722 = vpop.f32.mrf.mxu0
    %v723 = vadd.f32 0.0, %v722
    %724 = vdwg.mxu0
    %725 = vmatprep.subr.bf16.mxu0 %v649
    %726 = vmatpush1.bf16.msra.mxu0 %v648
    %727 = vmatprep.subr.bf16.mxu0 %v645
    %728 = vmatpush1.bf16.msra.mxu0 %v644
    %729 = vmatprep.subr.bf16.mxu0 %v641
    %730 = vmatpush1.bf16.msra.mxu0 %v640
    %731 = vmatprep.subr.bf16.mxu0 %v637
    %732 = vmatpush1.bf16.msra.mxu0 %v636
    %733 = vmatprep.subr.bf16.mxu0 %v633
    %734 = vmatpush1.bf16.msra.mxu0 %v632
    %735 = vmatprep.subr.bf16.mxu0 %v629
    %736 = vmatpush1.bf16.msra.mxu0 %v628
    %737 = vmatprep.subr.bf16.mxu0 %v625
    %738 = vmatpush1.bf16.msra.mxu0 %v624
    %739 = vmatprep.subr.bf16.mxu0 %v621
    %740 = vmatpush1.bf16.msra.mxu0 %v620
    %741 = vmatprep.subr.bf16.mxu0 0
    %742 = vmatpush2.bf16.msra.mxu0 0
    %743 = vmatprep.subr.bf16.mxu0 0
    %744 = vmatpush2.bf16.msra.mxu0 0
    %745 = vmatprep.subr.bf16.mxu0 0
    %746 = vmatpush2.bf16.msra.mxu0 0
    %747 = vmatprep.subr.bf16.mxu0 0
    %748 = vmatpush2.bf16.msra.mxu0 0
    %749 = vmatprep.subr.bf16.mxu0 0
    %750 = vmatpush2.bf16.msra.mxu0 0
    %751 = vmatprep.subr.bf16.mxu0 0
    %752 = vmatpush2.bf16.msra.mxu0 0
    %753 = vmatprep.subr.bf16.mxu0 0
    %754 = vmatpush2.bf16.msra.mxu0 0
    %755 = vmatprep.subr.bf16.mxu0 0
    %756 = vmatpush2.bf16.msra.mxu0 0
    %757 = vmatprep.mubr.bf16.mxu0 0
    %758 = vmatmul.mubr.bf16.gmra.mxu0 %v521
    %v759 = vpop.f32.mrf.mxu0
    %v760 = vadd.f32 0.0, %v759
    %v761 = vpop.f32.mrf.mxu0
    %v762 = vadd.f32 0.0, %v761
    %v763 = vpop.f32.mrf.mxu0
    %v764 = vadd.f32 0.0, %v763
    %v765 = vpop.f32.mrf.mxu0
    %v766 = vadd.f32 0.0, %v765
    %767 = vdwg.mxu0
    %v768 = vadd.f32 %v326, %v717
    %v769 = vadd.f32 %v328, %v719
    %v770 = vadd.f32 %v439, %v760
    %v771 = vadd.f32 %v441, %v762
    %v772 = vadd.f32 %v330, %v721
    %v773 = vadd.f32 %v332, %v723
    %v774 = vadd.f32 %v443, %v764
    %v775 = vadd.f32 %v445, %v766
    %v776 = vmul.f32 %v768, 0.5
    %v777 = vmul.f32 %v772, 0.5
    %v778 = vtanh.pop %v776
    %v779 = vtanh.pop %v777
    %v780 = vmul.f32 %v778, 0.5
    %v781 = vmul.f32 %v779, 0.5
    %v782 = vadd.f32 %v780, 0.5
    %v783 = vadd.f32 %v781, 0.5
    %v784 = vmul.f32 %v769, 0.5
    %v785 = vmul.f32 %v773, 0.5
    %v786 = vtanh.pop %v784
    %v787 = vtanh.pop %v785
    %v788 = vmul.f32 %v786, 0.5
    %v789 = vmul.f32 %v787, 0.5
    %v790 = vadd.f32 %v788, 0.5
    %v791 = vadd.f32 %v789, 0.5
    %v792 = vtanh.pop %v770
    %v793 = vtanh.pop %v774
    %v794 = vmul.f32 %v771, 0.5
    %v795 = vmul.f32 %v775, 0.5
    %v796 = vtanh.pop %v794
    %v797 = vtanh.pop %v795
    %v798 = vmul.f32 %v796, 0.5
    %v799 = vmul.f32 %v797, 0.5
    %v800 = vadd.f32 %v798, 0.5
    %v801 = vadd.f32 %v799, 0.5
    %v802 = vmul.f32 %v790, %v519
    %v803 = vmul.f32 %v791, %v520
    %v804 = vmul.f32 %v782, %v792
    %v805 = vmul.f32 %v783, %v793
    %v806 = vadd.f32 %v802, %v804
    %v807 = vadd.f32 %v803, %v805
    %v808 = vtanh.pop %v806
    %v809 = vtanh.pop %v807
    %v810 = vmul.f32 %v800, %v808
    %v811 = vmul.f32 %v801, %v809
    %v812 = vpack.c.bf16 %v811, %v810
    %v814 = vunpack.c.l.b16 %v812
    %v815 = vunpack.c.h.b16 %v812
    %v816 = vpack.c.b16 %v814, %v814
    %v817 = vpack.c.b16 %v815, %v815
    %820 = vst [vmem:[#allocation2] sm:$0xf] %v816
    %821 = vst [vmem:[#allocation2 + $0x4] sm:$0xf] %v817
    %822 = vmatprep.subr.bf16.mxu0 %v647
    %823 = vmatpush1.bf16.msra.mxu0 %v646
    %824 = vmatprep.subr.bf16.mxu0 %v643
    %825 = vmatpush1.bf16.msra.mxu0 %v642
    %826 = vmatprep.subr.bf16.mxu0 %v639
    %827 = vmatpush1.bf16.msra.mxu0 %v638
    %828 = vmatprep.subr.bf16.mxu0 %v635
    %829 = vmatpush1.bf16.msra.mxu0 %v634
    %830 = vmatprep.subr.bf16.mxu0 %v631
    %831 = vmatpush1.bf16.msra.mxu0 %v630
    %832 = vmatprep.subr.bf16.mxu0 %v627
    %833 = vmatpush1.bf16.msra.mxu0 %v626
    %834 = vmatprep.subr.bf16.mxu0 %v623
    %835 = vmatpush1.bf16.msra.mxu0 %v622
    %836 = vmatprep.subr.bf16.mxu0 %v619
    %837 = vmatpush1.bf16.msra.mxu0 %v618
    %838 = vmatprep.subr.bf16.mxu0 0
    %839 = vmatpush2.bf16.msra.mxu0 0
    %840 = vmatprep.subr.bf16.mxu0 0
    %841 = vmatpush2.bf16.msra.mxu0 0
    %842 = vmatprep.subr.bf16.mxu0 0
    %843 = vmatpush2.bf16.msra.mxu0 0
    %844 = vmatprep.subr.bf16.mxu0 0
    %845 = vmatpush2.bf16.msra.mxu0 0
    %846 = vmatprep.subr.bf16.mxu0 0
    %847 = vmatpush2.bf16.msra.mxu0 0
    %848 = vmatprep.subr.bf16.mxu0 0
    %849 = vmatpush2.bf16.msra.mxu0 0
    %850 = vmatprep.subr.bf16.mxu0 0
    %851 = vmatpush2.bf16.msra.mxu0 0
    %852 = vmatprep.subr.bf16.mxu0 0
    %853 = vmatpush2.bf16.msra.mxu0 0
    %854 = vmatprep.mubr.bf16.mxu0 0
    %855 = vmatmul.mubr.bf16.gmra.mxu0 %v812
    %v856 = vpop.f32.mrf.mxu0
    %v857 = vadd.f32 0.0, %v856
    %v858 = vpop.f32.mrf.mxu0
    %v859 = vadd.f32 0.0, %v858
    %v860 = vpop.f32.mrf.mxu0
    %v861 = vadd.f32 0.0, %v860
    %v862 = vpop.f32.mrf.mxu0
    %v863 = vadd.f32 0.0, %v862
    %864 = vdwg.mxu0
    %865 = vmatprep.subr.bf16.mxu0 %v649
    %866 = vmatpush1.bf16.msra.mxu0 %v648
    %867 = vmatprep.subr.bf16.mxu0 %v645
    %868 = vmatpush1.bf16.msra.mxu0 %v644
    %869 = vmatprep.subr.bf16.mxu0 %v641
    %870 = vmatpush1.bf16.msra.mxu0 %v640
    %871 = vmatprep.subr.bf16.mxu0 %v637
    %872 = vmatpush1.bf16.msra.mxu0 %v636
    %873 = vmatprep.subr.bf16.mxu0 %v633
    %874 = vmatpush1.bf16.msra.mxu0 %v632
    %875 = vmatprep.subr.bf16.mxu0 %v629
    %876 = vmatpush1.bf16.msra.mxu0 %v628
    %877 = vmatprep.subr.bf16.mxu0 %v625
    %878 = vmatpush1.bf16.msra.mxu0 %v624
    %879 = vmatprep.subr.bf16.mxu0 %v621
    %880 = vmatpush1.bf16.msra.mxu0 %v620
    %881 = vmatprep.subr.bf16.mxu0 0
    %882 = vmatpush2.bf16.msra.mxu0 0
    %883 = vmatprep.subr.bf16.mxu0 0
    %884 = vmatpush2.bf16.msra.mxu0 0
    %885 = vmatprep.subr.bf16.mxu0 0
    %886 = vmatpush2.bf16.msra.mxu0 0
    %887 = vmatprep.subr.bf16.mxu0 0
    %888 = vmatpush2.bf16.msra.mxu0 0
    %889 = vmatprep.subr.bf16.mxu0 0
    %890 = vmatpush2.bf16.msra.mxu0 0
    %891 = vmatprep.subr.bf16.mxu0 0
    %892 = vmatpush2.bf16.msra.mxu0 0
    %893 = vmatprep.subr.bf16.mxu0 0
    %894 = vmatpush2.bf16.msra.mxu0 0
    %895 = vmatprep.subr.bf16.mxu0 0
    %896 = vmatpush2.bf16.msra.mxu0 0
    %897 = vmatprep.mubr.bf16.mxu0 0
    %898 = vmatmul.mubr.bf16.gmra.mxu0 %v812
    %v899 = vpop.f32.mrf.mxu0
    %v900 = vadd.f32 0.0, %v899
    %v901 = vpop.f32.mrf.mxu0
    %v902 = vadd.f32 0.0, %v901
    %v903 = vpop.f32.mrf.mxu0
    %v904 = vadd.f32 0.0, %v903
    %v905 = vpop.f32.mrf.mxu0
    %v906 = vadd.f32 0.0, %v905
    %907 = vdwg.mxu0
    %v908 = vadd.f32 %v336, %v857
    %v909 = vadd.f32 %v338, %v859
    %v910 = vadd.f32 %v449, %v900
    %v911 = vadd.f32 %v451, %v902
    %v912 = vadd.f32 %v340, %v861
    %v913 = vadd.f32 %v342, %v863
    %v914 = vadd.f32 %v453, %v904
    %v915 = vadd.f32 %v455, %v906
    %v916 = vmul.f32 %v908, 0.5
    %v917 = vmul.f32 %v912, 0.5
    %v918 = vtanh.pop %v916
    %v919 = vtanh.pop %v917
    %v920 = vmul.f32 %v918, 0.5
    %v921 = vmul.f32 %v919, 0.5
    %v922 = vadd.f32 %v920, 0.5
    %v923 = vadd.f32 %v921, 0.5
    %v924 = vmul.f32 %v909, 0.5
    %v925 = vmul.f32 %v913, 0.5
    %v926 = vtanh.pop %v924
    %v927 = vtanh.pop %v925
    %v928 = vmul.f32 %v926, 0.5
    %v929 = vmul.f32 %v927, 0.5
    %v930 = vadd.f32 %v928, 0.5
    %v931 = vadd.f32 %v929, 0.5
    %v932 = vtanh.pop %v910
    %v933 = vtanh.pop %v914
    %v934 = vmul.f32 %v911, 0.5
    %v935 = vmul.f32 %v915, 0.5
    %v936 = vtanh.pop %v934
    %v937 = vtanh.pop %v935
    %v938 = vmul.f32 %v936, 0.5
    %v939 = vmul.f32 %v937, 0.5
    %v940 = vadd.f32 %v938, 0.5
    %v941 = vadd.f32 %v939, 0.5
    %v942 = vmul.f32 %v930, %v806
    %v943 = vmul.f32 %v931, %v807
    %v944 = vmul.f32 %v922, %v932
    %v945 = vmul.f32 %v923, %v933
    %v946 = vadd.f32 %v942, %v944
    %v947 = vadd.f32 %v943, %v945
    %v948 = vtanh.pop %v946
    %v949 = vtanh.pop %v947
    %v950 = vmul.f32 %v940, %v948
    %v951 = vmul.f32 %v941, %v949
    %v952 = vpack.c.bf16 %v951, %v950
    %v954 = vunpack.c.l.b16 %v952
    %v955 = vunpack.c.h.b16 %v952
    %v956 = vpack.c.b16 %v954, %v954
    %v957 = vpack.c.b16 %v955, %v955
    %960 = vst [vmem:[#allocation2 + $0x8] sm:$0xf] %v956
    %961 = vst [vmem:[#allocation2 + $0xc] sm:$0xf] %v957
    %962 = vmatprep.subr.bf16.mxu0 %v647
    %963 = vmatpush1.bf16.msra.mxu0 %v646
    %964 = vmatprep.subr.bf16.mxu0 %v643
    %965 = vmatpush1.bf16.msra.mxu0 %v642
    %966 = vmatprep.subr.bf16.mxu0 %v639
    %967 = vmatpush1.bf16.msra.mxu0 %v638
    %968 = vmatprep.subr.bf16.mxu0 %v635
    %969 = vmatpush1.bf16.msra.mxu0 %v634
    %970 = vmatprep.subr.bf16.mxu0 %v631
    %971 = vmatpush1.bf16.msra.mxu0 %v630
    %972 = vmatprep.subr.bf16.mxu0 %v627
    %973 = vmatpush1.bf16.msra.mxu0 %v626
    %974 = vmatprep.subr.bf16.mxu0 %v623
    %975 = vmatpush1.bf16.msra.mxu0 %v622
    %976 = vmatprep.subr.bf16.mxu0 %v619
    %977 = vmatpush1.bf16.msra.mxu0 %v618
    %978 = vmatprep.subr.bf16.mxu0 0
    %979 = vmatpush2.bf16.msra.mxu0 0
    %980 = vmatprep.subr.bf16.mxu0 0
    %981 = vmatpush2.bf16.msra.mxu0 0
    %982 = vmatprep.subr.bf16.mxu0 0
    %983 = vmatpush2.bf16.msra.mxu0 0
    %984 = vmatprep.subr.bf16.mxu0 0
    %985 = vmatpush2.bf16.msra.mxu0 0
    %986 = vmatprep.subr.bf16.mxu0 0
    %987 = vmatpush2.bf16.msra.mxu0 0
    %988 = vmatprep.subr.bf16.mxu0 0
    %989 = vmatpush2.bf16.msra.mxu0 0
    %990 = vmatprep.subr.bf16.mxu0 0
    %991 = vmatpush2.bf16.msra.mxu0 0
    %992 = vmatprep.subr.bf16.mxu0 0
    %993 = vmatpush2.bf16.msra.mxu0 0
    %994 = vmatprep.mubr.bf16.mxu0 0
    %995 = vmatmul.mubr.bf16.gmra.mxu0 %v952
    %v996 = vpop.f32.mrf.mxu0
    %v997 = vadd.f32 0.0, %v996
    %v998 = vpop.f32.mrf.mxu0
    %v999 = vadd.f32 0.0, %v998
    %v1000 = vpop.f32.mrf.mxu0
    %v1001 = vadd.f32 0.0, %v1000
    %v1002 = vpop.f32.mrf.mxu0
    %v1003 = vadd.f32 0.0, %v1002
    %1004 = vdwg.mxu0
    %1005 = vmatprep.subr.bf16.mxu0 %v649
    %1006 = vmatpush1.bf16.msra.mxu0 %v648
    %1007 = vmatprep.subr.bf16.mxu0 %v645
    %1008 = vmatpush1.bf16.msra.mxu0 %v644
    %1009 = vmatprep.subr.bf16.mxu0 %v641
    %1010 = vmatpush1.bf16.msra.mxu0 %v640
    %1011 = vmatprep.subr.bf16.mxu0 %v637
    %1012 = vmatpush1.bf16.msra.mxu0 %v636
    %1013 = vmatprep.subr.bf16.mxu0 %v633
    %1014 = vmatpush1.bf16.msra.mxu0 %v632
    %1015 = vmatprep.subr.bf16.mxu0 %v629
    %1016 = vmatpush1.bf16.msra.mxu0 %v628
    %1017 = vmatprep.subr.bf16.mxu0 %v625
    %1018 = vmatpush1.bf16.msra.mxu0 %v624
    %1019 = vmatprep.subr.bf16.mxu0 %v621
    %1020 = vmatpush1.bf16.msra.mxu0 %v620
    %1021 = vmatprep.subr.bf16.mxu0 0
    %1022 = vmatpush2.bf16.msra.mxu0 0
    %1023 = vmatprep.subr.bf16.mxu0 0
    %1024 = vmatpush2.bf16.msra.mxu0 0
    %1025 = vmatprep.subr.bf16.mxu0 0
    %1026 = vmatpush2.bf16.msra.mxu0 0
    %1027 = vmatprep.subr.bf16.mxu0 0
    %1028 = vmatpush2.bf16.msra.mxu0 0
    %1029 = vmatprep.subr.bf16.mxu0 0
    %1030 = vmatpush2.bf16.msra.mxu0 0
    %1031 = vmatprep.subr.bf16.mxu0 0
    %1032 = vmatpush2.bf16.msra.mxu0 0
    %1033 = vmatprep.subr.bf16.mxu0 0
    %1034 = vmatpush2.bf16.msra.mxu0 0
    %1035 = vmatprep.subr.bf16.mxu0 0
    %1036 = vmatpush2.bf16.msra.mxu0 0
    %1037 = vmatprep.mubr.bf16.mxu0 0
    %1038 = vmatmul.mubr.bf16.gmra.mxu0 %v952
    %v1039 = vpop.f32.mrf.mxu0
    %v1040 = vadd.f32 0.0, %v1039
    %v1041 = vpop.f32.mrf.mxu0
    %v1042 = vadd.f32 0.0, %v1041
    %v1043 = vpop.f32.mrf.mxu0
    %v1044 = vadd.f32 0.0, %v1043
    %v1045 = vpop.f32.mrf.mxu0
    %v1046 = vadd.f32 0.0, %v1045
    %1047 = vdwg.mxu0
    %v1048 = vadd.f32 %v346, %v997
    %v1049 = vadd.f32 %v348, %v999
    %v1050 = vadd.f32 %v459, %v1040
    %v1051 = vadd.f32 %v461, %v1042
    %v1052 = vadd.f32 %v350, %v1001
    %v1053 = vadd.f32 %v352, %v1003
    %v1054 = vadd.f32 %v463, %v1044
    %v1055 = vadd.f32 %v465, %v1046
    %v1056 = vmul.f32 %v1048, 0.5
    %v1057 = vmul.f32 %v1052, 0.5
    %v1058 = vtanh.pop %v1056
    %v1059 = vtanh.pop %v1057
    %v1060 = vmul.f32 %v1058, 0.5
    %v1061 = vmul.f32 %v1059, 0.5
    %v1062 = vadd.f32 %v1060, 0.5
    %v1063 = vadd.f32 %v1061, 0.5
    %v1064 = vmul.f32 %v1049, 0.5
    %v1065 = vmul.f32 %v1053, 0.5
    %v1066 = vtanh.pop %v1064
    %v1067 = vtanh.pop %v1065
    %v1068 = vmul.f32 %v1066, 0.5
    %v1069 = vmul.f32 %v1067, 0.5
    %v1070 = vadd.f32 %v1068, 0.5
    %v1071 = vadd.f32 %v1069, 0.5
    %v1072 = vtanh.pop %v1050
    %v1073 = vtanh.pop %v1054
    %v1074 = vmul.f32 %v1051, 0.5
    %v1075 = vmul.f32 %v1055, 0.5
    %v1076 = vtanh.pop %v1074
    %v1077 = vtanh.pop %v1075
    %v1078 = vmul.f32 %v1076, 0.5
    %v1079 = vmul.f32 %v1077, 0.5
    %v1080 = vadd.f32 %v1078, 0.5
    %v1081 = vadd.f32 %v1079, 0.5
    %v1082 = vmul.f32 %v1070, %v946
    %v1083 = vmul.f32 %v1071, %v947
    %v1084 = vmul.f32 %v1062, %v1072
    %v1085 = vmul.f32 %v1063, %v1073
    %v1086 = vadd.f32 %v1082, %v1084
    %v1087 = vadd.f32 %v1083, %v1085
    %v1088 = vtanh.pop %v1086
    %v1089 = vtanh.pop %v1087
    %v1090 = vmul.f32 %v1080, %v1088
    %v1091 = vmul.f32 %v1081, %v1089
    %v1092 = vpack.c.bf16 %v1091, %v1090
    %v1094 = vunpack.c.l.b16 %v1092
    %v1095 = vunpack.c.h.b16 %v1092
    %v1096 = vpack.c.b16 %v1094, %v1094
    %v1097 = vpack.c.b16 %v1095, %v1095
    %1100 = vst [vmem:[#allocation2 + $0x10] sm:$0xf] %v1096
    %1101 = vst [vmem:[#allocation2 + $0x14] sm:$0xf] %v1097
    %1102 = vmatprep.subr.bf16.mxu0 %v647
    %1103 = vmatpush1.bf16.msra.mxu0 %v646
    %1104 = vmatprep.subr.bf16.mxu0 %v643
    %1105 = vmatpush1.bf16.msra.mxu0 %v642
    %1106 = vmatprep.subr.bf16.mxu0 %v639
    %1107 = vmatpush1.bf16.msra.mxu0 %v638
    %1108 = vmatprep.subr.bf16.mxu0 %v635
    %1109 = vmatpush1.bf16.msra.mxu0 %v634
    %1110 = vmatprep.subr.bf16.mxu0 %v631
    %1111 = vmatpush1.bf16.msra.mxu0 %v630
    %1112 = vmatprep.subr.bf16.mxu0 %v627
    %1113 = vmatpush1.bf16.msra.mxu0 %v626
    %1114 = vmatprep.subr.bf16.mxu0 %v623
    %1115 = vmatpush1.bf16.msra.mxu0 %v622
    %1116 = vmatprep.subr.bf16.mxu0 %v619
    %1117 = vmatpush1.bf16.msra.mxu0 %v618
    %1118 = vmatprep.subr.bf16.mxu0 0
    %1119 = vmatpush2.bf16.msra.mxu0 0
    %1120 = vmatprep.subr.bf16.mxu0 0
    %1121 = vmatpush2.bf16.msra.mxu0 0
    %1122 = vmatprep.subr.bf16.mxu0 0
    %1123 = vmatpush2.bf16.msra.mxu0 0
    %1124 = vmatprep.subr.bf16.mxu0 0
    %1125 = vmatpush2.bf16.msra.mxu0 0
    %1126 = vmatprep.subr.bf16.mxu0 0
    %1127 = vmatpush2.bf16.msra.mxu0 0
    %1128 = vmatprep.subr.bf16.mxu0 0
    %1129 = vmatpush2.bf16.msra.mxu0 0
    %1130 = vmatprep.subr.bf16.mxu0 0
    %1131 = vmatpush2.bf16.msra.mxu0 0
    %1132 = vmatprep.subr.bf16.mxu0 0
    %1133 = vmatpush2.bf16.msra.mxu0 0
    %1134 = vmatprep.mubr.bf16.mxu0 0
    %1135 = vmatmul.mubr.bf16.gmra.mxu0 %v1092
    %v1136 = vpop.f32.mrf.mxu0
    %v1137 = vadd.f32 0.0, %v1136
    %v1138 = vpop.f32.mrf.mxu0
    %v1139 = vadd.f32 0.0, %v1138
    %v1140 = vpop.f32.mrf.mxu0
    %v1141 = vadd.f32 0.0, %v1140
    %v1142 = vpop.f32.mrf.mxu0
    %v1143 = vadd.f32 0.0, %v1142
    %1144 = vdwg.mxu0
    %1145 = vmatprep.subr.bf16.mxu0 %v649
    %1146 = vmatpush1.bf16.msra.mxu0 %v648
    %1147 = vmatprep.subr.bf16.mxu0 %v645
    %1148 = vmatpush1.bf16.msra.mxu0 %v644
    %1149 = vmatprep.subr.bf16.mxu0 %v641
    %1150 = vmatpush1.bf16.msra.mxu0 %v640
    %1151 = vmatprep.subr.bf16.mxu0 %v637
    %1152 = vmatpush1.bf16.msra.mxu0 %v636
    %1153 = vmatprep.subr.bf16.mxu0 %v633
    %1154 = vmatpush1.bf16.msra.mxu0 %v632
    %1155 = vmatprep.subr.bf16.mxu0 %v629
    %1156 = vmatpush1.bf16.msra.mxu0 %v628
    %1157 = vmatprep.subr.bf16.mxu0 %v625
    %1158 = vmatpush1.bf16.msra.mxu0 %v624
    %1159 = vmatprep.subr.bf16.mxu0 %v621
    %1160 = vmatpush1.bf16.msra.mxu0 %v620
    %1161 = vmatprep.subr.bf16.mxu0 0
    %1162 = vmatpush2.bf16.msra.mxu0 0
    %1163 = vmatprep.subr.bf16.mxu0 0
    %1164 = vmatpush2.bf16.msra.mxu0 0
    %1165 = vmatprep.subr.bf16.mxu0 0
    %1166 = vmatpush2.bf16.msra.mxu0 0
    %1167 = vmatprep.subr.bf16.mxu0 0
    %1168 = vmatpush2.bf16.msra.mxu0 0
    %1169 = vmatprep.subr.bf16.mxu0 0
    %1170 = vmatpush2.bf16.msra.mxu0 0
    %1171 = vmatprep.subr.bf16.mxu0 0
    %1172 = vmatpush2.bf16.msra.mxu0 0
    %1173 = vmatprep.subr.bf16.mxu0 0
    %1174 = vmatpush2.bf16.msra.mxu0 0
    %1175 = vmatprep.subr.bf16.mxu0 0
    %1176 = vmatpush2.bf16.msra.mxu0 0
    %1177 = vmatprep.mubr.bf16.mxu0 0
    %1178 = vmatmul.mubr.bf16.gmra.mxu0 %v1092
    %v1179 = vpop.f32.mrf.mxu0
    %v1180 = vadd.f32 0.0, %v1179
    %v1181 = vpop.f32.mrf.mxu0
    %v1182 = vadd.f32 0.0, %v1181
    %v1183 = vpop.f32.mrf.mxu0
    %v1184 = vadd.f32 0.0, %v1183
    %v1185 = vpop.f32.mrf.mxu0
    %v1186 = vadd.f32 0.0, %v1185
    %1187 = vdwg.mxu0
    %v1188 = vadd.f32 %v356, %v1137
    %v1189 = vadd.f32 %v358, %v1139
    %v1190 = vadd.f32 %v469, %v1180
    %v1191 = vadd.f32 %v471, %v1182
    %v1192 = vadd.f32 %v360, %v1141
    %v1193 = vadd.f32 %v362, %v1143
    %v1194 = vadd.f32 %v473, %v1184
    %v1195 = vadd.f32 %v475, %v1186
    %v1196 = vmul.f32 %v1188, 0.5
    %v1197 = vmul.f32 %v1192, 0.5
    %v1198 = vtanh.pop %v1196
    %v1199 = vtanh.pop %v1197
    %v1200 = vmul.f32 %v1198, 0.5
    %v1201 = vmul.f32 %v1199, 0.5
    %v1202 = vadd.f32 %v1200, 0.5
    %v1203 = vadd.f32 %v1201, 0.5
    %v1204 = vmul.f32 %v1189, 0.5
    %v1205 = vmul.f32 %v1193, 0.5
    %v1206 = vtanh.pop %v1204
    %v1207 = vtanh.pop %v1205
    %v1208 = vmul.f32 %v1206, 0.5
    %v1209 = vmul.f32 %v1207, 0.5
    %v1210 = vadd.f32 %v1208, 0.5
    %v1211 = vadd.f32 %v1209, 0.5
    %v1212 = vtanh.pop %v1190
    %v1213 = vtanh.pop %v1194
    %v1214 = vmul.f32 %v1191, 0.5
    %v1215 = vmul.f32 %v1195, 0.5
    %v1216 = vtanh.pop %v1214
    %v1217 = vtanh.pop %v1215
    %v1218 = vmul.f32 %v1216, 0.5
    %v1219 = vmul.f32 %v1217, 0.5
    %v1220 = vadd.f32 %v1218, 0.5
    %v1221 = vadd.f32 %v1219, 0.5
    %v1222 = vmul.f32 %v1210, %v1086
    %v1223 = vmul.f32 %v1211, %v1087
    %v1224 = vmul.f32 %v1202, %v1212
    %v1225 = vmul.f32 %v1203, %v1213
    %v1226 = vadd.f32 %v1222, %v1224
    %v1227 = vadd.f32 %v1223, %v1225
    %v1228 = vtanh.pop %v1226
    %v1229 = vtanh.pop %v1227
    %v1230 = vmul.f32 %v1220, %v1228
    %v1231 = vmul.f32 %v1221, %v1229
    %v1232 = vpack.c.bf16 %v1231, %v1230
    %v1234 = vunpack.c.l.b16 %v1232
    %v1235 = vunpack.c.h.b16 %v1232
    %v1236 = vpack.c.b16 %v1234, %v1234
    %v1237 = vpack.c.b16 %v1235, %v1235
    %1240 = vst [vmem:[#allocation2 + $0x18] sm:$0xf] %v1236
    %1241 = vst [vmem:[#allocation2 + $0x1c] sm:$0xf] %v1237
    %1242 = vmatprep.subr.bf16.mxu0 %v647
    %1243 = vmatpush1.bf16.msra.mxu0 %v646
    %1244 = vmatprep.subr.bf16.mxu0 %v643
    %1245 = vmatpush1.bf16.msra.mxu0 %v642
    %1246 = vmatprep.subr.bf16.mxu0 %v639
    %1247 = vmatpush1.bf16.msra.mxu0 %v638
    %1248 = vmatprep.subr.bf16.mxu0 %v635
    %1249 = vmatpush1.bf16.msra.mxu0 %v634
    %1250 = vmatprep.subr.bf16.mxu0 %v631
    %1251 = vmatpush1.bf16.msra.mxu0 %v630
    %1252 = vmatprep.subr.bf16.mxu0 %v627
    %1253 = vmatpush1.bf16.msra.mxu0 %v626
    %1254 = vmatprep.subr.bf16.mxu0 %v623
    %1255 = vmatpush1.bf16.msra.mxu0 %v622
    %1256 = vmatprep.subr.bf16.mxu0 %v619
    %1257 = vmatpush1.bf16.msra.mxu0 %v618
    %1258 = vmatprep.subr.bf16.mxu0 0
    %1259 = vmatpush2.bf16.msra.mxu0 0
    %1260 = vmatprep.subr.bf16.mxu0 0
    %1261 = vmatpush2.bf16.msra.mxu0 0
    %1262 = vmatprep.subr.bf16.mxu0 0
    %1263 = vmatpush2.bf16.msra.mxu0 0
    %1264 = vmatprep.subr.bf16.mxu0 0
    %1265 = vmatpush2.bf16.msra.mxu0 0
    %1266 = vmatprep.subr.bf16.mxu0 0
    %1267 = vmatpush2.bf16.msra.mxu0 0
    %1268 = vmatprep.subr.bf16.mxu0 0
    %1269 = vmatpush2.bf16.msra.mxu0 0
    %1270 = vmatprep.subr.bf16.mxu0 0
    %1271 = vmatpush2.bf16.msra.mxu0 0
    %1272 = vmatprep.subr.bf16.mxu0 0
    %1273 = vmatpush2.bf16.msra.mxu0 0
    %1274 = vmatprep.mubr.bf16.mxu0 0
    %1275 = vmatmul.mubr.bf16.gmra.mxu0 %v1232
    %v1276 = vpop.f32.mrf.mxu0
    %v1277 = vadd.f32 0.0, %v1276
    %v1278 = vpop.f32.mrf.mxu0
    %v1279 = vadd.f32 0.0, %v1278
    %v1280 = vpop.f32.mrf.mxu0
    %v1281 = vadd.f32 0.0, %v1280
    %v1282 = vpop.f32.mrf.mxu0
    %v1283 = vadd.f32 0.0, %v1282
    %1284 = vdwg.mxu0
    %1285 = vmatprep.subr.bf16.mxu0 %v649
    %1286 = vmatpush1.bf16.msra.mxu0 %v648
    %1287 = vmatprep.subr.bf16.mxu0 %v645
    %1288 = vmatpush1.bf16.msra.mxu0 %v644
    %1289 = vmatprep.subr.bf16.mxu0 %v641
    %1290 = vmatpush1.bf16.msra.mxu0 %v640
    %1291 = vmatprep.subr.bf16.mxu0 %v637
    %1292 = vmatpush1.bf16.msra.mxu0 %v636
    %1293 = vmatprep.subr.bf16.mxu0 %v633
    %1294 = vmatpush1.bf16.msra.mxu0 %v632
    %1295 = vmatprep.subr.bf16.mxu0 %v629
    %1296 = vmatpush1.bf16.msra.mxu0 %v628
    %1297 = vmatprep.subr.bf16.mxu0 %v625
    %1298 = vmatpush1.bf16.msra.mxu0 %v624
    %1299 = vmatprep.subr.bf16.mxu0 %v621
    %1300 = vmatpush1.bf16.msra.mxu0 %v620
    %1301 = vmatprep.subr.bf16.mxu0 0
    %1302 = vmatpush2.bf16.msra.mxu0 0
    %1303 = vmatprep.subr.bf16.mxu0 0
    %1304 = vmatpush2.bf16.msra.mxu0 0
    %1305 = vmatprep.subr.bf16.mxu0 0
    %1306 = vmatpush2.bf16.msra.mxu0 0
    %1307 = vmatprep.subr.bf16.mxu0 0
    %1308 = vmatpush2.bf16.msra.mxu0 0
    %1309 = vmatprep.subr.bf16.mxu0 0
    %1310 = vmatpush2.bf16.msra.mxu0 0
    %1311 = vmatprep.subr.bf16.mxu0 0
    %1312 = vmatpush2.bf16.msra.mxu0 0
    %1313 = vmatprep.subr.bf16.mxu0 0
    %1314 = vmatpush2.bf16.msra.mxu0 0
    %1315 = vmatprep.subr.bf16.mxu0 0
    %1316 = vmatpush2.bf16.msra.mxu0 0
    %1317 = vmatprep.mubr.bf16.mxu0 0
    %1318 = vmatmul.mubr.bf16.gmra.mxu0 %v1232
    %v1319 = vpop.f32.mrf.mxu0
    %v1320 = vadd.f32 0.0, %v1319
    %v1321 = vpop.f32.mrf.mxu0
    %v1322 = vadd.f32 0.0, %v1321
    %v1323 = vpop.f32.mrf.mxu0
    %v1324 = vadd.f32 0.0, %v1323
    %v1325 = vpop.f32.mrf.mxu0
    %v1326 = vadd.f32 0.0, %v1325
    %1327 = vdwg.mxu0
    %v1328 = vadd.f32 %v366, %v1277
    %v1329 = vadd.f32 %v368, %v1279
    %v1330 = vadd.f32 %v479, %v1320
    %v1331 = vadd.f32 %v481, %v1322
    %v1332 = vadd.f32 %v370, %v1281
    %v1333 = vadd.f32 %v372, %v1283
    %v1334 = vadd.f32 %v483, %v1324
    %v1335 = vadd.f32 %v485, %v1326
    %v1336 = vmul.f32 %v1328, 0.5
    %v1337 = vmul.f32 %v1332, 0.5
    %v1338 = vtanh.pop %v1336
    %v1339 = vtanh.pop %v1337
    %v1340 = vmul.f32 %v1338, 0.5
    %v1341 = vmul.f32 %v1339, 0.5
    %v1342 = vadd.f32 %v1340, 0.5
    %v1343 = vadd.f32 %v1341, 0.5
    %v1344 = vmul.f32 %v1329, 0.5
    %v1345 = vmul.f32 %v1333, 0.5
    %v1346 = vtanh.pop %v1344
    %v1347 = vtanh.pop %v1345
    %v1348 = vmul.f32 %v1346, 0.5
    %v1349 = vmul.f32 %v1347, 0.5
    %v1350 = vadd.f32 %v1348, 0.5
    %v1351 = vadd.f32 %v1349, 0.5
    %v1352 = vtanh.pop %v1330
    %v1353 = vtanh.pop %v1334
    %v1354 = vmul.f32 %v1331, 0.5
    %v1355 = vmul.f32 %v1335, 0.5
    %v1356 = vtanh.pop %v1354
    %v1357 = vtanh.pop %v1355
    %v1358 = vmul.f32 %v1356, 0.5
    %v1359 = vmul.f32 %v1357, 0.5
    %v1360 = vadd.f32 %v1358, 0.5
    %v1361 = vadd.f32 %v1359, 0.5
    %v1362 = vmul.f32 %v1350, %v1226
    %v1363 = vmul.f32 %v1351, %v1227
    %v1364 = vmul.f32 %v1342, %v1352
    %v1365 = vmul.f32 %v1343, %v1353
    %v1366 = vadd.f32 %v1362, %v1364
    %v1367 = vadd.f32 %v1363, %v1365
    %v1368 = vtanh.pop %v1366
    %v1369 = vtanh.pop %v1367
    %v1370 = vmul.f32 %v1360, %v1368
    %v1371 = vmul.f32 %v1361, %v1369
    %v1372 = vpack.c.bf16 %v1371, %v1370
    %v1374 = vunpack.c.l.b16 %v1372
    %v1375 = vunpack.c.h.b16 %v1372
    %v1376 = vpack.c.b16 %v1374, %v1374
    %v1377 = vpack.c.b16 %v1375, %v1375
    %1380 = vst [vmem:[#allocation2 + $0x20] sm:$0xf] %v1376
    %1381 = vst [vmem:[#allocation2 + $0x24] sm:$0xf] %v1377
    %1382 = vmatprep.subr.bf16.mxu0 %v647
    %1383 = vmatpush1.bf16.msra.mxu0 %v646
    %1384 = vmatprep.subr.bf16.mxu0 %v643
    %1385 = vmatpush1.bf16.msra.mxu0 %v642
    %1386 = vmatprep.subr.bf16.mxu0 %v639
    %1387 = vmatpush1.bf16.msra.mxu0 %v638
    %1388 = vmatprep.subr.bf16.mxu0 %v635
    %1389 = vmatpush1.bf16.msra.mxu0 %v634
    %1390 = vmatprep.subr.bf16.mxu0 %v631
    %1391 = vmatpush1.bf16.msra.mxu0 %v630
    %1392 = vmatprep.subr.bf16.mxu0 %v627
    %1393 = vmatpush1.bf16.msra.mxu0 %v626
    %1394 = vmatprep.subr.bf16.mxu0 %v623
    %1395 = vmatpush1.bf16.msra.mxu0 %v622
    %1396 = vmatprep.subr.bf16.mxu0 %v619
    %1397 = vmatpush1.bf16.msra.mxu0 %v618
    %1398 = vmatprep.subr.bf16.mxu0 0
    %1399 = vmatpush2.bf16.msra.mxu0 0
    %1400 = vmatprep.subr.bf16.mxu0 0
    %1401 = vmatpush2.bf16.msra.mxu0 0
    %1402 = vmatprep.subr.bf16.mxu0 0
    %1403 = vmatpush2.bf16.msra.mxu0 0
    %1404 = vmatprep.subr.bf16.mxu0 0
    %1405 = vmatpush2.bf16.msra.mxu0 0
    %1406 = vmatprep.subr.bf16.mxu0 0
    %1407 = vmatpush2.bf16.msra.mxu0 0
    %1408 = vmatprep.subr.bf16.mxu0 0
    %1409 = vmatpush2.bf16.msra.mxu0 0
    %1410 = vmatprep.subr.bf16.mxu0 0
    %1411 = vmatpush2.bf16.msra.mxu0 0
    %1412 = vmatprep.subr.bf16.mxu0 0
    %1413 = vmatpush2.bf16.msra.mxu0 0
    %1414 = vmatprep.mubr.bf16.mxu0 0
    %1415 = vmatmul.mubr.bf16.gmra.mxu0 %v1372
    %v1416 = vpop.f32.mrf.mxu0
    %v1417 = vadd.f32 0.0, %v1416
    %v1418 = vpop.f32.mrf.mxu0
    %v1419 = vadd.f32 0.0, %v1418
    %v1420 = vpop.f32.mrf.mxu0
    %v1421 = vadd.f32 0.0, %v1420
    %v1422 = vpop.f32.mrf.mxu0
    %v1423 = vadd.f32 0.0, %v1422
    %1424 = vdwg.mxu0
    %1425 = vmatprep.subr.bf16.mxu0 %v649
    %1426 = vmatpush1.bf16.msra.mxu0 %v648
    %1427 = vmatprep.subr.bf16.mxu0 %v645
    %1428 = vmatpush1.bf16.msra.mxu0 %v644
    %1429 = vmatprep.subr.bf16.mxu0 %v641
    %1430 = vmatpush1.bf16.msra.mxu0 %v640
    %1431 = vmatprep.subr.bf16.mxu0 %v637
    %1432 = vmatpush1.bf16.msra.mxu0 %v636
    %1433 = vmatprep.subr.bf16.mxu0 %v633
    %1434 = vmatpush1.bf16.msra.mxu0 %v632
    %1435 = vmatprep.subr.bf16.mxu0 %v629
    %1436 = vmatpush1.bf16.msra.mxu0 %v628
    %1437 = vmatprep.subr.bf16.mxu0 %v625
    %1438 = vmatpush1.bf16.msra.mxu0 %v624
    %1439 = vmatprep.subr.bf16.mxu0 %v621
    %1440 = vmatpush1.bf16.msra.mxu0 %v620
    %1441 = vmatprep.subr.bf16.mxu0 0
    %1442 = vmatpush2.bf16.msra.mxu0 0
    %1443 = vmatprep.subr.bf16.mxu0 0
    %1444 = vmatpush2.bf16.msra.mxu0 0
    %1445 = vmatprep.subr.bf16.mxu0 0
    %1446 = vmatpush2.bf16.msra.mxu0 0
    %1447 = vmatprep.subr.bf16.mxu0 0
    %1448 = vmatpush2.bf16.msra.mxu0 0
    %1449 = vmatprep.subr.bf16.mxu0 0
    %1450 = vmatpush2.bf16.msra.mxu0 0
    %1451 = vmatprep.subr.bf16.mxu0 0
    %1452 = vmatpush2.bf16.msra.mxu0 0
    %1453 = vmatprep.subr.bf16.mxu0 0
    %1454 = vmatpush2.bf16.msra.mxu0 0
    %1455 = vmatprep.subr.bf16.mxu0 0
    %1456 = vmatpush2.bf16.msra.mxu0 0
    %1457 = vmatprep.mubr.bf16.mxu0 0
    %1458 = vmatmul.mubr.bf16.gmra.mxu0 %v1372
    %v1459 = vpop.f32.mrf.mxu0
    %v1460 = vadd.f32 0.0, %v1459
    %v1461 = vpop.f32.mrf.mxu0
    %v1462 = vadd.f32 0.0, %v1461
    %v1463 = vpop.f32.mrf.mxu0
    %v1464 = vadd.f32 0.0, %v1463
    %v1465 = vpop.f32.mrf.mxu0
    %v1466 = vadd.f32 0.0, %v1465
    %1467 = vdwg.mxu0
    %v1468 = vadd.f32 %v376, %v1417
    %v1469 = vadd.f32 %v378, %v1419
    %v1470 = vadd.f32 %v489, %v1460
    %v1471 = vadd.f32 %v491, %v1462
    %v1472 = vadd.f32 %v380, %v1421
    %v1473 = vadd.f32 %v382, %v1423
    %v1474 = vadd.f32 %v493, %v1464
    %v1475 = vadd.f32 %v495, %v1466
    %v1476 = vmul.f32 %v1468, 0.5
    %v1477 = vmul.f32 %v1472, 0.5
    %v1478 = vtanh.pop %v1476
    %v1479 = vtanh.pop %v1477
    %v1480 = vmul.f32 %v1478, 0.5
    %v1481 = vmul.f32 %v1479, 0.5
    %v1482 = vadd.f32 %v1480, 0.5
    %v1483 = vadd.f32 %v1481, 0.5
    %v1484 = vmul.f32 %v1469, 0.5
    %v1485 = vmul.f32 %v1473, 0.5
    %v1486 = vtanh.pop %v1484
    %v1487 = vtanh.pop %v1485
    %v1488 = vmul.f32 %v1486, 0.5
    %v1489 = vmul.f32 %v1487, 0.5
    %v1490 = vadd.f32 %v1488, 0.5
    %v1491 = vadd.f32 %v1489, 0.5
    %v1492 = vtanh.pop %v1470
    %v1493 = vtanh.pop %v1474
    %v1494 = vmul.f32 %v1471, 0.5
    %v1495 = vmul.f32 %v1475, 0.5
    %v1496 = vtanh.pop %v1494
    %v1497 = vtanh.pop %v1495
    %v1498 = vmul.f32 %v1496, 0.5
    %v1499 = vmul.f32 %v1497, 0.5
    %v1500 = vadd.f32 %v1498, 0.5
    %v1501 = vadd.f32 %v1499, 0.5
    %v1502 = vmul.f32 %v1490, %v1366
    %v1503 = vmul.f32 %v1491, %v1367
    %v1504 = vmul.f32 %v1482, %v1492
    %v1505 = vmul.f32 %v1483, %v1493
    %v1506 = vadd.f32 %v1502, %v1504
    %v1507 = vadd.f32 %v1503, %v1505
    %v1508 = vtanh.pop %v1506
    %v1509 = vtanh.pop %v1507
    %v1510 = vmul.f32 %v1500, %v1508
    %v1511 = vmul.f32 %v1501, %v1509
    %v1512 = vpack.c.bf16 %v1511, %v1510
    %v1514 = vunpack.c.l.b16 %v1512
    %v1515 = vunpack.c.h.b16 %v1512
    %v1516 = vpack.c.b16 %v1514, %v1514
    %v1517 = vpack.c.b16 %v1515, %v1515
    %1520 = vst [vmem:[#allocation2 + $0x28] sm:$0xf] %v1516
    %1521 = vst [vmem:[#allocation2 + $0x2c] sm:$0xf] %v1517
    %1522 = vmatprep.subr.bf16.mxu0 %v647
    %1523 = vmatpush1.bf16.msra.mxu0 %v646
    %1524 = vmatprep.subr.bf16.mxu0 %v643
    %1525 = vmatpush1.bf16.msra.mxu0 %v642
    %1526 = vmatprep.subr.bf16.mxu0 %v639
    %1527 = vmatpush1.bf16.msra.mxu0 %v638
    %1528 = vmatprep.subr.bf16.mxu0 %v635
    %1529 = vmatpush1.bf16.msra.mxu0 %v634
    %1530 = vmatprep.subr.bf16.mxu0 %v631
    %1531 = vmatpush1.bf16.msra.mxu0 %v630
    %1532 = vmatprep.subr.bf16.mxu0 %v627
    %1533 = vmatpush1.bf16.msra.mxu0 %v626
    %1534 = vmatprep.subr.bf16.mxu0 %v623
    %1535 = vmatpush1.bf16.msra.mxu0 %v622
    %1536 = vmatprep.subr.bf16.mxu0 %v619
    %1537 = vmatpush1.bf16.msra.mxu0 %v618
    %1538 = vmatprep.subr.bf16.mxu0 0
    %1539 = vmatpush2.bf16.msra.mxu0 0
    %1540 = vmatprep.subr.bf16.mxu0 0
    %1541 = vmatpush2.bf16.msra.mxu0 0
    %1542 = vmatprep.subr.bf16.mxu0 0
    %1543 = vmatpush2.bf16.msra.mxu0 0
    %1544 = vmatprep.subr.bf16.mxu0 0
    %1545 = vmatpush2.bf16.msra.mxu0 0
    %1546 = vmatprep.subr.bf16.mxu0 0
    %1547 = vmatpush2.bf16.msra.mxu0 0
    %1548 = vmatprep.subr.bf16.mxu0 0
    %1549 = vmatpush2.bf16.msra.mxu0 0
    %1550 = vmatprep.subr.bf16.mxu0 0
    %1551 = vmatpush2.bf16.msra.mxu0 0
    %1552 = vmatprep.subr.bf16.mxu0 0
    %1553 = vmatpush2.bf16.msra.mxu0 0
    %1554 = vmatprep.mubr.bf16.mxu0 0
    %1555 = vmatmul.mubr.bf16.gmra.mxu0 %v1512
    %v1556 = vpop.f32.mrf.mxu0
    %v1557 = vadd.f32 0.0, %v1556
    %v1558 = vpop.f32.mrf.mxu0
    %v1559 = vadd.f32 0.0, %v1558
    %v1560 = vpop.f32.mrf.mxu0
    %v1561 = vadd.f32 0.0, %v1560
    %v1562 = vpop.f32.mrf.mxu0
    %v1563 = vadd.f32 0.0, %v1562
    %1564 = vdwg.mxu0
    %1565 = vmatprep.subr.bf16.mxu0 %v649
    %1566 = vmatpush1.bf16.msra.mxu0 %v648
    %1567 = vmatprep.subr.bf16.mxu0 %v645
    %1568 = vmatpush1.bf16.msra.mxu0 %v644
    %1569 = vmatprep.subr.bf16.mxu0 %v641
    %1570 = vmatpush1.bf16.msra.mxu0 %v640
    %1571 = vmatprep.subr.bf16.mxu0 %v637
    %1572 = vmatpush1.bf16.msra.mxu0 %v636
    %1573 = vmatprep.subr.bf16.mxu0 %v633
    %1574 = vmatpush1.bf16.msra.mxu0 %v632
    %1575 = vmatprep.subr.bf16.mxu0 %v629
    %1576 = vmatpush1.bf16.msra.mxu0 %v628
    %1577 = vmatprep.subr.bf16.mxu0 %v625
    %1578 = vmatpush1.bf16.msra.mxu0 %v624
    %1579 = vmatprep.subr.bf16.mxu0 %v621
    %1580 = vmatpush1.bf16.msra.mxu0 %v620
    %1581 = vmatprep.subr.bf16.mxu0 0
    %1582 = vmatpush2.bf16.msra.mxu0 0
    %1583 = vmatprep.subr.bf16.mxu0 0
    %1584 = vmatpush2.bf16.msra.mxu0 0
    %1585 = vmatprep.subr.bf16.mxu0 0
    %1586 = vmatpush2.bf16.msra.mxu0 0
    %1587 = vmatprep.subr.bf16.mxu0 0
    %1588 = vmatpush2.bf16.msra.mxu0 0
    %1589 = vmatprep.subr.bf16.mxu0 0
    %1590 = vmatpush2.bf16.msra.mxu0 0
    %1591 = vmatprep.subr.bf16.mxu0 0
    %1592 = vmatpush2.bf16.msra.mxu0 0
    %1593 = vmatprep.subr.bf16.mxu0 0
    %1594 = vmatpush2.bf16.msra.mxu0 0
    %1595 = vmatprep.subr.bf16.mxu0 0
    %1596 = vmatpush2.bf16.msra.mxu0 0
    %1597 = vmatprep.mubr.bf16.mxu0 0
    %1598 = vmatmul.mubr.bf16.gmra.mxu0 %v1512
    %v1599 = vpop.f32.mrf.mxu0
    %v1600 = vadd.f32 0.0, %v1599
    %v1601 = vpop.f32.mrf.mxu0
    %v1602 = vadd.f32 0.0, %v1601
    %v1603 = vpop.f32.mrf.mxu0
    %v1604 = vadd.f32 0.0, %v1603
    %v1605 = vpop.f32.mrf.mxu0
    %v1606 = vadd.f32 0.0, %v1605
    %1607 = vdwg.mxu0
    %v1608 = vadd.f32 %v386, %v1557
    %v1609 = vadd.f32 %v388, %v1559
    %v1610 = vadd.f32 %v499, %v1600
    %v1611 = vadd.f32 %v501, %v1602
    %v1612 = vadd.f32 %v390, %v1561
    %v1613 = vadd.f32 %v392, %v1563
    %v1614 = vadd.f32 %v503, %v1604
    %v1615 = vadd.f32 %v505, %v1606
    %v1616 = vmul.f32 %v1608, 0.5
    %v1617 = vmul.f32 %v1612, 0.5
    %v1618 = vtanh.pop %v1616
    %v1619 = vtanh.pop %v1617
    %v1620 = vmul.f32 %v1618, 0.5
    %v1621 = vmul.f32 %v1619, 0.5
    %v1622 = vadd.f32 %v1620, 0.5
    %v1623 = vadd.f32 %v1621, 0.5
    %v1624 = vmul.f32 %v1609, 0.5
    %v1625 = vmul.f32 %v1613, 0.5
    %v1626 = vtanh.pop %v1624
    %v1627 = vtanh.pop %v1625
    %v1628 = vmul.f32 %v1626, 0.5
    %v1629 = vmul.f32 %v1627, 0.5
    %v1630 = vadd.f32 %v1628, 0.5
    %v1631 = vadd.f32 %v1629, 0.5
    %v1632 = vtanh.pop %v1610
    %v1633 = vtanh.pop %v1614
    %v1634 = vmul.f32 %v1611, 0.5
    %v1635 = vmul.f32 %v1615, 0.5
    %v1636 = vtanh.pop %v1634
    %v1637 = vtanh.pop %v1635
    %v1638 = vmul.f32 %v1636, 0.5
    %v1639 = vmul.f32 %v1637, 0.5
    %v1640 = vadd.f32 %v1638, 0.5
    %v1641 = vadd.f32 %v1639, 0.5
    %v1642 = vmul.f32 %v1630, %v1506
    %v1643 = vmul.f32 %v1631, %v1507
    %v1644 = vmul.f32 %v1622, %v1632
    %v1645 = vmul.f32 %v1623, %v1633
    %v1646 = vadd.f32 %v1642, %v1644
    %v1647 = vadd.f32 %v1643, %v1645
    %v1648 = vtanh.pop %v1646
    %v1649 = vtanh.pop %v1647
    %v1650 = vmul.f32 %v1640, %v1648
    %v1651 = vmul.f32 %v1641, %v1649
    %v1652 = vpack.c.bf16 %v1651, %v1650
    %v1654 = vunpack.c.l.b16 %v1652
    %v1655 = vunpack.c.h.b16 %v1652
    %v1656 = vpack.c.b16 %v1654, %v1654
    %v1657 = vpack.c.b16 %v1655, %v1655
    %1660 = vst [vmem:[#allocation2 + $0x30] sm:$0xf] %v1656
    %1661 = vst [vmem:[#allocation2 + $0x34] sm:$0xf] %v1657
    %1662 = vmatprep.subr.bf16.mxu0 %v647
    %1663 = vmatpush1.bf16.msra.mxu0 %v646
    %1664 = vmatprep.subr.bf16.mxu0 %v643
    %1665 = vmatpush1.bf16.msra.mxu0 %v642
    %1666 = vmatprep.subr.bf16.mxu0 %v639
    %1667 = vmatpush1.bf16.msra.mxu0 %v638
    %1668 = vmatprep.subr.bf16.mxu0 %v635
    %1669 = vmatpush1.bf16.msra.mxu0 %v634
    %1670 = vmatprep.subr.bf16.mxu0 %v631
    %1671 = vmatpush1.bf16.msra.mxu0 %v630
    %1672 = vmatprep.subr.bf16.mxu0 %v627
    %1673 = vmatpush1.bf16.msra.mxu0 %v626
    %1674 = vmatprep.subr.bf16.mxu0 %v623
    %1675 = vmatpush1.bf16.msra.mxu0 %v622
    %1676 = vmatprep.subr.bf16.mxu0 %v619
    %1677 = vmatpush1.bf16.msra.mxu0 %v618
    %1678 = vmatprep.subr.bf16.mxu0 0
    %1679 = vmatpush2.bf16.msra.mxu0 0
    %1680 = vmatprep.subr.bf16.mxu0 0
    %1681 = vmatpush2.bf16.msra.mxu0 0
    %1682 = vmatprep.subr.bf16.mxu0 0
    %1683 = vmatpush2.bf16.msra.mxu0 0
    %1684 = vmatprep.subr.bf16.mxu0 0
    %1685 = vmatpush2.bf16.msra.mxu0 0
    %1686 = vmatprep.subr.bf16.mxu0 0
    %1687 = vmatpush2.bf16.msra.mxu0 0
    %1688 = vmatprep.subr.bf16.mxu0 0
    %1689 = vmatpush2.bf16.msra.mxu0 0
    %1690 = vmatprep.subr.bf16.mxu0 0
    %1691 = vmatpush2.bf16.msra.mxu0 0
    %1692 = vmatprep.subr.bf16.mxu0 0
    %1693 = vmatpush2.bf16.msra.mxu0 0
    %1694 = vmatprep.mubr.bf16.mxu0 0
    %1695 = vmatmul.mubr.bf16.gmra.mxu0 %v1652
    %v1696 = vpop.f32.mrf.mxu0
    %v1697 = vadd.f32 0.0, %v1696
    %v1698 = vpop.f32.mrf.mxu0
    %v1699 = vadd.f32 0.0, %v1698
    %v1700 = vpop.f32.mrf.mxu0
    %v1701 = vadd.f32 0.0, %v1700
    %v1702 = vpop.f32.mrf.mxu0
    %v1703 = vadd.f32 0.0, %v1702
    %1704 = vdwg.mxu0
    %1705 = vmatprep.subr.bf16.mxu0 %v649
    %1706 = vmatpush1.bf16.msra.mxu0 %v648
    %1707 = vmatprep.subr.bf16.mxu0 %v645
    %1708 = vmatpush1.bf16.msra.mxu0 %v644
    %1709 = vmatprep.subr.bf16.mxu0 %v641
    %1710 = vmatpush1.bf16.msra.mxu0 %v640
    %1711 = vmatprep.subr.bf16.mxu0 %v637
    %1712 = vmatpush1.bf16.msra.mxu0 %v636
    %1713 = vmatprep.subr.bf16.mxu0 %v633
    %1714 = vmatpush1.bf16.msra.mxu0 %v632
    %1715 = vmatprep.subr.bf16.mxu0 %v629
    %1716 = vmatpush1.bf16.msra.mxu0 %v628
    %1717 = vmatprep.subr.bf16.mxu0 %v625
    %1718 = vmatpush1.bf16.msra.mxu0 %v624
    %1719 = vmatprep.subr.bf16.mxu0 %v621
    %1720 = vmatpush1.bf16.msra.mxu0 %v620
    %1721 = vmatprep.subr.bf16.mxu0 0
    %1722 = vmatpush2.bf16.msra.mxu0 0
    %1723 = vmatprep.subr.bf16.mxu0 0
    %1724 = vmatpush2.bf16.msra.mxu0 0
    %1725 = vmatprep.subr.bf16.mxu0 0
    %1726 = vmatpush2.bf16.msra.mxu0 0
    %1727 = vmatprep.subr.bf16.mxu0 0
    %1728 = vmatpush2.bf16.msra.mxu0 0
    %1729 = vmatprep.subr.bf16.mxu0 0
    %1730 = vmatpush2.bf16.msra.mxu0 0
    %1731 = vmatprep.subr.bf16.mxu0 0
    %1732 = vmatpush2.bf16.msra.mxu0 0
    %1733 = vmatprep.subr.bf16.mxu0 0
    %1734 = vmatpush2.bf16.msra.mxu0 0
    %1735 = vmatprep.subr.bf16.mxu0 0
    %1736 = vmatpush2.bf16.msra.mxu0 0
    %1737 = vmatprep.mubr.bf16.mxu0 0
    %1738 = vmatmul.mubr.bf16.gmra.mxu0 %v1652
    %v1739 = vpop.f32.mrf.mxu0
    %v1740 = vadd.f32 0.0, %v1739
    %v1741 = vpop.f32.mrf.mxu0
    %v1742 = vadd.f32 0.0, %v1741
    %v1743 = vpop.f32.mrf.mxu0
    %v1744 = vadd.f32 0.0, %v1743
    %v1745 = vpop.f32.mrf.mxu0
    %v1746 = vadd.f32 0.0, %v1745
    %1747 = vdwg.mxu0
    %v1748 = vadd.f32 %v396, %v1697
    %v1749 = vadd.f32 %v398, %v1699
    %v1750 = vadd.f32 %v509, %v1740
    %v1751 = vadd.f32 %v511, %v1742
    %v1752 = vadd.f32 %v400, %v1701
    %v1753 = vadd.f32 %v402, %v1703
    %v1754 = vadd.f32 %v513, %v1744
    %v1755 = vadd.f32 %v515, %v1746
    %v1756 = vmul.f32 %v1748, 0.5
    %v1757 = vmul.f32 %v1752, 0.5
    %v1758 = vtanh.pop %v1756
    %v1759 = vtanh.pop %v1757
    %v1760 = vmul.f32 %v1758, 0.5
    %v1761 = vmul.f32 %v1759, 0.5
    %v1762 = vadd.f32 %v1760, 0.5
    %v1763 = vadd.f32 %v1761, 0.5
    %v1764 = vmul.f32 %v1749, 0.5
    %v1765 = vmul.f32 %v1753, 0.5
    %v1766 = vtanh.pop %v1764
    %v1767 = vtanh.pop %v1765
    %v1768 = vmul.f32 %v1766, 0.5
    %v1769 = vmul.f32 %v1767, 0.5
    %v1770 = vadd.f32 %v1768, 0.5
    %v1771 = vadd.f32 %v1769, 0.5
    %v1772 = vtanh.pop %v1750
    %v1773 = vtanh.pop %v1754
    %v1774 = vmul.f32 %v1751, 0.5
    %v1775 = vmul.f32 %v1755, 0.5
    %v1776 = vtanh.pop %v1774
    %v1777 = vtanh.pop %v1775
    %v1778 = vmul.f32 %v1776, 0.5
    %v1779 = vmul.f32 %v1777, 0.5
    %v1780 = vadd.f32 %v1778, 0.5
    %v1781 = vadd.f32 %v1779, 0.5
    %v1782 = vmul.f32 %v1770, %v1646
    %v1783 = vmul.f32 %v1771, %v1647
    %v1784 = vmul.f32 %v1762, %v1772
    %v1785 = vmul.f32 %v1763, %v1773
    %v1786 = vadd.f32 %v1782, %v1784
    %v1787 = vadd.f32 %v1783, %v1785
    %v1788 = vtanh.pop %v1786
    %v1789 = vtanh.pop %v1787
    %v1790 = vmul.f32 %v1780, %v1788
    %v1791 = vmul.f32 %v1781, %v1789
    %v1792 = vpack.c.bf16 %v1791, %v1790
    %v1794 = vunpack.c.l.b16 %v1792
    %v1795 = vunpack.c.h.b16 %v1792
    %v1796 = vpack.c.b16 %v1794, %v1794
    %v1797 = vpack.c.b16 %v1795, %v1795
    %1800 = vst [vmem:[#allocation2 + $0x38] sm:$0xf] %v1796
    %1801 = vst [vmem:[#allocation2 + $0x3c] sm:$0xf] %v1797
    %1802 = vst [vmem:[#allocation13] sm:$0xff] %v1790
    %1803 = vst [vmem:[#allocation13 + $0x8] sm:$0xff] %v1791
    %1804 = vst [vmem:[#allocation15] sm:$0xff] %v1786
    %1805 = vst [vmem:[#allocation15 + $0x8] sm:$0xff] %v1787
    %v1806 = vld [vmem:[#allocation9] sm:$0xff]
    %v1807 = vld [vmem:[#allocation9 + $0x8] sm:$0xff]
    %v1808 = vld [vmem:[#allocation9 + $0x10] sm:$0xff]
    %v1809 = vld [vmem:[#allocation9 + $0x18] sm:$0xff]
    %v1810 = vld [vmem:[#allocation9 + $0x20] sm:$0xff]
    %v1811 = vld [vmem:[#allocation9 + $0x28] sm:$0xff]
    %v1812 = vld [vmem:[#allocation9 + $0x30] sm:$0xff]
    %v1813 = vld [vmem:[#allocation9 + $0x38] sm:$0xff]
    %v1814 = vld [vmem:[#allocation9 + $0x40] sm:$0xff]
    %v1815 = vld [vmem:[#allocation9 + $0x48] sm:$0xff]
    %v1816 = vld [vmem:[#allocation9 + $0x50] sm:$0xff]
    %v1817 = vld [vmem:[#allocation9 + $0x58] sm:$0xff]
    %v1818 = vld [vmem:[#allocation9 + $0x60] sm:$0xff]
    %v1819 = vld [vmem:[#allocation9 + $0x68] sm:$0xff]
    %v1820 = vld [vmem:[#allocation9 + $0x70] sm:$0xff]
    %v1821 = vld [vmem:[#allocation9 + $0x78] sm:$0xff]
    %v1822 = vld [vmem:[#allocation9 + $0x80] sm:$0xff]
    %v1823 = vld [vmem:[#allocation9 + $0x88] sm:$0xff]
    %v1824 = vld [vmem:[#allocation9 + $0x90] sm:$0xff]
    %v1825 = vld [vmem:[#allocation9 + $0x98] sm:$0xff]
    %v1826 = vld [vmem:[#allocation9 + $0xa0] sm:$0xff]
    %v1827 = vld [vmem:[#allocation9 + $0xa8] sm:$0xff]
    %v1828 = vld [vmem:[#allocation9 + $0xb0] sm:$0xff]
    %v1829 = vld [vmem:[#allocation9 + $0xb8] sm:$0xff]
    %v1830 = vld [vmem:[#allocation9 + $0xc0] sm:$0xff]
    %v1831 = vld [vmem:[#allocation9 + $0xc8] sm:$0xff]
    %v1832 = vld [vmem:[#allocation9 + $0xd0] sm:$0xff]
    %v1833 = vld [vmem:[#allocation9 + $0xd8] sm:$0xff]
    %v1834 = vld [vmem:[#allocation9 + $0xe0] sm:$0xff]
    %v1835 = vld [vmem:[#allocation9 + $0xe8] sm:$0xff]
    %v1836 = vld [vmem:[#allocation9 + $0xf0] sm:$0xff]
    %v1837 = vld [vmem:[#allocation9 + $0xf8] sm:$0xff]
    %v1838 = vld [vmem:[#allocation11] sm:$0xff]
    %v1839 = vld [vmem:[#allocation11 + $0x8] sm:$0xff]
    %v1840 = vld [vmem:[#allocation11 + $0x10] sm:$0xff]
    %v1841 = vld [vmem:[#allocation11 + $0x18] sm:$0xff]
    %v1842 = vld [vmem:[#allocation11 + $0x20] sm:$0xff]
    %v1843 = vld [vmem:[#allocation11 + $0x28] sm:$0xff]
    %v1844 = vld [vmem:[#allocation11 + $0x30] sm:$0xff]
    %v1845 = vld [vmem:[#allocation11 + $0x38] sm:$0xff]
    %v1846 = vld [vmem:[#allocation11 + $0x40] sm:$0xff]
    %v1847 = vld [vmem:[#allocation11 + $0x48] sm:$0xff]
    %v1848 = vld [vmem:[#allocation11 + $0x50] sm:$0xff]
    %v1849 = vld [vmem:[#allocation11 + $0x58] sm:$0xff]
    %v1850 = vld [vmem:[#allocation11 + $0x60] sm:$0xff]
    %v1851 = vld [vmem:[#allocation11 + $0x68] sm:$0xff]
    %v1852 = vld [vmem:[#allocation11 + $0x70] sm:$0xff]
    %v1853 = vld [vmem:[#allocation11 + $0x78] sm:$0xff]
    %v1854 = vld [vmem:[#allocation11 + $0x80] sm:$0xff]
    %v1855 = vld [vmem:[#allocation11 + $0x88] sm:$0xff]
    %v1856 = vld [vmem:[#allocation11 + $0x90] sm:$0xff]
    %v1857 = vld [vmem:[#allocation11 + $0x98] sm:$0xff]
    %v1858 = vld [vmem:[#allocation11 + $0xa0] sm:$0xff]
    %v1859 = vld [vmem:[#allocation11 + $0xa8] sm:$0xff]
    %v1860 = vld [vmem:[#allocation11 + $0xb0] sm:$0xff]
    %v1861 = vld [vmem:[#allocation11 + $0xb8] sm:$0xff]
    %v1862 = vld [vmem:[#allocation11 + $0xc0] sm:$0xff]
    %v1863 = vld [vmem:[#allocation11 + $0xc8] sm:$0xff]
    %v1864 = vld [vmem:[#allocation11 + $0xd0] sm:$0xff]
    %v1865 = vld [vmem:[#allocation11 + $0xd8] sm:$0xff]
    %v1866 = vld [vmem:[#allocation11 + $0xe0] sm:$0xff]
    %v1867 = vld [vmem:[#allocation11 + $0xe8] sm:$0xff]
    %v1868 = vld [vmem:[#allocation11 + $0xf0] sm:$0xff]
    %v1869 = vld [vmem:[#allocation11 + $0xf8] sm:$0xff]
    %v1870 = vld [vmem:[%s8] sm:$0xf]
    %v1871 = vld [vmem:[#allocation2] sm:$0xf]
    %v1872 = vld [vmem:[#allocation2 + $0x4] sm:$0xf]
    %v1873 = vld [vmem:[#allocation2 + $0x8] sm:$0xf]
    %v1874 = vld [vmem:[#allocation2 + $0xc] sm:$0xf]
    %v1875 = vld [vmem:[#allocation2 + $0x10] sm:$0xf]
    %v1876 = vld [vmem:[#allocation2 + $0x14] sm:$0xf]
    %v1877 = vld [vmem:[#allocation2 + $0x18] sm:$0xf]
    %v1878 = vld [vmem:[#allocation2 + $0x1c] sm:$0xf]
    %v1879 = vld [vmem:[#allocation2 + $0x20] sm:$0xf]
    %v1880 = vld [vmem:[#allocation2 + $0x24] sm:$0xf]
    %v1881 = vld [vmem:[#allocation2 + $0x28] sm:$0xf]
    %v1882 = vld [vmem:[#allocation2 + $0x2c] sm:$0xf]
    %v1883 = vld [vmem:[#allocation2 + $0x30] sm:$0xf]
    %v1884 = vld [vmem:[#allocation2 + $0x34] sm:$0xf]
    %v1885 = vld [vmem:[#allocation2 + $0x38] sm:$0xf]
    %v1886 = vld [vmem:[#allocation2 + $0x3c] sm:$0xf]
    %v1888 = vlaneseq
    %v1889 = vshrl.u32 %v1888, 7
    %v1890 = vsub.s32 0, %v1889
    %v1891 = vrot.slane %v1870, %v1890
    %v1892 = vlaneseq
    %v1893 = vshrl.u32 %v1892, 7
    %v1894 = vsub.s32 1, %v1893
    %v1895 = vrot.slane %v1870, %v1894
    %v1896 = vlaneseq
    %v1897 = vshrl.u32 %v1896, 7
    %v1898 = vsub.s32 2, %v1897
    %v1899 = vrot.slane %v1870, %v1898
    %v1900 = vlaneseq
    %v1901 = vshrl.u32 %v1900, 7
    %v1902 = vsub.s32 3, %v1901
    %v1903 = vrot.slane %v1870, %v1902
    %v1924 = vunpack.c.l.b16 %v1871
    %v1925 = vunpack.c.l.b16 %v1872
    %v1926 = vunpack.c.l.b16 %v1873
    %v1927 = vunpack.c.l.b16 %v1874
    %v1928 = vunpack.c.l.b16 %v1875
    %v1929 = vunpack.c.l.b16 %v1876
    %v1930 = vunpack.c.l.b16 %v1877
    %v1931 = vunpack.c.l.b16 %v1878
    %v1932 = vunpack.c.l.b16 %v1879
    %v1933 = vunpack.c.l.b16 %v1880
    %v1934 = vunpack.c.l.b16 %v1881
    %v1935 = vunpack.c.l.b16 %v1882
    %v1936 = vunpack.c.l.b16 %v1883
    %v1937 = vunpack.c.l.b16 %v1884
    %v1938 = vunpack.c.l.b16 %v1885
    %v1939 = vunpack.c.l.b16 %v1886
    %v1940 = vpack.c.b16 %v1925, %v1924
    %v1941 = vpack.c.b16 %v1927, %v1926
    %v1942 = vpack.c.b16 %v1929, %v1928
    %v1943 = vpack.c.b16 %v1931, %v1930
    %v1944 = vpack.c.b16 %v1933, %v1932
    %v1945 = vpack.c.b16 %v1935, %v1934
    %v1946 = vpack.c.b16 %v1937, %v1936
    %v1947 = vpack.c.b16 %v1939, %v1938
    %v1988 = vunpack.c.l.b16 %v1806
    %v1989 = vunpack.c.h.b16 %v1806
    %v1990 = vunpack.c.l.b16 %v1807
    %v1991 = vunpack.c.h.b16 %v1807
    %v1992 = vunpack.c.l.b16 %v1808
    %v1993 = vunpack.c.h.b16 %v1808
    %v1994 = vunpack.c.l.b16 %v1809
    %v1995 = vunpack.c.h.b16 %v1809
    %v1996 = vunpack.c.l.b16 %v1810
    %v1997 = vunpack.c.h.b16 %v1810
    %v1998 = vunpack.c.l.b16 %v1811
    %v1999 = vunpack.c.h.b16 %v1811
    %v2000 = vunpack.c.l.b16 %v1812
    %v2001 = vunpack.c.h.b16 %v1812
    %v2002 = vunpack.c.l.b16 %v1813
    %v2003 = vunpack.c.h.b16 %v1813
    %v2004 = vunpack.c.l.b16 %v1814
    %v2005 = vunpack.c.h.b16 %v1814
    %v2006 = vunpack.c.l.b16 %v1815
    %v2007 = vunpack.c.h.b16 %v1815
    %v2008 = vunpack.c.l.b16 %v1816
    %v2009 = vunpack.c.h.b16 %v1816
    %v2010 = vunpack.c.l.b16 %v1817
    %v2011 = vunpack.c.h.b16 %v1817
    %v2012 = vunpack.c.l.b16 %v1818
    %v2013 = vunpack.c.h.b16 %v1818
    %v2014 = vunpack.c.l.b16 %v1819
    %v2015 = vunpack.c.h.b16 %v1819
    %v2016 = vunpack.c.l.b16 %v1820
    %v2017 = vunpack.c.h.b16 %v1820
    %v2018 = vunpack.c.l.b16 %v1821
    %v2019 = vunpack.c.h.b16 %v1821
    %v2020 = vunpack.c.l.b16 %v1822
    %v2021 = vunpack.c.h.b16 %v1822
    %v2022 = vunpack.c.l.b16 %v1823
    %v2023 = vunpack.c.h.b16 %v1823
    %v2024 = vunpack.c.l.b16 %v1824
    %v2025 = vunpack.c.h.b16 %v1824
    %v2026 = vunpack.c.l.b16 %v1825
    %v2027 = vunpack.c.h.b16 %v1825
    %v2028 = vunpack.c.l.b16 %v1826
    %v2029 = vunpack.c.h.b16 %v1826
    %v2030 = vunpack.c.l.b16 %v1827
    %v2031 = vunpack.c.h.b16 %v1827
    %v2032 = vunpack.c.l.b16 %v1828
    %v2033 = vunpack.c.h.b16 %v1828
    %v2034 = vunpack.c.l.b16 %v1829
    %v2035 = vunpack.c.h.b16 %v1829
    %v2036 = vunpack.c.l.b16 %v1830
    %v2037 = vunpack.c.h.b16 %v1830
    %v2038 = vunpack.c.l.b16 %v1831
    %v2039 = vunpack.c.h.b16 %v1831
    %v2040 = vunpack.c.l.b16 %v1832
    %v2041 = vunpack.c.h.b16 %v1832
    %v2042 = vunpack.c.l.b16 %v1833
    %v2043 = vunpack.c.h.b16 %v1833
    %v2044 = vunpack.c.l.b16 %v1834
    %v2045 = vunpack.c.h.b16 %v1834
    %v2046 = vunpack.c.l.b16 %v1835
    %v2047 = vunpack.c.h.b16 %v1835
    %v2048 = vunpack.c.l.b16 %v1836
    %v2049 = vunpack.c.h.b16 %v1836
    %v2050 = vunpack.c.l.b16 %v1837
    %v2051 = vunpack.c.h.b16 %v1837
    %v2052 = vpack.c.b16 %v1992, %v1988
    %v2053 = vpack.c.b16 %v1993, %v1989
    %v2054 = vpack.c.b16 %v1994, %v1990
    %v2055 = vpack.c.b16 %v1995, %v1991
    %v2056 = vpack.c.b16 %v2000, %v1996
    %v2057 = vpack.c.b16 %v2001, %v1997
    %v2058 = vpack.c.b16 %v2002, %v1998
    %v2059 = vpack.c.b16 %v2003, %v1999
    %v2060 = vpack.c.b16 %v2008, %v2004
    %v2061 = vpack.c.b16 %v2009, %v2005
    %v2062 = vpack.c.b16 %v2010, %v2006
    %v2063 = vpack.c.b16 %v2011, %v2007
    %v2064 = vpack.c.b16 %v2016, %v2012
    %v2065 = vpack.c.b16 %v2017, %v2013
    %v2066 = vpack.c.b16 %v2018, %v2014
    %v2067 = vpack.c.b16 %v2019, %v2015
    %v2068 = vpack.c.b16 %v2024, %v2020
    %v2069 = vpack.c.b16 %v2025, %v2021
    %v2070 = vpack.c.b16 %v2026, %v2022
    %v2071 = vpack.c.b16 %v2027, %v2023
    %v2072 = vpack.c.b16 %v2032, %v2028
    %v2073 = vpack.c.b16 %v2033, %v2029
    %v2074 = vpack.c.b16 %v2034, %v2030
    %v2075 = vpack.c.b16 %v2035, %v2031
    %v2076 = vpack.c.b16 %v2040, %v2036
    %v2077 = vpack.c.b16 %v2041, %v2037
    %v2078 = vpack.c.b16 %v2042, %v2038
    %v2079 = vpack.c.b16 %v2043, %v2039
    %v2080 = vpack.c.b16 %v2048, %v2044
    %v2081 = vpack.c.b16 %v2049, %v2045
    %v2082 = vpack.c.b16 %v2050, %v2046
    %v2083 = vpack.c.b16 %v2051, %v2047
    %2116 = vmatprep.subr.bf16.mxu0 %v2081
    %2117 = vmatpush1.bf16.msra.mxu0 %v2080
    %2118 = vmatprep.subr.bf16.mxu0 %v2077
    %2119 = vmatpush1.bf16.msra.mxu0 %v2076
    %2120 = vmatprep.subr.bf16.mxu0 %v2073
    %2121 = vmatpush1.bf16.msra.mxu0 %v2072
    %2122 = vmatprep.subr.bf16.mxu0 %v2069
    %2123 = vmatpush1.bf16.msra.mxu0 %v2068
    %2124 = vmatprep.subr.bf16.mxu0 %v2065
    %2125 = vmatpush1.bf16.msra.mxu0 %v2064
    %2126 = vmatprep.subr.bf16.mxu0 %v2061
    %2127 = vmatpush1.bf16.msra.mxu0 %v2060
    %2128 = vmatprep.subr.bf16.mxu0 %v2057
    %2129 = vmatpush1.bf16.msra.mxu0 %v2056
    %2130 = vmatprep.subr.bf16.mxu0 %v2053
    %2131 = vmatpush1.bf16.msra.mxu0 %v2052
    %2132 = vmatprep.subr.bf16.mxu0 0
    %2133 = vmatpush2.bf16.msra.mxu0 0
    %2134 = vmatprep.subr.bf16.mxu0 0
    %2135 = vmatpush2.bf16.msra.mxu0 0
    %2136 = vmatprep.subr.bf16.mxu0 0
    %2137 = vmatpush2.bf16.msra.mxu0 0
    %2138 = vmatprep.subr.bf16.mxu0 0
    %2139 = vmatpush2.bf16.msra.mxu0 0
    %2140 = vmatprep.subr.bf16.mxu0 0
    %2141 = vmatpush2.bf16.msra.mxu0 0
    %2142 = vmatprep.subr.bf16.mxu0 0
    %2143 = vmatpush2.bf16.msra.mxu0 0
    %2144 = vmatprep.subr.bf16.mxu0 0
    %2145 = vmatpush2.bf16.msra.mxu0 0
    %2146 = vmatprep.subr.bf16.mxu0 0
    %2147 = vmatpush2.bf16.msra.mxu0 0
    %2148 = vmatprep.mubr.bf16.mxu0 0
    %2149 = vmatmul.mubr.bf16.gmra.mxu0 %v1940
    %v2150 = vpop.f32.mrf.mxu0
    %v2151 = vadd.f32 %v1891, %v2150
    %v2152 = vpop.f32.mrf.mxu0
    %v2153 = vadd.f32 %v1895, %v2152
    %v2154 = vpop.f32.mrf.mxu0
    %v2155 = vadd.f32 %v1891, %v2154
    %v2156 = vpop.f32.mrf.mxu0
    %v2157 = vadd.f32 %v1895, %v2156
    %2158 = vmatprep.mubr.bf16.mxu0 0
    %2159 = vmatmul.mubr.bf16.gmra.mxu0 %v1941
    %v2160 = vpop.f32.mrf.mxu0
    %v2161 = vadd.f32 %v1891, %v2160
    %v2162 = vpop.f32.mrf.mxu0
    %v2163 = vadd.f32 %v1895, %v2162
    %v2164 = vpop.f32.mrf.mxu0
    %v2165 = vadd.f32 %v1891, %v2164
    %v2166 = vpop.f32.mrf.mxu0
    %v2167 = vadd.f32 %v1895, %v2166
    %2168 = vmatprep.mubr.bf16.mxu0 0
    %2169 = vmatmul.mubr.bf16.gmra.mxu0 %v1942
    %v2170 = vpop.f32.mrf.mxu0
    %v2171 = vadd.f32 %v1891, %v2170
    %v2172 = vpop.f32.mrf.mxu0
    %v2173 = vadd.f32 %v1895, %v2172
    %v2174 = vpop.f32.mrf.mxu0
    %v2175 = vadd.f32 %v1891, %v2174
    %v2176 = vpop.f32.mrf.mxu0
    %v2177 = vadd.f32 %v1895, %v2176
    %2178 = vmatprep.mubr.bf16.mxu0 0
    %2179 = vmatmul.mubr.bf16.gmra.mxu0 %v1943
    %v2180 = vpop.f32.mrf.mxu0
    %v2181 = vadd.f32 %v1891, %v2180
    %v2182 = vpop.f32.mrf.mxu0
    %v2183 = vadd.f32 %v1895, %v2182
    %v2184 = vpop.f32.mrf.mxu0
    %v2185 = vadd.f32 %v1891, %v2184
    %v2186 = vpop.f32.mrf.mxu0
    %v2187 = vadd.f32 %v1895, %v2186
    %2188 = vmatprep.mubr.bf16.mxu0 0
    %2189 = vmatmul.mubr.bf16.gmra.mxu0 %v1944
    %v2190 = vpop.f32.mrf.mxu0
    %v2191 = vadd.f32 %v1891, %v2190
    %v2192 = vpop.f32.mrf.mxu0
    %v2193 = vadd.f32 %v1895, %v2192
    %v2194 = vpop.f32.mrf.mxu0
    %v2195 = vadd.f32 %v1891, %v2194
    %v2196 = vpop.f32.mrf.mxu0
    %v2197 = vadd.f32 %v1895, %v2196
    %2198 = vmatprep.mubr.bf16.mxu0 0
    %2199 = vmatmul.mubr.bf16.gmra.mxu0 %v1945
    %v2200 = vpop.f32.mrf.mxu0
    %v2201 = vadd.f32 %v1891, %v2200
    %v2202 = vpop.f32.mrf.mxu0
    %v2203 = vadd.f32 %v1895, %v2202
    %v2204 = vpop.f32.mrf.mxu0
    %v2205 = vadd.f32 %v1891, %v2204
    %v2206 = vpop.f32.mrf.mxu0
    %v2207 = vadd.f32 %v1895, %v2206
    %2208 = vmatprep.mubr.bf16.mxu0 0
    %2209 = vmatmul.mubr.bf16.gmra.mxu0 %v1946
    %v2210 = vpop.f32.mrf.mxu0
    %v2211 = vadd.f32 %v1891, %v2210
    %v2212 = vpop.f32.mrf.mxu0
    %v2213 = vadd.f32 %v1895, %v2212
    %v2214 = vpop.f32.mrf.mxu0
    %v2215 = vadd.f32 %v1891, %v2214
    %v2216 = vpop.f32.mrf.mxu0
    %v2217 = vadd.f32 %v1895, %v2216
    %2218 = vmatprep.mubr.bf16.mxu0 0
    %2219 = vmatmul.mubr.bf16.gmra.mxu0 %v1947
    %v2220 = vpop.f32.mrf.mxu0
    %v2221 = vadd.f32 %v1891, %v2220
    %v2222 = vpop.f32.mrf.mxu0
    %v2223 = vadd.f32 %v1895, %v2222
    %v2224 = vpop.f32.mrf.mxu0
    %v2225 = vadd.f32 %v1891, %v2224
    %v2226 = vpop.f32.mrf.mxu0
    %v2227 = vadd.f32 %v1895, %v2226
    %2228 = vdwg.mxu0
    %2229 = vmatprep.subr.bf16.mxu0 %v2083
    %2230 = vmatpush1.bf16.msra.mxu0 %v2082
    %2231 = vmatprep.subr.bf16.mxu0 %v2079
    %2232 = vmatpush1.bf16.msra.mxu0 %v2078
    %2233 = vmatprep.subr.bf16.mxu0 %v2075
    %2234 = vmatpush1.bf16.msra.mxu0 %v2074
    %2235 = vmatprep.subr.bf16.mxu0 %v2071
    %2236 = vmatpush1.bf16.msra.mxu0 %v2070
    %2237 = vmatprep.subr.bf16.mxu0 %v2067
    %2238 = vmatpush1.bf16.msra.mxu0 %v2066
    %2239 = vmatprep.subr.bf16.mxu0 %v2063
    %2240 = vmatpush1.bf16.msra.mxu0 %v2062
    %2241 = vmatprep.subr.bf16.mxu0 %v2059
    %2242 = vmatpush1.bf16.msra.mxu0 %v2058
    %2243 = vmatprep.subr.bf16.mxu0 %v2055
    %2244 = vmatpush1.bf16.msra.mxu0 %v2054
    %2245 = vmatprep.subr.bf16.mxu0 0
    %2246 = vmatpush2.bf16.msra.mxu0 0
    %2247 = vmatprep.subr.bf16.mxu0 0
    %2248 = vmatpush2.bf16.msra.mxu0 0
    %2249 = vmatprep.subr.bf16.mxu0 0
    %2250 = vmatpush2.bf16.msra.mxu0 0
    %2251 = vmatprep.subr.bf16.mxu0 0
    %2252 = vmatpush2.bf16.msra.mxu0 0
    %2253 = vmatprep.subr.bf16.mxu0 0
    %2254 = vmatpush2.bf16.msra.mxu0 0
    %2255 = vmatprep.subr.bf16.mxu0 0
    %2256 = vmatpush2.bf16.msra.mxu0 0
    %2257 = vmatprep.subr.bf16.mxu0 0
    %2258 = vmatpush2.bf16.msra.mxu0 0
    %2259 = vmatprep.subr.bf16.mxu0 0
    %2260 = vmatpush2.bf16.msra.mxu0 0
    %2261 = vmatprep.mubr.bf16.mxu0 0
    %2262 = vmatmul.mubr.bf16.gmra.mxu0 %v1940
    %v2263 = vpop.f32.mrf.mxu0
    %v2264 = vadd.f32 %v1899, %v2263
    %v2265 = vpop.f32.mrf.mxu0
    %v2266 = vadd.f32 %v1903, %v2265
    %v2267 = vpop.f32.mrf.mxu0
    %v2268 = vadd.f32 %v1899, %v2267
    %v2269 = vpop.f32.mrf.mxu0
    %v2270 = vadd.f32 %v1903, %v2269
    %2271 = vmatprep.mubr.bf16.mxu0 0
    %2272 = vmatmul.mubr.bf16.gmra.mxu0 %v1941
    %v2273 = vpop.f32.mrf.mxu0
    %v2274 = vadd.f32 %v1899, %v2273
    %v2275 = vpop.f32.mrf.mxu0
    %v2276 = vadd.f32 %v1903, %v2275
    %v2277 = vpop.f32.mrf.mxu0
    %v2278 = vadd.f32 %v1899, %v2277
    %v2279 = vpop.f32.mrf.mxu0
    %v2280 = vadd.f32 %v1903, %v2279
    %2281 = vmatprep.mubr.bf16.mxu0 0
    %2282 = vmatmul.mubr.bf16.gmra.mxu0 %v1942
    %v2283 = vpop.f32.mrf.mxu0
    %v2284 = vadd.f32 %v1899, %v2283
    %v2285 = vpop.f32.mrf.mxu0
    %v2286 = vadd.f32 %v1903, %v2285
    %v2287 = vpop.f32.mrf.mxu0
    %v2288 = vadd.f32 %v1899, %v2287
    %v2289 = vpop.f32.mrf.mxu0
    %v2290 = vadd.f32 %v1903, %v2289
    %2291 = vmatprep.mubr.bf16.mxu0 0
    %2292 = vmatmul.mubr.bf16.gmra.mxu0 %v1943
    %v2293 = vpop.f32.mrf.mxu0
    %v2294 = vadd.f32 %v1899, %v2293
    %v2295 = vpop.f32.mrf.mxu0
    %v2296 = vadd.f32 %v1903, %v2295
    %v2297 = vpop.f32.mrf.mxu0
    %v2298 = vadd.f32 %v1899, %v2297
    %v2299 = vpop.f32.mrf.mxu0
    %v2300 = vadd.f32 %v1903, %v2299
    %2301 = vmatprep.mubr.bf16.mxu0 0
    %2302 = vmatmul.mubr.bf16.gmra.mxu0 %v1944
    %v2303 = vpop.f32.mrf.mxu0
    %v2304 = vadd.f32 %v1899, %v2303
    %v2305 = vpop.f32.mrf.mxu0
    %v2306 = vadd.f32 %v1903, %v2305
    %v2307 = vpop.f32.mrf.mxu0
    %v2308 = vadd.f32 %v1899, %v2307
    %v2309 = vpop.f32.mrf.mxu0
    %v2310 = vadd.f32 %v1903, %v2309
    %2311 = vmatprep.mubr.bf16.mxu0 0
    %2312 = vmatmul.mubr.bf16.gmra.mxu0 %v1945
    %v2313 = vpop.f32.mrf.mxu0
    %v2314 = vadd.f32 %v1899, %v2313
    %v2315 = vpop.f32.mrf.mxu0
    %v2316 = vadd.f32 %v1903, %v2315
    %v2317 = vpop.f32.mrf.mxu0
    %v2318 = vadd.f32 %v1899, %v2317
    %v2319 = vpop.f32.mrf.mxu0
    %v2320 = vadd.f32 %v1903, %v2319
    %2321 = vmatprep.mubr.bf16.mxu0 0
    %2322 = vmatmul.mubr.bf16.gmra.mxu0 %v1946
    %v2323 = vpop.f32.mrf.mxu0
    %v2324 = vadd.f32 %v1899, %v2323
    %v2325 = vpop.f32.mrf.mxu0
    %v2326 = vadd.f32 %v1903, %v2325
    %v2327 = vpop.f32.mrf.mxu0
    %v2328 = vadd.f32 %v1899, %v2327
    %v2329 = vpop.f32.mrf.mxu0
    %v2330 = vadd.f32 %v1903, %v2329
    %2331 = vmatprep.mubr.bf16.mxu0 0
    %2332 = vmatmul.mubr.bf16.gmra.mxu0 %v1947
    %v2333 = vpop.f32.mrf.mxu0
    %v2334 = vadd.f32 %v1899, %v2333
    %v2335 = vpop.f32.mrf.mxu0
    %v2336 = vadd.f32 %v1903, %v2335
    %v2337 = vpop.f32.mrf.mxu0
    %v2338 = vadd.f32 %v1899, %v2337
    %v2339 = vpop.f32.mrf.mxu0
    %v2340 = vadd.f32 %v1903, %v2339
    %2341 = vdwg.mxu0
    %s2342 = scalar_lea.vmem [#allocation13], 16
    %v2343 = vld [vmem:[%s2342] sm:$0xff]
    %v2344 = vld [vmem:[%s2342 + $0x8] sm:$0xff]
    %s2345 = scalar_lea.vmem [#allocation15], 16
    %v2346 = vld [vmem:[%s2345] sm:$0xff]
    %v2347 = vld [vmem:[%s2345 + $0x8] sm:$0xff]
    %v2348 = vpack.c.bf16 %v2344, %v2343
    %v2381 = vunpack.c.l.b16 %v1838
    %v2382 = vunpack.c.h.b16 %v1838
    %v2383 = vunpack.c.l.b16 %v1839
    %v2384 = vunpack.c.h.b16 %v1839
    %v2385 = vunpack.c.l.b16 %v1840
    %v2386 = vunpack.c.h.b16 %v1840
    %v2387 = vunpack.c.l.b16 %v1841
    %v2388 = vunpack.c.h.b16 %v1841
    %v2389 = vunpack.c.l.b16 %v1842
    %v2390 = vunpack.c.h.b16 %v1842
    %v2391 = vunpack.c.l.b16 %v1843
    %v2392 = vunpack.c.h.b16 %v1843
    %v2393 = vunpack.c.l.b16 %v1844
    %v2394 = vunpack.c.h.b16 %v1844
    %v2395 = vunpack.c.l.b16 %v1845
    %v2396 = vunpack.c.h.b16 %v1845
    %v2397 = vunpack.c.l.b16 %v1846
    %v2398 = vunpack.c.h.b16 %v1846
    %v2399 = vunpack.c.l.b16 %v1847
    %v2400 = vunpack.c.h.b16 %v1847
    %v2401 = vunpack.c.l.b16 %v1848
    %v2402 = vunpack.c.h.b16 %v1848
    %v2403 = vunpack.c.l.b16 %v1849
    %v2404 = vunpack.c.h.b16 %v1849
    %v2405 = vunpack.c.l.b16 %v1850
    %v2406 = vunpack.c.h.b16 %v1850
    %v2407 = vunpack.c.l.b16 %v1851
    %v2408 = vunpack.c.h.b16 %v1851
    %v2409 = vunpack.c.l.b16 %v1852
    %v2410 = vunpack.c.h.b16 %v1852
    %v2411 = vunpack.c.l.b16 %v1853
    %v2412 = vunpack.c.h.b16 %v1853
    %v2413 = vunpack.c.l.b16 %v1854
    %v2414 = vunpack.c.h.b16 %v1854
    %v2415 = vunpack.c.l.b16 %v1855
    %v2416 = vunpack.c.h.b16 %v1855
    %v2417 = vunpack.c.l.b16 %v1856
    %v2418 = vunpack.c.h.b16 %v1856
    %v2419 = vunpack.c.l.b16 %v1857
    %v2420 = vunpack.c.h.b16 %v1857
    %v2421 = vunpack.c.l.b16 %v1858
    %v2422 = vunpack.c.h.b16 %v1858
    %v2423 = vunpack.c.l.b16 %v1859
    %v2424 = vunpack.c.h.b16 %v1859
    %v2425 = vunpack.c.l.b16 %v1860
    %v2426 = vunpack.c.h.b16 %v1860
    %v2427 = vunpack.c.l.b16 %v1861
    %v2428 = vunpack.c.h.b16 %v1861
    %v2429 = vunpack.c.l.b16 %v1862
    %v2430 = vunpack.c.h.b16 %v1862
    %v2431 = vunpack.c.l.b16 %v1863
    %v2432 = vunpack.c.h.b16 %v1863
    %v2433 = vunpack.c.l.b16 %v1864
    %v2434 = vunpack.c.h.b16 %v1864
    %v2435 = vunpack.c.l.b16 %v1865
    %v2436 = vunpack.c.h.b16 %v1865
    %v2437 = vunpack.c.l.b16 %v1866
    %v2438 = vunpack.c.h.b16 %v1866
    %v2439 = vunpack.c.l.b16 %v1867
    %v2440 = vunpack.c.h.b16 %v1867
    %v2441 = vunpack.c.l.b16 %v1868
    %v2442 = vunpack.c.h.b16 %v1868
    %v2443 = vunpack.c.l.b16 %v1869
    %v2444 = vunpack.c.h.b16 %v1869
    %v2445 = vpack.c.b16 %v2385, %v2381
    %v2446 = vpack.c.b16 %v2386, %v2382
    %v2447 = vpack.c.b16 %v2387, %v2383
    %v2448 = vpack.c.b16 %v2388, %v2384
    %v2449 = vpack.c.b16 %v2393, %v2389
    %v2450 = vpack.c.b16 %v2394, %v2390
    %v2451 = vpack.c.b16 %v2395, %v2391
    %v2452 = vpack.c.b16 %v2396, %v2392
    %v2453 = vpack.c.b16 %v2401, %v2397
    %v2454 = vpack.c.b16 %v2402, %v2398
    %v2455 = vpack.c.b16 %v2403, %v2399
    %v2456 = vpack.c.b16 %v2404, %v2400
    %v2457 = vpack.c.b16 %v2409, %v2405
    %v2458 = vpack.c.b16 %v2410, %v2406
    %v2459 = vpack.c.b16 %v2411, %v2407
    %v2460 = vpack.c.b16 %v2412, %v2408
    %v2461 = vpack.c.b16 %v2417, %v2413
    %v2462 = vpack.c.b16 %v2418, %v2414
    %v2463 = vpack.c.b16 %v2419, %v2415
    %v2464 = vpack.c.b16 %v2420, %v2416
    %v2465 = vpack.c.b16 %v2425, %v2421
    %v2466 = vpack.c.b16 %v2426, %v2422
    %v2467 = vpack.c.b16 %v2427, %v2423
    %v2468 = vpack.c.b16 %v2428, %v2424
    %v2469 = vpack.c.b16 %v2433, %v2429
    %v2470 = vpack.c.b16 %v2434, %v2430
    %v2471 = vpack.c.b16 %v2435, %v2431
    %v2472 = vpack.c.b16 %v2436, %v2432
    %v2473 = vpack.c.b16 %v2441, %v2437
    %v2474 = vpack.c.b16 %v2442, %v2438
    %v2475 = vpack.c.b16 %v2443, %v2439
    %v2476 = vpack.c.b16 %v2444, %v2440
    %2509 = vmatprep.subr.bf16.mxu0 %v2474
    %2510 = vmatpush1.bf16.msra.mxu0 %v2473
    %2511 = vmatprep.subr.bf16.mxu0 %v2470
    %2512 = vmatpush1.bf16.msra.mxu0 %v2469
    %2513 = vmatprep.subr.bf16.mxu0 %v2466
    %2514 = vmatpush1.bf16.msra.mxu0 %v2465
    %2515 = vmatprep.subr.bf16.mxu0 %v2462
    %2516 = vmatpush1.bf16.msra.mxu0 %v2461
    %2517 = vmatprep.subr.bf16.mxu0 %v2458
    %2518 = vmatpush1.bf16.msra.mxu0 %v2457
    %2519 = vmatprep.subr.bf16.mxu0 %v2454
    %2520 = vmatpush1.bf16.msra.mxu0 %v2453
    %2521 = vmatprep.subr.bf16.mxu0 %v2450
    %2522 = vmatpush1.bf16.msra.mxu0 %v2449
    %2523 = vmatprep.subr.bf16.mxu0 %v2446
    %2524 = vmatpush1.bf16.msra.mxu0 %v2445
    %2525 = vmatprep.subr.bf16.mxu0 0
    %2526 = vmatpush2.bf16.msra.mxu0 0
    %2527 = vmatprep.subr.bf16.mxu0 0
    %2528 = vmatpush2.bf16.msra.mxu0 0
    %2529 = vmatprep.subr.bf16.mxu0 0
    %2530 = vmatpush2.bf16.msra.mxu0 0
    %2531 = vmatprep.subr.bf16.mxu0 0
    %2532 = vmatpush2.bf16.msra.mxu0 0
    %2533 = vmatprep.subr.bf16.mxu0 0
    %2534 = vmatpush2.bf16.msra.mxu0 0
    %2535 = vmatprep.subr.bf16.mxu0 0
    %2536 = vmatpush2.bf16.msra.mxu0 0
    %2537 = vmatprep.subr.bf16.mxu0 0
    %2538 = vmatpush2.bf16.msra.mxu0 0
    %2539 = vmatprep.subr.bf16.mxu0 0
    %2540 = vmatpush2.bf16.msra.mxu0 0
    %2541 = vmatprep.mubr.bf16.mxu0 0
    %2542 = vmatmul.mubr.bf16.gmra.mxu0 %v2348
    %v2543 = vpop.f32.mrf.mxu0
    %v2544 = vadd.f32 0.0, %v2543
    %v2545 = vpop.f32.mrf.mxu0
    %v2546 = vadd.f32 0.0, %v2545
    %v2547 = vpop.f32.mrf.mxu0
    %v2548 = vadd.f32 0.0, %v2547
    %v2549 = vpop.f32.mrf.mxu0
    %v2550 = vadd.f32 0.0, %v2549
    %2551 = vdwg.mxu0
    %2552 = vmatprep.subr.bf16.mxu0 %v2476
    %2553 = vmatpush1.bf16.msra.mxu0 %v2475
    %2554 = vmatprep.subr.bf16.mxu0 %v2472
    %2555 = vmatpush1.bf16.msra.mxu0 %v2471
    %2556 = vmatprep.subr.bf16.mxu0 %v2468
    %2557 = vmatpush1.bf16.msra.mxu0 %v2467
    %2558 = vmatprep.subr.bf16.mxu0 %v2464
    %2559 = vmatpush1.bf16.msra.mxu0 %v2463
    %2560 = vmatprep.subr.bf16.mxu0 %v2460
    %2561 = vmatpush1.bf16.msra.mxu0 %v2459
    %2562 = vmatprep.subr.bf16.mxu0 %v2456
    %2563 = vmatpush1.bf16.msra.mxu0 %v2455
    %2564 = vmatprep.subr.bf16.mxu0 %v2452
    %2565 = vmatpush1.bf16.msra.mxu0 %v2451
    %2566 = vmatprep.subr.bf16.mxu0 %v2448
    %2567 = vmatpush1.bf16.msra.mxu0 %v2447
    %2568 = vmatprep.subr.bf16.mxu0 0
    %2569 = vmatpush2.bf16.msra.mxu0 0
    %2570 = vmatprep.subr.bf16.mxu0 0
    %2571 = vmatpush2.bf16.msra.mxu0 0
    %2572 = vmatprep.subr.bf16.mxu0 0
    %2573 = vmatpush2.bf16.msra.mxu0 0
    %2574 = vmatprep.subr.bf16.mxu0 0
    %2575 = vmatpush2.bf16.msra.mxu0 0
    %2576 = vmatprep.subr.bf16.mxu0 0
    %2577 = vmatpush2.bf16.msra.mxu0 0
    %2578 = vmatprep.subr.bf16.mxu0 0
    %2579 = vmatpush2.bf16.msra.mxu0 0
    %2580 = vmatprep.subr.bf16.mxu0 0
    %2581 = vmatpush2.bf16.msra.mxu0 0
    %2582 = vmatprep.subr.bf16.mxu0 0
    %2583 = vmatpush2.bf16.msra.mxu0 0
    %2584 = vmatprep.mubr.bf16.mxu0 0
    %2585 = vmatmul.mubr.bf16.gmra.mxu0 %v2348
    %v2586 = vpop.f32.mrf.mxu0
    %v2587 = vadd.f32 0.0, %v2586
    %v2588 = vpop.f32.mrf.mxu0
    %v2589 = vadd.f32 0.0, %v2588
    %v2590 = vpop.f32.mrf.mxu0
    %v2591 = vadd.f32 0.0, %v2590
    %v2592 = vpop.f32.mrf.mxu0
    %v2593 = vadd.f32 0.0, %v2592
    %2594 = vdwg.mxu0
    %v2595 = vadd.f32 %v2151, %v2544
    %v2596 = vadd.f32 %v2153, %v2546
    %v2597 = vadd.f32 %v2264, %v2587
    %v2598 = vadd.f32 %v2266, %v2589
    %v2599 = vadd.f32 %v2155, %v2548
    %v2600 = vadd.f32 %v2157, %v2550
    %v2601 = vadd.f32 %v2268, %v2591
    %v2602 = vadd.f32 %v2270, %v2593
    %v2603 = vmul.f32 %v2595, 0.5
    %v2604 = vmul.f32 %v2599, 0.5
    %v2605 = vtanh.pop %v2603
    %v2606 = vtanh.pop %v2604
    %v2607 = vmul.f32 %v2605, 0.5
    %v2608 = vmul.f32 %v2606, 0.5
    %v2609 = vadd.f32 %v2607, 0.5
    %v2610 = vadd.f32 %v2608, 0.5
    %v2611 = vmul.f32 %v2596, 0.5
    %v2612 = vmul.f32 %v2600, 0.5
    %v2613 = vtanh.pop %v2611
    %v2614 = vtanh.pop %v2612
    %v2615 = vmul.f32 %v2613, 0.5
    %v2616 = vmul.f32 %v2614, 0.5
    %v2617 = vadd.f32 %v2615, 0.5
    %v2618 = vadd.f32 %v2616, 0.5
    %v2619 = vtanh.pop %v2597
    %v2620 = vtanh.pop %v2601
    %v2621 = vmul.f32 %v2598, 0.5
    %v2622 = vmul.f32 %v2602, 0.5
    %v2623 = vtanh.pop %v2621
    %v2624 = vtanh.pop %v2622
    %v2625 = vmul.f32 %v2623, 0.5
    %v2626 = vmul.f32 %v2624, 0.5
    %v2627 = vadd.f32 %v2625, 0.5
    %v2628 = vadd.f32 %v2626, 0.5
    %v2629 = vmul.f32 %v2617, %v2346
    %v2630 = vmul.f32 %v2618, %v2347
    %v2631 = vmul.f32 %v2609, %v2619
    %v2632 = vmul.f32 %v2610, %v2620
    %v2633 = vadd.f32 %v2629, %v2631
    %v2634 = vadd.f32 %v2630, %v2632
    %v2635 = vtanh.pop %v2633
    %v2636 = vtanh.pop %v2634
    %v2637 = vmul.f32 %v2627, %v2635
    %v2638 = vmul.f32 %v2628, %v2636
    %v2639 = vpack.c.bf16 %v2638, %v2637
    %2640 = vmatprep.subr.bf16.mxu0 %v2474
    %2641 = vmatpush1.bf16.msra.mxu0 %v2473
    %2642 = vmatprep.subr.bf16.mxu0 %v2470
    %2643 = vmatpush1.bf16.msra.mxu0 %v2469
    %2644 = vmatprep.subr.bf16.mxu0 %v2466
    %2645 = vmatpush1.bf16.msra.mxu0 %v2465
    %2646 = vmatprep.subr.bf16.mxu0 %v2462
    %2647 = vmatpush1.bf16.msra.mxu0 %v2461
    %2648 = vmatprep.subr.bf16.mxu0 %v2458
    %2649 = vmatpush1.bf16.msra.mxu0 %v2457
    %2650 = vmatprep.subr.bf16.mxu0 %v2454
    %2651 = vmatpush1.bf16.msra.mxu0 %v2453
    %2652 = vmatprep.subr.bf16.mxu0 %v2450
    %2653 = vmatpush1.bf16.msra.mxu0 %v2449
    %2654 = vmatprep.subr.bf16.mxu0 %v2446
    %2655 = vmatpush1.bf16.msra.mxu0 %v2445
    %2656 = vmatprep.subr.bf16.mxu0 0
    %2657 = vmatpush2.bf16.msra.mxu0 0
    %2658 = vmatprep.subr.bf16.mxu0 0
    %2659 = vmatpush2.bf16.msra.mxu0 0
    %2660 = vmatprep.subr.bf16.mxu0 0
    %2661 = vmatpush2.bf16.msra.mxu0 0
    %2662 = vmatprep.subr.bf16.mxu0 0
    %2663 = vmatpush2.bf16.msra.mxu0 0
    %2664 = vmatprep.subr.bf16.mxu0 0
    %2665 = vmatpush2.bf16.msra.mxu0 0
    %2666 = vmatprep.subr.bf16.mxu0 0
    %2667 = vmatpush2.bf16.msra.mxu0 0
    %2668 = vmatprep.subr.bf16.mxu0 0
    %2669 = vmatpush2.bf16.msra.mxu0 0
    %2670 = vmatprep.subr.bf16.mxu0 0
    %2671 = vmatpush2.bf16.msra.mxu0 0
    %2672 = vmatprep.mubr.bf16.mxu0 0
    %2673 = vmatmul.mubr.bf16.gmra.mxu0 %v2639
    %v2674 = vpop.f32.mrf.mxu0
    %v2675 = vadd.f32 0.0, %v2674
    %v2676 = vpop.f32.mrf.mxu0
    %v2677 = vadd.f32 0.0, %v2676
    %v2678 = vpop.f32.mrf.mxu0
    %v2679 = vadd.f32 0.0, %v2678
    %v2680 = vpop.f32.mrf.mxu0
    %v2681 = vadd.f32 0.0, %v2680
    %2682 = vdwg.mxu0
    %2683 = vmatprep.subr.bf16.mxu0 %v2476
    %2684 = vmatpush1.bf16.msra.mxu0 %v2475
    %2685 = vmatprep.subr.bf16.mxu0 %v2472
    %2686 = vmatpush1.bf16.msra.mxu0 %v2471
    %2687 = vmatprep.subr.bf16.mxu0 %v2468
    %2688 = vmatpush1.bf16.msra.mxu0 %v2467
    %2689 = vmatprep.subr.bf16.mxu0 %v2464
    %2690 = vmatpush1.bf16.msra.mxu0 %v2463
    %2691 = vmatprep.subr.bf16.mxu0 %v2460
    %2692 = vmatpush1.bf16.msra.mxu0 %v2459
    %2693 = vmatprep.subr.bf16.mxu0 %v2456
    %2694 = vmatpush1.bf16.msra.mxu0 %v2455
    %2695 = vmatprep.subr.bf16.mxu0 %v2452
    %2696 = vmatpush1.bf16.msra.mxu0 %v2451
    %2697 = vmatprep.subr.bf16.mxu0 %v2448
    %2698 = vmatpush1.bf16.msra.mxu0 %v2447
    %2699 = vmatprep.subr.bf16.mxu0 0
    %2700 = vmatpush2.bf16.msra.mxu0 0
    %2701 = vmatprep.subr.bf16.mxu0 0
    %2702 = vmatpush2.bf16.msra.mxu0 0
    %2703 = vmatprep.subr.bf16.mxu0 0
    %2704 = vmatpush2.bf16.msra.mxu0 0
    %2705 = vmatprep.subr.bf16.mxu0 0
    %2706 = vmatpush2.bf16.msra.mxu0 0
    %2707 = vmatprep.subr.bf16.mxu0 0
    %2708 = vmatpush2.bf16.msra.mxu0 0
    %2709 = vmatprep.subr.bf16.mxu0 0
    %2710 = vmatpush2.bf16.msra.mxu0 0
    %2711 = vmatprep.subr.bf16.mxu0 0
    %2712 = vmatpush2.bf16.msra.mxu0 0
    %2713 = vmatprep.subr.bf16.mxu0 0
    %2714 = vmatpush2.bf16.msra.mxu0 0
    %2715 = vmatprep.mubr.bf16.mxu0 0
    %2716 = vmatmul.mubr.bf16.gmra.mxu0 %v2639
    %v2717 = vpop.f32.mrf.mxu0
    %v2718 = vadd.f32 0.0, %v2717
    %v2719 = vpop.f32.mrf.mxu0
    %v2720 = vadd.f32 0.0, %v2719
    %v2721 = vpop.f32.mrf.mxu0
    %v2722 = vadd.f32 0.0, %v2721
    %v2723 = vpop.f32.mrf.mxu0
    %v2724 = vadd.f32 0.0, %v2723
    %2725 = vdwg.mxu0
    %v2726 = vadd.f32 %v2161, %v2675
    %v2727 = vadd.f32 %v2163, %v2677
    %v2728 = vadd.f32 %v2274, %v2718
    %v2729 = vadd.f32 %v2276, %v2720
    %v2730 = vadd.f32 %v2165, %v2679
    %v2731 = vadd.f32 %v2167, %v2681
    %v2732 = vadd.f32 %v2278, %v2722
    %v2733 = vadd.f32 %v2280, %v2724
    %v2734 = vmul.f32 %v2726, 0.5
    %v2735 = vmul.f32 %v2730, 0.5
    %v2736 = vtanh.pop %v2734
    %v2737 = vtanh.pop %v2735
    %v2738 = vmul.f32 %v2736, 0.5
    %v2739 = vmul.f32 %v2737, 0.5
    %v2740 = vadd.f32 %v2738, 0.5
    %v2741 = vadd.f32 %v2739, 0.5
    %v2742 = vmul.f32 %v2727, 0.5
    %v2743 = vmul.f32 %v2731, 0.5
    %v2744 = vtanh.pop %v2742
    %v2745 = vtanh.pop %v2743
    %v2746 = vmul.f32 %v2744, 0.5
    %v2747 = vmul.f32 %v2745, 0.5
    %v2748 = vadd.f32 %v2746, 0.5
    %v2749 = vadd.f32 %v2747, 0.5
    %v2750 = vtanh.pop %v2728
    %v2751 = vtanh.pop %v2732
    %v2752 = vmul.f32 %v2729, 0.5
    %v2753 = vmul.f32 %v2733, 0.5
    %v2754 = vtanh.pop %v2752
    %v2755 = vtanh.pop %v2753
    %v2756 = vmul.f32 %v2754, 0.5
    %v2757 = vmul.f32 %v2755, 0.5
    %v2758 = vadd.f32 %v2756, 0.5
    %v2759 = vadd.f32 %v2757, 0.5
    %v2760 = vmul.f32 %v2748, %v2633
    %v2761 = vmul.f32 %v2749, %v2634
    %v2762 = vmul.f32 %v2740, %v2750
    %v2763 = vmul.f32 %v2741, %v2751
    %v2764 = vadd.f32 %v2760, %v2762
    %v2765 = vadd.f32 %v2761, %v2763
    %v2766 = vtanh.pop %v2764
    %v2767 = vtanh.pop %v2765
    %v2768 = vmul.f32 %v2758, %v2766
    %v2769 = vmul.f32 %v2759, %v2767
    %v2770 = vpack.c.bf16 %v2769, %v2768
    %2771 = vmatprep.subr.bf16.mxu0 %v2474
    %2772 = vmatpush1.bf16.msra.mxu0 %v2473
    %2773 = vmatprep.subr.bf16.mxu0 %v2470
    %2774 = vmatpush1.bf16.msra.mxu0 %v2469
    %2775 = vmatprep.subr.bf16.mxu0 %v2466
    %2776 = vmatpush1.bf16.msra.mxu0 %v2465
    %2777 = vmatprep.subr.bf16.mxu0 %v2462
    %2778 = vmatpush1.bf16.msra.mxu0 %v2461
    %2779 = vmatprep.subr.bf16.mxu0 %v2458
    %2780 = vmatpush1.bf16.msra.mxu0 %v2457
    %2781 = vmatprep.subr.bf16.mxu0 %v2454
    %2782 = vmatpush1.bf16.msra.mxu0 %v2453
    %2783 = vmatprep.subr.bf16.mxu0 %v2450
    %2784 = vmatpush1.bf16.msra.mxu0 %v2449
    %2785 = vmatprep.subr.bf16.mxu0 %v2446
    %2786 = vmatpush1.bf16.msra.mxu0 %v2445
    %2787 = vmatprep.subr.bf16.mxu0 0
    %2788 = vmatpush2.bf16.msra.mxu0 0
    %2789 = vmatprep.subr.bf16.mxu0 0
    %2790 = vmatpush2.bf16.msra.mxu0 0
    %2791 = vmatprep.subr.bf16.mxu0 0
    %2792 = vmatpush2.bf16.msra.mxu0 0
    %2793 = vmatprep.subr.bf16.mxu0 0
    %2794 = vmatpush2.bf16.msra.mxu0 0
    %2795 = vmatprep.subr.bf16.mxu0 0
    %2796 = vmatpush2.bf16.msra.mxu0 0
    %2797 = vmatprep.subr.bf16.mxu0 0
    %2798 = vmatpush2.bf16.msra.mxu0 0
    %2799 = vmatprep.subr.bf16.mxu0 0
    %2800 = vmatpush2.bf16.msra.mxu0 0
    %2801 = vmatprep.subr.bf16.mxu0 0
    %2802 = vmatpush2.bf16.msra.mxu0 0
    %2803 = vmatprep.mubr.bf16.mxu0 0
    %2804 = vmatmul.mubr.bf16.gmra.mxu0 %v2770
    %v2805 = vpop.f32.mrf.mxu0
    %v2806 = vadd.f32 0.0, %v2805
    %v2807 = vpop.f32.mrf.mxu0
    %v2808 = vadd.f32 0.0, %v2807
    %v2809 = vpop.f32.mrf.mxu0
    %v2810 = vadd.f32 0.0, %v2809
    %v2811 = vpop.f32.mrf.mxu0
    %v2812 = vadd.f32 0.0, %v2811
    %2813 = vdwg.mxu0
    %2814 = vmatprep.subr.bf16.mxu0 %v2476
    %2815 = vmatpush1.bf16.msra.mxu0 %v2475
    %2816 = vmatprep.subr.bf16.mxu0 %v2472
    %2817 = vmatpush1.bf16.msra.mxu0 %v2471
    %2818 = vmatprep.subr.bf16.mxu0 %v2468
    %2819 = vmatpush1.bf16.msra.mxu0 %v2467
    %2820 = vmatprep.subr.bf16.mxu0 %v2464
    %2821 = vmatpush1.bf16.msra.mxu0 %v2463
    %2822 = vmatprep.subr.bf16.mxu0 %v2460
    %2823 = vmatpush1.bf16.msra.mxu0 %v2459
    %2824 = vmatprep.subr.bf16.mxu0 %v2456
    %2825 = vmatpush1.bf16.msra.mxu0 %v2455
    %2826 = vmatprep.subr.bf16.mxu0 %v2452
    %2827 = vmatpush1.bf16.msra.mxu0 %v2451
    %2828 = vmatprep.subr.bf16.mxu0 %v2448
    %2829 = vmatpush1.bf16.msra.mxu0 %v2447
    %2830 = vmatprep.subr.bf16.mxu0 0
    %2831 = vmatpush2.bf16.msra.mxu0 0
    %2832 = vmatprep.subr.bf16.mxu0 0
    %2833 = vmatpush2.bf16.msra.mxu0 0
    %2834 = vmatprep.subr.bf16.mxu0 0
    %2835 = vmatpush2.bf16.msra.mxu0 0
    %2836 = vmatprep.subr.bf16.mxu0 0
    %2837 = vmatpush2.bf16.msra.mxu0 0
    %2838 = vmatprep.subr.bf16.mxu0 0
    %2839 = vmatpush2.bf16.msra.mxu0 0
    %2840 = vmatprep.subr.bf16.mxu0 0
    %2841 = vmatpush2.bf16.msra.mxu0 0
    %2842 = vmatprep.subr.bf16.mxu0 0
    %2843 = vmatpush2.bf16.msra.mxu0 0
    %2844 = vmatprep.subr.bf16.mxu0 0
    %2845 = vmatpush2.bf16.msra.mxu0 0
    %2846 = vmatprep.mubr.bf16.mxu0 0
    %2847 = vmatmul.mubr.bf16.gmra.mxu0 %v2770
    %v2848 = vpop.f32.mrf.mxu0
    %v2849 = vadd.f32 0.0, %v2848
    %v2850 = vpop.f32.mrf.mxu0
    %v2851 = vadd.f32 0.0, %v2850
    %v2852 = vpop.f32.mrf.mxu0
    %v2853 = vadd.f32 0.0, %v2852
    %v2854 = vpop.f32.mrf.mxu0
    %v2855 = vadd.f32 0.0, %v2854
    %2856 = vdwg.mxu0
    %v2857 = vadd.f32 %v2171, %v2806
    %v2858 = vadd.f32 %v2173, %v2808
    %v2859 = vadd.f32 %v2284, %v2849
    %v2860 = vadd.f32 %v2286, %v2851
    %v2861 = vadd.f32 %v2175, %v2810
    %v2862 = vadd.f32 %v2177, %v2812
    %v2863 = vadd.f32 %v2288, %v2853
    %v2864 = vadd.f32 %v2290, %v2855
    %v2865 = vmul.f32 %v2857, 0.5
    %v2866 = vmul.f32 %v2861, 0.5
    %v2867 = vtanh.pop %v2865
    %v2868 = vtanh.pop %v2866
    %v2869 = vmul.f32 %v2867, 0.5
    %v2870 = vmul.f32 %v2868, 0.5
    %v2871 = vadd.f32 %v2869, 0.5
    %v2872 = vadd.f32 %v2870, 0.5
    %v2873 = vmul.f32 %v2858, 0.5
    %v2874 = vmul.f32 %v2862, 0.5
    %v2875 = vtanh.pop %v2873
    %v2876 = vtanh.pop %v2874
    %v2877 = vmul.f32 %v2875, 0.5
    %v2878 = vmul.f32 %v2876, 0.5
    %v2879 = vadd.f32 %v2877, 0.5
    %v2880 = vadd.f32 %v2878, 0.5
    %v2881 = vtanh.pop %v2859
    %v2882 = vtanh.pop %v2863
    %v2883 = vmul.f32 %v2860, 0.5
    %v2884 = vmul.f32 %v2864, 0.5
    %v2885 = vtanh.pop %v2883
    %v2886 = vtanh.pop %v2884
    %v2887 = vmul.f32 %v2885, 0.5
    %v2888 = vmul.f32 %v2886, 0.5
    %v2889 = vadd.f32 %v2887, 0.5
    %v2890 = vadd.f32 %v2888, 0.5
    %v2891 = vmul.f32 %v2879, %v2764
    %v2892 = vmul.f32 %v2880, %v2765
    %v2893 = vmul.f32 %v2871, %v2881
    %v2894 = vmul.f32 %v2872, %v2882
    %v2895 = vadd.f32 %v2891, %v2893
    %v2896 = vadd.f32 %v2892, %v2894
    %v2897 = vtanh.pop %v2895
    %v2898 = vtanh.pop %v2896
    %v2899 = vmul.f32 %v2889, %v2897
    %v2900 = vmul.f32 %v2890, %v2898
    %v2901 = vpack.c.bf16 %v2900, %v2899
    %2902 = vmatprep.subr.bf16.mxu0 %v2474
    %2903 = vmatpush1.bf16.msra.mxu0 %v2473
    %2904 = vmatprep.subr.bf16.mxu0 %v2470
    %2905 = vmatpush1.bf16.msra.mxu0 %v2469
    %2906 = vmatprep.subr.bf16.mxu0 %v2466
    %2907 = vmatpush1.bf16.msra.mxu0 %v2465
    %2908 = vmatprep.subr.bf16.mxu0 %v2462
    %2909 = vmatpush1.bf16.msra.mxu0 %v2461
    %2910 = vmatprep.subr.bf16.mxu0 %v2458
    %2911 = vmatpush1.bf16.msra.mxu0 %v2457
    %2912 = vmatprep.subr.bf16.mxu0 %v2454
    %2913 = vmatpush1.bf16.msra.mxu0 %v2453
    %2914 = vmatprep.subr.bf16.mxu0 %v2450
    %2915 = vmatpush1.bf16.msra.mxu0 %v2449
    %2916 = vmatprep.subr.bf16.mxu0 %v2446
    %2917 = vmatpush1.bf16.msra.mxu0 %v2445
    %2918 = vmatprep.subr.bf16.mxu0 0
    %2919 = vmatpush2.bf16.msra.mxu0 0
    %2920 = vmatprep.subr.bf16.mxu0 0
    %2921 = vmatpush2.bf16.msra.mxu0 0
    %2922 = vmatprep.subr.bf16.mxu0 0
    %2923 = vmatpush2.bf16.msra.mxu0 0
    %2924 = vmatprep.subr.bf16.mxu0 0
    %2925 = vmatpush2.bf16.msra.mxu0 0
    %2926 = vmatprep.subr.bf16.mxu0 0
    %2927 = vmatpush2.bf16.msra.mxu0 0
    %2928 = vmatprep.subr.bf16.mxu0 0
    %2929 = vmatpush2.bf16.msra.mxu0 0
    %2930 = vmatprep.subr.bf16.mxu0 0
    %2931 = vmatpush2.bf16.msra.mxu0 0
    %2932 = vmatprep.subr.bf16.mxu0 0
    %2933 = vmatpush2.bf16.msra.mxu0 0
    %2934 = vmatprep.mubr.bf16.mxu0 0
    %2935 = vmatmul.mubr.bf16.gmra.mxu0 %v2901
    %v2936 = vpop.f32.mrf.mxu0
    %v2937 = vadd.f32 0.0, %v2936
    %v2938 = vpop.f32.mrf.mxu0
    %v2939 = vadd.f32 0.0, %v2938
    %v2940 = vpop.f32.mrf.mxu0
    %v2941 = vadd.f32 0.0, %v2940
    %v2942 = vpop.f32.mrf.mxu0
    %v2943 = vadd.f32 0.0, %v2942
    %2944 = vdwg.mxu0
    %2945 = vmatprep.subr.bf16.mxu0 %v2476
    %2946 = vmatpush1.bf16.msra.mxu0 %v2475
    %2947 = vmatprep.subr.bf16.mxu0 %v2472
    %2948 = vmatpush1.bf16.msra.mxu0 %v2471
    %2949 = vmatprep.subr.bf16.mxu0 %v2468
    %2950 = vmatpush1.bf16.msra.mxu0 %v2467
    %2951 = vmatprep.subr.bf16.mxu0 %v2464
    %2952 = vmatpush1.bf16.msra.mxu0 %v2463
    %2953 = vmatprep.subr.bf16.mxu0 %v2460
    %2954 = vmatpush1.bf16.msra.mxu0 %v2459
    %2955 = vmatprep.subr.bf16.mxu0 %v2456
    %2956 = vmatpush1.bf16.msra.mxu0 %v2455
    %2957 = vmatprep.subr.bf16.mxu0 %v2452
    %2958 = vmatpush1.bf16.msra.mxu0 %v2451
    %2959 = vmatprep.subr.bf16.mxu0 %v2448
    %2960 = vmatpush1.bf16.msra.mxu0 %v2447
    %2961 = vmatprep.subr.bf16.mxu0 0
    %2962 = vmatpush2.bf16.msra.mxu0 0
    %2963 = vmatprep.subr.bf16.mxu0 0
    %2964 = vmatpush2.bf16.msra.mxu0 0
    %2965 = vmatprep.subr.bf16.mxu0 0
    %2966 = vmatpush2.bf16.msra.mxu0 0
    %2967 = vmatprep.subr.bf16.mxu0 0
    %2968 = vmatpush2.bf16.msra.mxu0 0
    %2969 = vmatprep.subr.bf16.mxu0 0
    %2970 = vmatpush2.bf16.msra.mxu0 0
    %2971 = vmatprep.subr.bf16.mxu0 0
    %2972 = vmatpush2.bf16.msra.mxu0 0
    %2973 = vmatprep.subr.bf16.mxu0 0
    %2974 = vmatpush2.bf16.msra.mxu0 0
    %2975 = vmatprep.subr.bf16.mxu0 0
    %2976 = vmatpush2.bf16.msra.mxu0 0
    %2977 = vmatprep.mubr.bf16.mxu0 0
    %2978 = vmatmul.mubr.bf16.gmra.mxu0 %v2901
    %v2979 = vpop.f32.mrf.mxu0
    %v2980 = vadd.f32 0.0, %v2979
    %v2981 = vpop.f32.mrf.mxu0
    %v2982 = vadd.f32 0.0, %v2981
    %v2983 = vpop.f32.mrf.mxu0
    %v2984 = vadd.f32 0.0, %v2983
    %v2985 = vpop.f32.mrf.mxu0
    %v2986 = vadd.f32 0.0, %v2985
    %2987 = vdwg.mxu0
    %v2988 = vadd.f32 %v2181, %v2937
    %v2989 = vadd.f32 %v2183, %v2939
    %v2990 = vadd.f32 %v2294, %v2980
    %v2991 = vadd.f32 %v2296, %v2982
    %v2992 = vadd.f32 %v2185, %v2941
    %v2993 = vadd.f32 %v2187, %v2943
    %v2994 = vadd.f32 %v2298, %v2984
    %v2995 = vadd.f32 %v2300, %v2986
    %v2996 = vmul.f32 %v2988, 0.5
    %v2997 = vmul.f32 %v2992, 0.5
    %v2998 = vtanh.pop %v2996
    %v2999 = vtanh.pop %v2997
    %v3000 = vmul.f32 %v2998, 0.5
    %v3001 = vmul.f32 %v2999, 0.5
    %v3002 = vadd.f32 %v3000, 0.5
    %v3003 = vadd.f32 %v3001, 0.5
    %v3004 = vmul.f32 %v2989, 0.5
    %v3005 = vmul.f32 %v2993, 0.5
    %v3006 = vtanh.pop %v3004
    %v3007 = vtanh.pop %v3005
    %v3008 = vmul.f32 %v3006, 0.5
    %v3009 = vmul.f32 %v3007, 0.5
    %v3010 = vadd.f32 %v3008, 0.5
    %v3011 = vadd.f32 %v3009, 0.5
    %v3012 = vtanh.pop %v2990
    %v3013 = vtanh.pop %v2994
    %v3014 = vmul.f32 %v2991, 0.5
    %v3015 = vmul.f32 %v2995, 0.5
    %v3016 = vtanh.pop %v3014
    %v3017 = vtanh.pop %v3015
    %v3018 = vmul.f32 %v3016, 0.5
    %v3019 = vmul.f32 %v3017, 0.5
    %v3020 = vadd.f32 %v3018, 0.5
    %v3021 = vadd.f32 %v3019, 0.5
    %v3022 = vmul.f32 %v3010, %v2895
    %v3023 = vmul.f32 %v3011, %v2896
    %v3024 = vmul.f32 %v3002, %v3012
    %v3025 = vmul.f32 %v3003, %v3013
    %v3026 = vadd.f32 %v3022, %v3024
    %v3027 = vadd.f32 %v3023, %v3025
    %v3028 = vtanh.pop %v3026
    %v3029 = vtanh.pop %v3027
    %v3030 = vmul.f32 %v3020, %v3028
    %v3031 = vmul.f32 %v3021, %v3029
    %v3032 = vpack.c.bf16 %v3031, %v3030
    %3033 = vmatprep.subr.bf16.mxu0 %v2474
    %3034 = vmatpush1.bf16.msra.mxu0 %v2473
    %3035 = vmatprep.subr.bf16.mxu0 %v2470
    %3036 = vmatpush1.bf16.msra.mxu0 %v2469
    %3037 = vmatprep.subr.bf16.mxu0 %v2466
    %3038 = vmatpush1.bf16.msra.mxu0 %v2465
    %3039 = vmatprep.subr.bf16.mxu0 %v2462
    %3040 = vmatpush1.bf16.msra.mxu0 %v2461
    %3041 = vmatprep.subr.bf16.mxu0 %v2458
    %3042 = vmatpush1.bf16.msra.mxu0 %v2457
    %3043 = vmatprep.subr.bf16.mxu0 %v2454
    %3044 = vmatpush1.bf16.msra.mxu0 %v2453
    %3045 = vmatprep.subr.bf16.mxu0 %v2450
    %3046 = vmatpush1.bf16.msra.mxu0 %v2449
    %3047 = vmatprep.subr.bf16.mxu0 %v2446
    %3048 = vmatpush1.bf16.msra.mxu0 %v2445
    %3049 = vmatprep.subr.bf16.mxu0 0
    %3050 = vmatpush2.bf16.msra.mxu0 0
    %3051 = vmatprep.subr.bf16.mxu0 0
    %3052 = vmatpush2.bf16.msra.mxu0 0
    %3053 = vmatprep.subr.bf16.mxu0 0
    %3054 = vmatpush2.bf16.msra.mxu0 0
    %3055 = vmatprep.subr.bf16.mxu0 0
    %3056 = vmatpush2.bf16.msra.mxu0 0
    %3057 = vmatprep.subr.bf16.mxu0 0
    %3058 = vmatpush2.bf16.msra.mxu0 0
    %3059 = vmatprep.subr.bf16.mxu0 0
    %3060 = vmatpush2.bf16.msra.mxu0 0
    %3061 = vmatprep.subr.bf16.mxu0 0
    %3062 = vmatpush2.bf16.msra.mxu0 0
    %3063 = vmatprep.subr.bf16.mxu0 0
    %3064 = vmatpush2.bf16.msra.mxu0 0
    %3065 = vmatprep.mubr.bf16.mxu0 0
    %3066 = vmatmul.mubr.bf16.gmra.mxu0 %v3032
    %v3067 = vpop.f32.mrf.mxu0
    %v3068 = vadd.f32 0.0, %v3067
    %v3069 = vpop.f32.mrf.mxu0
    %v3070 = vadd.f32 0.0, %v3069
    %v3071 = vpop.f32.mrf.mxu0
    %v3072 = vadd.f32 0.0, %v3071
    %v3073 = vpop.f32.mrf.mxu0
    %v3074 = vadd.f32 0.0, %v3073
    %3075 = vdwg.mxu0
    %3076 = vmatprep.subr.bf16.mxu0 %v2476
    %3077 = vmatpush1.bf16.msra.mxu0 %v2475
    %3078 = vmatprep.subr.bf16.mxu0 %v2472
    %3079 = vmatpush1.bf16.msra.mxu0 %v2471
    %3080 = vmatprep.subr.bf16.mxu0 %v2468
    %3081 = vmatpush1.bf16.msra.mxu0 %v2467
    %3082 = vmatprep.subr.bf16.mxu0 %v2464
    %3083 = vmatpush1.bf16.msra.mxu0 %v2463
    %3084 = vmatprep.subr.bf16.mxu0 %v2460
    %3085 = vmatpush1.bf16.msra.mxu0 %v2459
    %3086 = vmatprep.subr.bf16.mxu0 %v2456
    %3087 = vmatpush1.bf16.msra.mxu0 %v2455
    %3088 = vmatprep.subr.bf16.mxu0 %v2452
    %3089 = vmatpush1.bf16.msra.mxu0 %v2451
    %3090 = vmatprep.subr.bf16.mxu0 %v2448
    %3091 = vmatpush1.bf16.msra.mxu0 %v2447
    %3092 = vmatprep.subr.bf16.mxu0 0
    %3093 = vmatpush2.bf16.msra.mxu0 0
    %3094 = vmatprep.subr.bf16.mxu0 0
    %3095 = vmatpush2.bf16.msra.mxu0 0
    %3096 = vmatprep.subr.bf16.mxu0 0
    %3097 = vmatpush2.bf16.msra.mxu0 0
    %3098 = vmatprep.subr.bf16.mxu0 0
    %3099 = vmatpush2.bf16.msra.mxu0 0
    %3100 = vmatprep.subr.bf16.mxu0 0
    %3101 = vmatpush2.bf16.msra.mxu0 0
    %3102 = vmatprep.subr.bf16.mxu0 0
    %3103 = vmatpush2.bf16.msra.mxu0 0
    %3104 = vmatprep.subr.bf16.mxu0 0
    %3105 = vmatpush2.bf16.msra.mxu0 0
    %3106 = vmatprep.subr.bf16.mxu0 0
    %3107 = vmatpush2.bf16.msra.mxu0 0
    %3108 = vmatprep.mubr.bf16.mxu0 0
    %3109 = vmatmul.mubr.bf16.gmra.mxu0 %v3032
    %v3110 = vpop.f32.mrf.mxu0
    %v3111 = vadd.f32 0.0, %v3110
    %v3112 = vpop.f32.mrf.mxu0
    %v3113 = vadd.f32 0.0, %v3112
    %v3114 = vpop.f32.mrf.mxu0
    %v3115 = vadd.f32 0.0, %v3114
    %v3116 = vpop.f32.mrf.mxu0
    %v3117 = vadd.f32 0.0, %v3116
    %3118 = vdwg.mxu0
    %v3119 = vadd.f32 %v2191, %v3068
    %v3120 = vadd.f32 %v2193, %v3070
    %v3121 = vadd.f32 %v2304, %v3111
    %v3122 = vadd.f32 %v2306, %v3113
    %v3123 = vadd.f32 %v2195, %v3072
    %v3124 = vadd.f32 %v2197, %v3074
    %v3125 = vadd.f32 %v2308, %v3115
    %v3126 = vadd.f32 %v2310, %v3117
    %v3127 = vmul.f32 %v3119, 0.5
    %v3128 = vmul.f32 %v3123, 0.5
    %v3129 = vtanh.pop %v3127
    %v3130 = vtanh.pop %v3128
    %v3131 = vmul.f32 %v3129, 0.5
    %v3132 = vmul.f32 %v3130, 0.5
    %v3133 = vadd.f32 %v3131, 0.5
    %v3134 = vadd.f32 %v3132, 0.5
    %v3135 = vmul.f32 %v3120, 0.5
    %v3136 = vmul.f32 %v3124, 0.5
    %v3137 = vtanh.pop %v3135
    %v3138 = vtanh.pop %v3136
    %v3139 = vmul.f32 %v3137, 0.5
    %v3140 = vmul.f32 %v3138, 0.5
    %v3141 = vadd.f32 %v3139, 0.5
    %v3142 = vadd.f32 %v3140, 0.5
    %v3143 = vtanh.pop %v3121
    %v3144 = vtanh.pop %v3125
    %v3145 = vmul.f32 %v3122, 0.5
    %v3146 = vmul.f32 %v3126, 0.5
    %v3147 = vtanh.pop %v3145
    %v3148 = vtanh.pop %v3146
    %v3149 = vmul.f32 %v3147, 0.5
    %v3150 = vmul.f32 %v3148, 0.5
    %v3151 = vadd.f32 %v3149, 0.5
    %v3152 = vadd.f32 %v3150, 0.5
    %v3153 = vmul.f32 %v3141, %v3026
    %v3154 = vmul.f32 %v3142, %v3027
    %v3155 = vmul.f32 %v3133, %v3143
    %v3156 = vmul.f32 %v3134, %v3144
    %v3157 = vadd.f32 %v3153, %v3155
    %v3158 = vadd.f32 %v3154, %v3156
    %v3159 = vtanh.pop %v3157
    %v3160 = vtanh.pop %v3158
    %v3161 = vmul.f32 %v3151, %v3159
    %v3162 = vmul.f32 %v3152, %v3160
    %v3163 = vpack.c.bf16 %v3162, %v3161
    %3164 = vmatprep.subr.bf16.mxu0 %v2474
    %3165 = vmatpush1.bf16.msra.mxu0 %v2473
    %3166 = vmatprep.subr.bf16.mxu0 %v2470
    %3167 = vmatpush1.bf16.msra.mxu0 %v2469
    %3168 = vmatprep.subr.bf16.mxu0 %v2466
    %3169 = vmatpush1.bf16.msra.mxu0 %v2465
    %3170 = vmatprep.subr.bf16.mxu0 %v2462
    %3171 = vmatpush1.bf16.msra.mxu0 %v2461
    %3172 = vmatprep.subr.bf16.mxu0 %v2458
    %3173 = vmatpush1.bf16.msra.mxu0 %v2457
    %3174 = vmatprep.subr.bf16.mxu0 %v2454
    %3175 = vmatpush1.bf16.msra.mxu0 %v2453
    %3176 = vmatprep.subr.bf16.mxu0 %v2450
    %3177 = vmatpush1.bf16.msra.mxu0 %v2449
    %3178 = vmatprep.subr.bf16.mxu0 %v2446
    %3179 = vmatpush1.bf16.msra.mxu0 %v2445
    %3180 = vmatprep.subr.bf16.mxu0 0
    %3181 = vmatpush2.bf16.msra.mxu0 0
    %3182 = vmatprep.subr.bf16.mxu0 0
    %3183 = vmatpush2.bf16.msra.mxu0 0
    %3184 = vmatprep.subr.bf16.mxu0 0
    %3185 = vmatpush2.bf16.msra.mxu0 0
    %3186 = vmatprep.subr.bf16.mxu0 0
    %3187 = vmatpush2.bf16.msra.mxu0 0
    %3188 = vmatprep.subr.bf16.mxu0 0
    %3189 = vmatpush2.bf16.msra.mxu0 0
    %3190 = vmatprep.subr.bf16.mxu0 0
    %3191 = vmatpush2.bf16.msra.mxu0 0
    %3192 = vmatprep.subr.bf16.mxu0 0
    %3193 = vmatpush2.bf16.msra.mxu0 0
    %3194 = vmatprep.subr.bf16.mxu0 0
    %3195 = vmatpush2.bf16.msra.mxu0 0
    %3196 = vmatprep.mubr.bf16.mxu0 0
    %3197 = vmatmul.mubr.bf16.gmra.mxu0 %v3163
    %v3198 = vpop.f32.mrf.mxu0
    %v3199 = vadd.f32 0.0, %v3198
    %v3200 = vpop.f32.mrf.mxu0
    %v3201 = vadd.f32 0.0, %v3200
    %v3202 = vpop.f32.mrf.mxu0
    %v3203 = vadd.f32 0.0, %v3202
    %v3204 = vpop.f32.mrf.mxu0
    %v3205 = vadd.f32 0.0, %v3204
    %3206 = vdwg.mxu0
    %3207 = vmatprep.subr.bf16.mxu0 %v2476
    %3208 = vmatpush1.bf16.msra.mxu0 %v2475
    %3209 = vmatprep.subr.bf16.mxu0 %v2472
    %3210 = vmatpush1.bf16.msra.mxu0 %v2471
    %3211 = vmatprep.subr.bf16.mxu0 %v2468
    %3212 = vmatpush1.bf16.msra.mxu0 %v2467
    %3213 = vmatprep.subr.bf16.mxu0 %v2464
    %3214 = vmatpush1.bf16.msra.mxu0 %v2463
    %3215 = vmatprep.subr.bf16.mxu0 %v2460
    %3216 = vmatpush1.bf16.msra.mxu0 %v2459
    %3217 = vmatprep.subr.bf16.mxu0 %v2456
    %3218 = vmatpush1.bf16.msra.mxu0 %v2455
    %3219 = vmatprep.subr.bf16.mxu0 %v2452
    %3220 = vmatpush1.bf16.msra.mxu0 %v2451
    %3221 = vmatprep.subr.bf16.mxu0 %v2448
    %3222 = vmatpush1.bf16.msra.mxu0 %v2447
    %3223 = vmatprep.subr.bf16.mxu0 0
    %3224 = vmatpush2.bf16.msra.mxu0 0
    %3225 = vmatprep.subr.bf16.mxu0 0
    %3226 = vmatpush2.bf16.msra.mxu0 0
    %3227 = vmatprep.subr.bf16.mxu0 0
    %3228 = vmatpush2.bf16.msra.mxu0 0
    %3229 = vmatprep.subr.bf16.mxu0 0
    %3230 = vmatpush2.bf16.msra.mxu0 0
    %3231 = vmatprep.subr.bf16.mxu0 0
    %3232 = vmatpush2.bf16.msra.mxu0 0
    %3233 = vmatprep.subr.bf16.mxu0 0
    %3234 = vmatpush2.bf16.msra.mxu0 0
    %3235 = vmatprep.subr.bf16.mxu0 0
    %3236 = vmatpush2.bf16.msra.mxu0 0
    %3237 = vmatprep.subr.bf16.mxu0 0
    %3238 = vmatpush2.bf16.msra.mxu0 0
    %3239 = vmatprep.mubr.bf16.mxu0 0
    %3240 = vmatmul.mubr.bf16.gmra.mxu0 %v3163
    %v3241 = vpop.f32.mrf.mxu0
    %v3242 = vadd.f32 0.0, %v3241
    %v3243 = vpop.f32.mrf.mxu0
    %v3244 = vadd.f32 0.0, %v3243
    %v3245 = vpop.f32.mrf.mxu0
    %v3246 = vadd.f32 0.0, %v3245
    %v3247 = vpop.f32.mrf.mxu0
    %v3248 = vadd.f32 0.0, %v3247
    %3249 = vdwg.mxu0
    %v3250 = vadd.f32 %v2201, %v3199
    %v3251 = vadd.f32 %v2203, %v3201
    %v3252 = vadd.f32 %v2314, %v3242
    %v3253 = vadd.f32 %v2316, %v3244
    %v3254 = vadd.f32 %v2205, %v3203
    %v3255 = vadd.f32 %v2207, %v3205
    %v3256 = vadd.f32 %v2318, %v3246
    %v3257 = vadd.f32 %v2320, %v3248
    %v3258 = vmul.f32 %v3250, 0.5
    %v3259 = vmul.f32 %v3254, 0.5
    %v3260 = vtanh.pop %v3258
    %v3261 = vtanh.pop %v3259
    %v3262 = vmul.f32 %v3260, 0.5
    %v3263 = vmul.f32 %v3261, 0.5
    %v3264 = vadd.f32 %v3262, 0.5
    %v3265 = vadd.f32 %v3263, 0.5
    %v3266 = vmul.f32 %v3251, 0.5
    %v3267 = vmul.f32 %v3255, 0.5
    %v3268 = vtanh.pop %v3266
    %v3269 = vtanh.pop %v3267
    %v3270 = vmul.f32 %v3268, 0.5
    %v3271 = vmul.f32 %v3269, 0.5
    %v3272 = vadd.f32 %v3270, 0.5
    %v3273 = vadd.f32 %v3271, 0.5
    %v3274 = vtanh.pop %v3252
    %v3275 = vtanh.pop %v3256
    %v3276 = vmul.f32 %v3253, 0.5
    %v3277 = vmul.f32 %v3257, 0.5
    %v3278 = vtanh.pop %v3276
    %v3279 = vtanh.pop %v3277
    %v3280 = vmul.f32 %v3278, 0.5
    %v3281 = vmul.f32 %v3279, 0.5
    %v3282 = vadd.f32 %v3280, 0.5
    %v3283 = vadd.f32 %v3281, 0.5
    %v3284 = vmul.f32 %v3272, %v3157
    %v3285 = vmul.f32 %v3273, %v3158
    %v3286 = vmul.f32 %v3264, %v3274
    %v3287 = vmul.f32 %v3265, %v3275
    %v3288 = vadd.f32 %v3284, %v3286
    %v3289 = vadd.f32 %v3285, %v3287
    %v3290 = vtanh.pop %v3288
    %v3291 = vtanh.pop %v3289
    %v3292 = vmul.f32 %v3282, %v3290
    %v3293 = vmul.f32 %v3283, %v3291
    %v3294 = vpack.c.bf16 %v3293, %v3292
    %3295 = vmatprep.subr.bf16.mxu0 %v2474
    %3296 = vmatpush1.bf16.msra.mxu0 %v2473
    %3297 = vmatprep.subr.bf16.mxu0 %v2470
    %3298 = vmatpush1.bf16.msra.mxu0 %v2469
    %3299 = vmatprep.subr.bf16.mxu0 %v2466
    %3300 = vmatpush1.bf16.msra.mxu0 %v2465
    %3301 = vmatprep.subr.bf16.mxu0 %v2462
    %3302 = vmatpush1.bf16.msra.mxu0 %v2461
    %3303 = vmatprep.subr.bf16.mxu0 %v2458
    %3304 = vmatpush1.bf16.msra.mxu0 %v2457
    %3305 = vmatprep.subr.bf16.mxu0 %v2454
    %3306 = vmatpush1.bf16.msra.mxu0 %v2453
    %3307 = vmatprep.subr.bf16.mxu0 %v2450
    %3308 = vmatpush1.bf16.msra.mxu0 %v2449
    %3309 = vmatprep.subr.bf16.mxu0 %v2446
    %3310 = vmatpush1.bf16.msra.mxu0 %v2445
    %3311 = vmatprep.subr.bf16.mxu0 0
    %3312 = vmatpush2.bf16.msra.mxu0 0
    %3313 = vmatprep.subr.bf16.mxu0 0
    %3314 = vmatpush2.bf16.msra.mxu0 0
    %3315 = vmatprep.subr.bf16.mxu0 0
    %3316 = vmatpush2.bf16.msra.mxu0 0
    %3317 = vmatprep.subr.bf16.mxu0 0
    %3318 = vmatpush2.bf16.msra.mxu0 0
    %3319 = vmatprep.subr.bf16.mxu0 0
    %3320 = vmatpush2.bf16.msra.mxu0 0
    %3321 = vmatprep.subr.bf16.mxu0 0
    %3322 = vmatpush2.bf16.msra.mxu0 0
    %3323 = vmatprep.subr.bf16.mxu0 0
    %3324 = vmatpush2.bf16.msra.mxu0 0
    %3325 = vmatprep.subr.bf16.mxu0 0
    %3326 = vmatpush2.bf16.msra.mxu0 0
    %3327 = vmatprep.mubr.bf16.mxu0 0
    %3328 = vmatmul.mubr.bf16.gmra.mxu0 %v3294
    %v3329 = vpop.f32.mrf.mxu0
    %v3330 = vadd.f32 0.0, %v3329
    %v3331 = vpop.f32.mrf.mxu0
    %v3332 = vadd.f32 0.0, %v3331
    %v3333 = vpop.f32.mrf.mxu0
    %v3334 = vadd.f32 0.0, %v3333
    %v3335 = vpop.f32.mrf.mxu0
    %v3336 = vadd.f32 0.0, %v3335
    %3337 = vdwg.mxu0
    %3338 = vmatprep.subr.bf16.mxu0 %v2476
    %3339 = vmatpush1.bf16.msra.mxu0 %v2475
    %3340 = vmatprep.subr.bf16.mxu0 %v2472
    %3341 = vmatpush1.bf16.msra.mxu0 %v2471
    %3342 = vmatprep.subr.bf16.mxu0 %v2468
    %3343 = vmatpush1.bf16.msra.mxu0 %v2467
    %3344 = vmatprep.subr.bf16.mxu0 %v2464
    %3345 = vmatpush1.bf16.msra.mxu0 %v2463
    %3346 = vmatprep.subr.bf16.mxu0 %v2460
    %3347 = vmatpush1.bf16.msra.mxu0 %v2459
    %3348 = vmatprep.subr.bf16.mxu0 %v2456
    %3349 = vmatpush1.bf16.msra.mxu0 %v2455
    %3350 = vmatprep.subr.bf16.mxu0 %v2452
    %3351 = vmatpush1.bf16.msra.mxu0 %v2451
    %3352 = vmatprep.subr.bf16.mxu0 %v2448
    %3353 = vmatpush1.bf16.msra.mxu0 %v2447
    %3354 = vmatprep.subr.bf16.mxu0 0
    %3355 = vmatpush2.bf16.msra.mxu0 0
    %3356 = vmatprep.subr.bf16.mxu0 0
    %3357 = vmatpush2.bf16.msra.mxu0 0
    %3358 = vmatprep.subr.bf16.mxu0 0
    %3359 = vmatpush2.bf16.msra.mxu0 0
    %3360 = vmatprep.subr.bf16.mxu0 0
    %3361 = vmatpush2.bf16.msra.mxu0 0
    %3362 = vmatprep.subr.bf16.mxu0 0
    %3363 = vmatpush2.bf16.msra.mxu0 0
    %3364 = vmatprep.subr.bf16.mxu0 0
    %3365 = vmatpush2.bf16.msra.mxu0 0
    %3366 = vmatprep.subr.bf16.mxu0 0
    %3367 = vmatpush2.bf16.msra.mxu0 0
    %3368 = vmatprep.subr.bf16.mxu0 0
    %3369 = vmatpush2.bf16.msra.mxu0 0
    %3370 = vmatprep.mubr.bf16.mxu0 0
    %3371 = vmatmul.mubr.bf16.gmra.mxu0 %v3294
    %v3372 = vpop.f32.mrf.mxu0
    %v3373 = vadd.f32 0.0, %v3372
    %v3374 = vpop.f32.mrf.mxu0
    %v3375 = vadd.f32 0.0, %v3374
    %v3376 = vpop.f32.mrf.mxu0
    %v3377 = vadd.f32 0.0, %v3376
    %v3378 = vpop.f32.mrf.mxu0
    %v3379 = vadd.f32 0.0, %v3378
    %3380 = vdwg.mxu0
    %v3381 = vadd.f32 %v2211, %v3330
    %v3382 = vadd.f32 %v2213, %v3332
    %v3383 = vadd.f32 %v2324, %v3373
    %v3384 = vadd.f32 %v2326, %v3375
    %v3385 = vadd.f32 %v2215, %v3334
    %v3386 = vadd.f32 %v2217, %v3336
    %v3387 = vadd.f32 %v2328, %v3377
    %v3388 = vadd.f32 %v2330, %v3379
    %v3389 = vmul.f32 %v3381, 0.5
    %v3390 = vmul.f32 %v3385, 0.5
    %v3391 = vtanh.pop %v3389
    %v3392 = vtanh.pop %v3390
    %v3393 = vmul.f32 %v3391, 0.5
    %v3394 = vmul.f32 %v3392, 0.5
    %v3395 = vadd.f32 %v3393, 0.5
    %v3396 = vadd.f32 %v3394, 0.5
    %v3397 = vmul.f32 %v3382, 0.5
    %v3398 = vmul.f32 %v3386, 0.5
    %v3399 = vtanh.pop %v3397
    %v3400 = vtanh.pop %v3398
    %v3401 = vmul.f32 %v3399, 0.5
    %v3402 = vmul.f32 %v3400, 0.5
    %v3403 = vadd.f32 %v3401, 0.5
    %v3404 = vadd.f32 %v3402, 0.5
    %v3405 = vtanh.pop %v3383
    %v3406 = vtanh.pop %v3387
    %v3407 = vmul.f32 %v3384, 0.5
    %v3408 = vmul.f32 %v3388, 0.5
    %v3409 = vtanh.pop %v3407
    %v3410 = vtanh.pop %v3408
    %v3411 = vmul.f32 %v3409, 0.5
    %v3412 = vmul.f32 %v3410, 0.5
    %v3413 = vadd.f32 %v3411, 0.5
    %v3414 = vadd.f32 %v3412, 0.5
    %v3415 = vmul.f32 %v3403, %v3288
    %v3416 = vmul.f32 %v3404, %v3289
    %v3417 = vmul.f32 %v3395, %v3405
    %v3418 = vmul.f32 %v3396, %v3406
    %v3419 = vadd.f32 %v3415, %v3417
    %v3420 = vadd.f32 %v3416, %v3418
    %v3421 = vtanh.pop %v3419
    %v3422 = vtanh.pop %v3420
    %v3423 = vmul.f32 %v3413, %v3421
    %v3424 = vmul.f32 %v3414, %v3422
    %v3425 = vpack.c.bf16 %v3424, %v3423
    %3426 = vmatprep.subr.bf16.mxu0 %v2474
    %3427 = vmatpush1.bf16.msra.mxu0 %v2473
    %3428 = vmatprep.subr.bf16.mxu0 %v2470
    %3429 = vmatpush1.bf16.msra.mxu0 %v2469
    %3430 = vmatprep.subr.bf16.mxu0 %v2466
    %3431 = vmatpush1.bf16.msra.mxu0 %v2465
    %3432 = vmatprep.subr.bf16.mxu0 %v2462
    %3433 = vmatpush1.bf16.msra.mxu0 %v2461
    %3434 = vmatprep.subr.bf16.mxu0 %v2458
    %3435 = vmatpush1.bf16.msra.mxu0 %v2457
    %3436 = vmatprep.subr.bf16.mxu0 %v2454
    %3437 = vmatpush1.bf16.msra.mxu0 %v2453
    %3438 = vmatprep.subr.bf16.mxu0 %v2450
    %3439 = vmatpush1.bf16.msra.mxu0 %v2449
    %3440 = vmatprep.subr.bf16.mxu0 %v2446
    %3441 = vmatpush1.bf16.msra.mxu0 %v2445
    %3442 = vmatprep.subr.bf16.mxu0 0
    %3443 = vmatpush2.bf16.msra.mxu0 0
    %3444 = vmatprep.subr.bf16.mxu0 0
    %3445 = vmatpush2.bf16.msra.mxu0 0
    %3446 = vmatprep.subr.bf16.mxu0 0
    %3447 = vmatpush2.bf16.msra.mxu0 0
    %3448 = vmatprep.subr.bf16.mxu0 0
    %3449 = vmatpush2.bf16.msra.mxu0 0
    %3450 = vmatprep.subr.bf16.mxu0 0
    %3451 = vmatpush2.bf16.msra.mxu0 0
    %3452 = vmatprep.subr.bf16.mxu0 0
    %3453 = vmatpush2.bf16.msra.mxu0 0
    %3454 = vmatprep.subr.bf16.mxu0 0
    %3455 = vmatpush2.bf16.msra.mxu0 0
    %3456 = vmatprep.subr.bf16.mxu0 0
    %3457 = vmatpush2.bf16.msra.mxu0 0
    %3458 = vmatprep.mubr.bf16.mxu0 0
    %3459 = vmatmul.mubr.bf16.gmra.mxu0 %v3425
    %v3460 = vpop.f32.mrf.mxu0
    %v3461 = vadd.f32 0.0, %v3460
    %v3462 = vpop.f32.mrf.mxu0
    %v3463 = vadd.f32 0.0, %v3462
    %v3464 = vpop.f32.mrf.mxu0
    %v3465 = vadd.f32 0.0, %v3464
    %v3466 = vpop.f32.mrf.mxu0
    %v3467 = vadd.f32 0.0, %v3466
    %3468 = vdwg.mxu0
    %3469 = vmatprep.subr.bf16.mxu0 %v2476
    %3470 = vmatpush1.bf16.msra.mxu0 %v2475
    %3471 = vmatprep.subr.bf16.mxu0 %v2472
    %3472 = vmatpush1.bf16.msra.mxu0 %v2471
    %3473 = vmatprep.subr.bf16.mxu0 %v2468
    %3474 = vmatpush1.bf16.msra.mxu0 %v2467
    %3475 = vmatprep.subr.bf16.mxu0 %v2464
    %3476 = vmatpush1.bf16.msra.mxu0 %v2463
    %3477 = vmatprep.subr.bf16.mxu0 %v2460
    %3478 = vmatpush1.bf16.msra.mxu0 %v2459
    %3479 = vmatprep.subr.bf16.mxu0 %v2456
    %3480 = vmatpush1.bf16.msra.mxu0 %v2455
    %3481 = vmatprep.subr.bf16.mxu0 %v2452
    %3482 = vmatpush1.bf16.msra.mxu0 %v2451
    %3483 = vmatprep.subr.bf16.mxu0 %v2448
    %3484 = vmatpush1.bf16.msra.mxu0 %v2447
    %3485 = vmatprep.subr.bf16.mxu0 0
    %3486 = vmatpush2.bf16.msra.mxu0 0
    %3487 = vmatprep.subr.bf16.mxu0 0
    %3488 = vmatpush2.bf16.msra.mxu0 0
    %3489 = vmatprep.subr.bf16.mxu0 0
    %3490 = vmatpush2.bf16.msra.mxu0 0
    %3491 = vmatprep.subr.bf16.mxu0 0
    %3492 = vmatpush2.bf16.msra.mxu0 0
    %3493 = vmatprep.subr.bf16.mxu0 0
    %3494 = vmatpush2.bf16.msra.mxu0 0
    %3495 = vmatprep.subr.bf16.mxu0 0
    %3496 = vmatpush2.bf16.msra.mxu0 0
    %3497 = vmatprep.subr.bf16.mxu0 0
    %3498 = vmatpush2.bf16.msra.mxu0 0
    %3499 = vmatprep.subr.bf16.mxu0 0
    %3500 = vmatpush2.bf16.msra.mxu0 0
    %3501 = vmatprep.mubr.bf16.mxu0 0
    %3502 = vmatmul.mubr.bf16.gmra.mxu0 %v3425
    %v3503 = vpop.f32.mrf.mxu0
    %v3504 = vadd.f32 0.0, %v3503
    %v3505 = vpop.f32.mrf.mxu0
    %v3506 = vadd.f32 0.0, %v3505
    %v3507 = vpop.f32.mrf.mxu0
    %v3508 = vadd.f32 0.0, %v3507
    %v3509 = vpop.f32.mrf.mxu0
    %v3510 = vadd.f32 0.0, %v3509
    %3511 = vdwg.mxu0
    %v3512 = vadd.f32 %v2221, %v3461
    %v3513 = vadd.f32 %v2223, %v3463
    %v3514 = vadd.f32 %v2334, %v3504
    %v3515 = vadd.f32 %v2336, %v3506
    %v3516 = vadd.f32 %v2225, %v3465
    %v3517 = vadd.f32 %v2227, %v3467
    %v3518 = vadd.f32 %v2338, %v3508
    %v3519 = vadd.f32 %v2340, %v3510
    %v3520 = vmul.f32 %v3512, 0.5
    %v3521 = vmul.f32 %v3516, 0.5
    %v3522 = vtanh.pop %v3520
    %v3523 = vtanh.pop %v3521
    %v3524 = vmul.f32 %v3522, 0.5
    %v3525 = vmul.f32 %v3523, 0.5
    %v3526 = vadd.f32 %v3524, 0.5
    %v3527 = vadd.f32 %v3525, 0.5
    %v3528 = vmul.f32 %v3513, 0.5
    %v3529 = vmul.f32 %v3517, 0.5
    %v3530 = vtanh.pop %v3528
    %v3531 = vtanh.pop %v3529
    %v3532 = vmul.f32 %v3530, 0.5
    %v3533 = vmul.f32 %v3531, 0.5
    %v3534 = vadd.f32 %v3532, 0.5
    %v3535 = vadd.f32 %v3533, 0.5
    %v3536 = vtanh.pop %v3514
    %v3537 = vtanh.pop %v3518
    %v3538 = vmul.f32 %v3515, 0.5
    %v3539 = vmul.f32 %v3519, 0.5
    %v3540 = vtanh.pop %v3538
    %v3541 = vtanh.pop %v3539
    %v3542 = vmul.f32 %v3540, 0.5
    %v3543 = vmul.f32 %v3541, 0.5
    %v3544 = vadd.f32 %v3542, 0.5
    %v3545 = vadd.f32 %v3543, 0.5
    %v3546 = vmul.f32 %v3534, %v3419
    %v3547 = vmul.f32 %v3535, %v3420
    %v3548 = vmul.f32 %v3526, %v3536
    %v3549 = vmul.f32 %v3527, %v3537
    %v3550 = vadd.f32 %v3546, %v3548
    %v3551 = vadd.f32 %v3547, %v3549
    %v3552 = vtanh.pop %v3550
    %v3553 = vtanh.pop %v3551
    %v3554 = vmul.f32 %v3544, %v3552
    %v3555 = vmul.f32 %v3545, %v3553
    %3556 = vst [vmem:[%s2342] sm:$0xff] %v3554
    %3557 = vst [vmem:[%s2342 + $0x8] sm:$0xff] %v3555
    %3558 = vst [vmem:[%s2345] sm:$0xff] %v3550
    %3559 = vst [vmem:[%s2345 + $0x8] sm:$0xff] %v3551
    // Predicated region
    $region70: #{tpu_custom_call.1} parent=1 // pred_check
      %p3560 = pneg %p112
    $region71: #{tpu_custom_call.1} parent=1 // pred_check_branch
      %3562 = sbr.rel (%p3560) target = $region73
    $region72: #{tpu_custom_call.1} parent=1 // pred_region
      %v3563 = vpack.c.bf16 %v3555, %v3554
      %v3564 = vld [vmem:[%s9] sm:$0xf]
      %v3565 = vld [vmem:[%s9 + $0x4] sm:$0xf]
      %v3566 = vld [vmem:[%s9 + $0x8] sm:$0xf]
      %v3567 = vld [vmem:[%s9 + $0xc] sm:$0xf]
      %v3568 = vld [vmem:[%s9 + $0x10] sm:$0xf]
      %v3569 = vld [vmem:[%s9 + $0x14] sm:$0xf]
      %v3570 = vld [vmem:[%s9 + $0x18] sm:$0xf]
      %v3571 = vld [vmem:[%s9 + $0x1c] sm:$0xf]
      %v3572 = vld [vmem:[%s9 + $0x20] sm:$0xf]
      %v3573 = vld [vmem:[%s9 + $0x24] sm:$0xf]
      %v3574 = vld [vmem:[%s9 + $0x28] sm:$0xf]
      %v3575 = vld [vmem:[%s9 + $0x2c] sm:$0xf]
      %v3576 = vld [vmem:[%s9 + $0x30] sm:$0xf]
      %v3577 = vld [vmem:[%s9 + $0x34] sm:$0xf]
      %v3578 = vld [vmem:[%s9 + $0x38] sm:$0xf]
      %v3579 = vld [vmem:[%s9 + $0x3c] sm:$0xf]
      %v3580 = vld [vmem:[%s10] sm:$0x1]
      %v3582 = vlaneseq
      %v3583 = vshrl.u32 %v3582, 7
      %v3584 = vsub.s32 0, %v3583
      %v3585 = vrot.slane %v3580, %v3584
      %v3603 = vunpack.c.l.b16 %v3564
      %v3604 = vunpack.c.l.b16 %v3565
      %v3605 = vunpack.c.l.b16 %v3566
      %v3606 = vunpack.c.l.b16 %v3567
      %v3607 = vunpack.c.l.b16 %v3568
      %v3608 = vunpack.c.l.b16 %v3569
      %v3609 = vunpack.c.l.b16 %v3570
      %v3610 = vunpack.c.l.b16 %v3571
      %v3611 = vunpack.c.l.b16 %v3572
      %v3612 = vunpack.c.l.b16 %v3573
      %v3613 = vunpack.c.l.b16 %v3574
      %v3614 = vunpack.c.l.b16 %v3575
      %v3615 = vunpack.c.l.b16 %v3576
      %v3616 = vunpack.c.l.b16 %v3577
      %v3617 = vunpack.c.l.b16 %v3578
      %v3618 = vunpack.c.l.b16 %v3579
      %v3619 = vpack.c.b16 %v3604, %v3603
      %v3620 = vpack.c.b16 %v3606, %v3605
      %v3621 = vpack.c.b16 %v3608, %v3607
      %v3622 = vpack.c.b16 %v3610, %v3609
      %v3623 = vpack.c.b16 %v3612, %v3611
      %v3624 = vpack.c.b16 %v3614, %v3613
      %v3625 = vpack.c.b16 %v3616, %v3615
      %v3626 = vpack.c.b16 %v3618, %v3617
      %3635 = vmatprep.subr.bf16.mxu0 0
      %3636 = vmatpush1.bf16.msra.mxu0 %v3626
      %3637 = vmatprep.subr.bf16.mxu0 0
      %3638 = vmatpush1.bf16.msra.mxu0 %v3625
      %3639 = vmatprep.subr.bf16.mxu0 0
      %3640 = vmatpush1.bf16.msra.mxu0 %v3624
      %3641 = vmatprep.subr.bf16.mxu0 0
      %3642 = vmatpush1.bf16.msra.mxu0 %v3623
      %3643 = vmatprep.subr.bf16.mxu0 0
      %3644 = vmatpush1.bf16.msra.mxu0 %v3622
      %3645 = vmatprep.subr.bf16.mxu0 0
      %3646 = vmatpush1.bf16.msra.mxu0 %v3621
      %3647 = vmatprep.subr.bf16.mxu0 0
      %3648 = vmatpush1.bf16.msra.mxu0 %v3620
      %3649 = vmatprep.subr.bf16.mxu0 0
      %3650 = vmatpush1.bf16.msra.mxu0 %v3619
      %3651 = vmatprep.subr.bf16.mxu0 0
      %3652 = vmatpush2.bf16.msra.mxu0 0
      %3653 = vmatprep.subr.bf16.mxu0 0
      %3654 = vmatpush2.bf16.msra.mxu0 0
      %3655 = vmatprep.subr.bf16.mxu0 0
      %3656 = vmatpush2.bf16.msra.mxu0 0
      %3657 = vmatprep.subr.bf16.mxu0 0
      %3658 = vmatpush2.bf16.msra.mxu0 0
      %3659 = vmatprep.subr.bf16.mxu0 0
      %3660 = vmatpush2.bf16.msra.mxu0 0
      %3661 = vmatprep.subr.bf16.mxu0 0
      %3662 = vmatpush2.bf16.msra.mxu0 0
      %3663 = vmatprep.subr.bf16.mxu0 0
      %3664 = vmatpush2.bf16.msra.mxu0 0
      %3665 = vmatprep.subr.bf16.mxu0 0
      %3666 = vmatpush2.bf16.msra.mxu0 0
      %3667 = vmatprep.mubr.bf16.mxu0 0
      %3668 = vmatmul.mubr.bf16.gmra.mxu0 %v3563
      %v3669 = vpop.f32.mrf.mxu0
      %v3670 = vadd.f32 %v3585, %v3669
      %v3671 = vpop.f32.mrf.mxu0
      %v3672 = vpop.f32.mrf.mxu0
      %v3673 = vadd.f32 %v3585, %v3672
      %v3674 = vpop.f32.mrf.mxu0
      %3675 = vdwg.mxu0
      %3676 = vst [vmem:[#allocation12] sm:$0xff] %v3670
      %3677 = vst [vmem:[#allocation12 + $0x8] sm:$0xff] %v3673
    $region73: #{tpu_custom_call.1} parent=1 // pred_fallthru
      _
    // Predicated region
    $region74: #{tpu_custom_call.1} parent=1 // pred_check
      _
    $region75: #{tpu_custom_call.1} parent=1 // pred_check_branch
      %3679 = sbr.rel (0) target = $region77
    $region76: #{tpu_custom_call.1} parent=1 // pred_region
      %s3681 = ssub.s32 256, 256
      %3682 = vsyncadd [#allocation5], %s3681
      %s3683 = sshll.u32 [#allocation12], 4
      %s3684 = int_to_ptr.vmem [resolvable:$true] %s3683
      %3689 = dma.vmem_to_hbm [thread:$0]  %s3684, 256, %s11, [#allocation5], 128, 128, 8
    $region77: #{tpu_custom_call.1} parent=1 // pred_fallthru
      _
    // Predicated region
    $region78: #{tpu_custom_call.1} parent=1 // pred_check
      _
    $region79: #{tpu_custom_call.1} parent=1 // pred_check_branch
      %3691 = sbr.rel (0) target = $region81
    $region80: #{tpu_custom_call.1} parent=1 // pred_region
      %s3693 = ssub.s32 512, 512
      %3694 = vsyncadd [#allocation14], %s3693
      %s3695 = sshll.u32 [#allocation13], 4
      %s3696 = int_to_ptr.vmem [resolvable:$true] %s3695
      %3701 = dma.vmem_to_hbm [thread:$0]  %s3696, 512, %s12, [#allocation14], 128, 128, 8
    $region81: #{tpu_custom_call.1} parent=1 // pred_fallthru
      _
    // Predicated region
    $region82: #{tpu_custom_call.1} parent=1 // pred_check
      _
    $region83: #{tpu_custom_call.1} parent=1 // pred_check_branch
      %3703 = sbr.rel (0) target = $region85
    $region84: #{tpu_custom_call.1} parent=1 // pred_region
      %s3705 = ssub.s32 512, 512
      %3706 = vsyncadd [#allocation14], %s3705
      %s3707 = sshll.u32 [#allocation15], 4
      %s3708 = int_to_ptr.vmem [resolvable:$true] %s3707
      %3713 = dma.vmem_to_hbm [thread:$0]  %s3708, 512, %s13, [#allocation14], 128, 128, 8
    $region85: #{tpu_custom_call.1} parent=1 // pred_fallthru
      _
    // Predicated region
    $region86: #{tpu_custom_call.1} parent=1 // pred_check
      _
    $region87: #{tpu_custom_call.1} parent=1 // pred_check_branch
      %3715 = sbr.rel (0) target = $region89
    $region88: #{tpu_custom_call.1} parent=1 // pred_region
      %3716 = dma.done [#allocation5], 256
    $region89: #{tpu_custom_call.1} parent=1 // pred_fallthru
      _
    // Predicated region
    $region90: #{tpu_custom_call.1} parent=1 // pred_check
      _
    $region91: #{tpu_custom_call.1} parent=1 // pred_check_branch
      %3718 = sbr.rel (0) target = $region93
    $region92: #{tpu_custom_call.1} parent=1 // pred_region
      %3719 = dma.done [#allocation14], 512
    $region93: #{tpu_custom_call.1} parent=1 // pred_fallthru
      _
    // Predicated region
    $region94: #{tpu_custom_call.1} parent=1 // pred_check
      _
    $region95: #{tpu_custom_call.1} parent=1 // pred_check_branch
      %3721 = sbr.rel (0) target = $region97
    $region96: #{tpu_custom_call.1} parent=1 // pred_region
      %3722 = dma.done [#allocation14], 512
    $region97: #{tpu_custom_call.1} parent=1 // pred_fallthru
      _
    %3723 = vsyncpa [#allocation4], 1
    %3724 = vsyncpa [#allocation7], 1
    %3725 = vsyncpa [#allocation10], 1
    %3726 = vsyncpa [#allocation5], 1
    %3727 = vsyncpa [#allocation14], 1

</llo_original>
